<compile_context>
chip_gen: v6e
topology: v6e:2x2x1
jax: 0.10.0
libtpu: 0.0.40
codegen_flags: <defaults>
</compile_context>

<pallas_src>
import jax
import jax.numpy as jnp
from jax.experimental import pallas as pl
from jax.experimental.pallas import tpu as pltpu

INPUT_SIZE = 14
HIDDEN_SIZE = 64
NUM_LAYERS = 2


def _lstm_attn_kernel(x_ref,                        # (T*B, I)  time-major, flat
                      wih0_ref, whh0_ref, b0_ref,   # (I,4H) (H,4H) (1,4H)
                      w1_ref, b1_ref,               # (2H,4H) (1,4H)
                      wa_ref, ba_ref, u_ref,        # (H,H) (1,H) (1,H)
                      out_ref):                     # (B, 2H)
    H = whh0_ref.shape[0]
    B = out_ref.shape[0]
    T = x_ref.shape[0] // B

    whh0 = whh0_ref[...]
    w1 = w1_ref[...]
    b1 = b1_ref[...]
    wa = wa_ref[...]
    ba = ba_ref[...]
    u = u_ref[...]

    # Hoisted layer-0 input projection: one well-shaped matmul, off the
    # per-step critical path.  Biases (b_ih + b_hh) pre-folded into b0.
    gi0 = (jnp.dot(x_ref[...], wih0_ref[...],
                   preferred_element_type=jnp.float32) + b0_ref[...])   # (T*B, 4H)

    def lstm_gates(gates, c_prev):
        # Gate columns are pre-permuted to [i, f, o, g]:
        # one contiguous 3H sigmoid slab + one tanh.
        s = jax.nn.sigmoid(gates[:, :3 * H])                  # [i | f | o]
        g = jnp.tanh(gates[:, 3 * H:])
        c_new = s[:, H:2 * H] * c_prev + s[:, :H] * g
        h_new = s[:, 2 * H:3 * H] * jnp.tanh(c_new)
        return h_new, c_new

    zeros = jnp.zeros((B, H), jnp.float32)
    h1, c1, h2, c2 = zeros, zeros, zeros, zeros

    h2_steps = []
    logit_steps = []

    # Fully unrolled (T small & static) so the scheduler sees across steps.
    for t in range(T):
        # ---- layer 0 cell: only the hidden matmul sits on the serial chain ----
        gates0 = gi0[t * B:(t + 1) * B, :] + jnp.dot(
            h1, whh0, preferred_element_type=jnp.float32)
        h1, c1 = lstm_gates(gates0, c1)

        # ---- layer 1 cell: fused ih/hh matmul with K = 2H ----
        hcat = jnp.concatenate([h1, h2], axis=1)              # (B, 2H)
        gates1 = jnp.dot(hcat, w1, preferred_element_type=jnp.float32) + b1
        h2, c2 = lstm_gates(gates1, c2)

        # ---- attention projection for this step (off the recurrence chain) ----
        laten = jnp.tanh(jnp.dot(h2, wa, preferred_element_type=jnp.float32) + ba)
        logit_steps.append(jnp.sum(laten * u, axis=-1, keepdims=True))  # (B, 1)
        h2_steps.append(h2)

    # ---- softmax over time + attention-weighted sum of top-layer outputs ----
    m = logit_steps[0]
    for t in range(1, T):
        m = jnp.maximum(m, logit_steps[t])
    exps = [jnp.exp(l - m) for l in logit_steps]
    denom = exps[0]
    acc = exps[0] * h2_steps[0]
    for t in range(1, T):
        denom = denom + exps[t]
        acc = acc + exps[t] * h2_steps[t]
    att = acc / denom                                         # (B, H)

    # last_out = final-step h2; output = [last_out | att]  (lane-dense 2H = 128)
    out_ref[...] = jnp.concatenate([h2, att], axis=1).astype(out_ref.dtype)


def init_params(key, input_size=INPUT_SIZE, hidden_size=HIDDEN_SIZE,
                num_layers=NUM_LAYERS):
    """Deterministic params in raw PyTorch layout (gate order [i, f, g, o])."""
    H = hidden_size
    bound = 1.0 / (H ** 0.5)
    keys = jax.random.split(key, 4 * num_layers + 3)
    params = []
    idx = 0
    for layer in range(num_layers):
        in_sz = input_size if layer == 0 else H
        params.append(jax.random.uniform(keys[idx], (4 * H, in_sz), jnp.float32,
                                         -bound, bound)); idx += 1
        params.append(jax.random.uniform(keys[idx], (4 * H, H), jnp.float32,
                                         -bound, bound)); idx += 1
        params.append(jax.random.uniform(keys[idx], (4 * H,), jnp.float32,
                                         -bound, bound)); idx += 1
        params.append(jax.random.uniform(keys[idx], (4 * H,), jnp.float32,
                                         -bound, bound)); idx += 1
    wa = jax.random.uniform(keys[idx], (H, H), jnp.float32, -bound, bound); idx += 1
    ba = jax.random.uniform(keys[idx], (H,), jnp.float32, -bound, bound); idx += 1
    uw = jax.random.uniform(keys[idx], (1, H), jnp.float32, -bound, bound); idx += 1
    return tuple(params) + (wa, ba, uw)


def _permute_gates(w, H):
    """Reorder PyTorch LSTM gate blocks [i, f, g, o] -> [i, f, o, g] (axis 0)."""
    return jnp.concatenate([w[0:H], w[H:2 * H], w[3 * H:4 * H], w[2 * H:3 * H]],
                           axis=0)


def prepare_params(raw, hidden_size=HIDDEN_SIZE):
    """One-time weight prep: gate-permute / transpose / stack / fold biases."""
    H = hidden_size
    (wih0, whh0, bih0, bhh0, wih1, whh1, bih1, bhh1, wa, ba, uw) = raw
    wih0_p = _permute_gates(wih0, H).T                                   # (I, 4H)
    whh0_p = _permute_gates(whh0, H).T                                   # (H, 4H)
    b0 = _permute_gates(bih0 + bhh0, H).reshape(1, 4 * H)
    w1 = jnp.concatenate([_permute_gates(wih1, H).T,
                          _permute_gates(whh1, H).T], axis=0)            # (2H, 4H)
    b1 = _permute_gates(bih1 + bhh1, H).reshape(1, 4 * H)
    return (wih0_p, whh0_p, b0, w1, b1, wa.T, ba.reshape(1, H), uw.reshape(1, H))


@jax.jit
def lstm_attn_forward_pallas(x_btd, prep):
    """x_btd: (B, T, I) batch_first. Returns (B, 2H) = [last_hidden | attention]."""
    B, T, I = x_btd.shape
    H = HIDDEN_SIZE
    # Only activation reshaping happens per call (weights prepped at init).
    # Time-major + flatten so step t owns rows [t*B, (t+1)*B) of gi0.
    x_flat = jnp.transpose(x_btd, (1, 0, 2)).reshape(T * B, I).astype(jnp.float32)

    return pl.pallas_call(
        _lstm_attn_kernel,
        out_shape=jax.ShapeDtypeStruct((B, 2 * H), jnp.float32),
        # No grid: all operands (< 1 MiB total) stay resident in VMEM; the
        # recurrence is inherently sequential, so the whole loop runs in one body.
        in_specs=[pl.BlockSpec(memory_space=pltpu.MemorySpace.VMEM)] * 9,
        out_specs=pl.BlockSpec(memory_space=pltpu.MemorySpace.VMEM),
    )(x_flat, *prep)


def lstm_attn_reference(x_btd, raw, hidden_size=HIDDEN_SIZE):
    """Pure-JAX reference matching torch.nn.LSTM(batch_first) + concat attention."""
    (wih0, whh0, bih0, bhh0, wih1, whh1, bih1, bhh1, wa, ba, uw) = raw
    H = hidden_size
    B, T, _ = x_btd.shape
    seq = x_btd.astype(jnp.float32)
    for (w_ih, w_hh, b_ih, b_hh) in ((wih0, whh0, bih0, bhh0),
                                     (wih1, whh1, bih1, bhh1)):
        h = jnp.zeros((B, H), jnp.float32)
        c = jnp.zeros((B, H), jnp.float32)
        outs = []
        for t in range(T):
            g = seq[:, t, :] @ w_ih.T + b_ih + h @ w_hh.T + b_hh
            i = jax.nn.sigmoid(g[:, 0:H])
            f = jax.nn.sigmoid(g[:, H:2 * H])
            gg = jnp.tanh(g[:, 2 * H:3 * H])
            o = jax.nn.sigmoid(g[:, 3 * H:4 * H])
            c = f * c + i * gg
            h = o * jnp.tanh(c)
            outs.append(h)
        seq = jnp.stack(outs, axis=1)
    rnn_out = seq                                              # (B, T, H)
    last_out = rnn_out[:, -1]
    laten = jnp.tanh(rnn_out @ wa.T + ba)                      # (B, T, H)
    scores = jax.nn.softmax(laten @ uw.T, axis=1)              # (B, T, 1)
    att_out = jnp.sum(rnn_out * scores, axis=1)                # (B, H)
    return jnp.concatenate([last_out, att_out], axis=1)        # (B, 2H)


if __name__ == "__main__":
    key = jax.random.PRNGKey(0)
    k_x, k_p = jax.random.split(key)

    B, T = 2, 8
    x = jax.random.normal(k_x, (B, T, INPUT_SIZE), dtype=jnp.float32)

    raw_params = init_params(k_p)
    prep_params = prepare_params(raw_params)      # one-time weight prep

    out = lstm_attn_forward_pallas(x, prep_params)
    out = jax.block_until_ready(out)

    ref = lstm_attn_reference(x, raw_params)
    assert out.shape == (B, 2 * HIDDEN_SIZE)
    assert jnp.allclose(out, ref, atol=2e-4, rtol=2e-4), (
        "mismatch vs reference: max abs err "
        f"{float(jnp.max(jnp.abs(out - ref))):.3e}")

    print("KERNEL_OK")
</pallas_src>

<mosaic_0001>
module attributes {stable_mosaic.version = 11 : i64} {
  func.func @_lstm_attn_kernel(%arg0: memref<16x14xf32, #tpu.memory_space<vmem>>, %arg1: memref<14x256xf32, #tpu.memory_space<vmem>>, %arg2: memref<64x256xf32, #tpu.memory_space<vmem>>, %arg3: memref<1x256xf32, #tpu.memory_space<vmem>>, %arg4: memref<128x256xf32, #tpu.memory_space<vmem>>, %arg5: memref<1x256xf32, #tpu.memory_space<vmem>>, %arg6: memref<64x64xf32, #tpu.memory_space<vmem>>, %arg7: memref<1x64xf32, #tpu.memory_space<vmem>>, %arg8: memref<1x64xf32, #tpu.memory_space<vmem>>, %arg9: memref<2x128xf32, #tpu.memory_space<vmem>>) attributes {dimension_semantics = [], scalar_prefetch = 0 : i64, scratch_operands = 0 : i64, tpu.core_type = #tpu.core_type<tc>} {
    %c0 = arith.constant 0 : index
    %c0_0 = arith.constant 0 : index
    %0 = vector.load %arg2[%c0, %c0_0] : memref<64x256xf32, #tpu.memory_space<vmem>>, vector<64x256xf32>
    %c0_1 = arith.constant 0 : index
    %c0_2 = arith.constant 0 : index
    %1 = vector.load %arg4[%c0_1, %c0_2] : memref<128x256xf32, #tpu.memory_space<vmem>>, vector<128x256xf32>
    %c0_3 = arith.constant 0 : index
    %c0_4 = arith.constant 0 : index
    %2 = vector.load %arg5[%c0_3, %c0_4] : memref<1x256xf32, #tpu.memory_space<vmem>>, vector<1x256xf32>
    %c0_5 = arith.constant 0 : index
    %c0_6 = arith.constant 0 : index
    %3 = vector.load %arg6[%c0_5, %c0_6] : memref<64x64xf32, #tpu.memory_space<vmem>>, vector<64x64xf32>
    %c0_7 = arith.constant 0 : index
    %c0_8 = arith.constant 0 : index
    %4 = vector.load %arg7[%c0_7, %c0_8] : memref<1x64xf32, #tpu.memory_space<vmem>>, vector<1x64xf32>
    %c0_9 = arith.constant 0 : index
    %c0_10 = arith.constant 0 : index
    %5 = vector.load %arg8[%c0_9, %c0_10] : memref<1x64xf32, #tpu.memory_space<vmem>>, vector<1x64xf32>
    %c0_11 = arith.constant 0 : index
    %c0_12 = arith.constant 0 : index
    %6 = vector.load %arg0[%c0_11, %c0_12] : memref<16x14xf32, #tpu.memory_space<vmem>>, vector<16x14xf32>
    %c0_13 = arith.constant 0 : index
    %c0_14 = arith.constant 0 : index
    %7 = vector.load %arg1[%c0_13, %c0_14] : memref<14x256xf32, #tpu.memory_space<vmem>>, vector<14x256xf32>
    %cst = arith.constant dense<0.000000e+00> : vector<16x256xf32>
    %8 = tpu.matmul %6, %7, %cst {dimension_numbers = #tpu.dot_dimension_numbers<[1], [0], [0], [1], [0, 0, 1, 1], [], []>} : vector<16x14xf32>, vector<14x256xf32>, vector<16x256xf32> -> vector<16x256xf32>
    %c0_15 = arith.constant 0 : index
    %c0_16 = arith.constant 0 : index
    %9 = vector.load %arg3[%c0_15, %c0_16] : memref<1x256xf32, #tpu.memory_space<vmem>>, vector<1x256xf32>
    %10 = vector.broadcast %9 : vector<1x256xf32> to vector<16x256xf32>
    %11 = arith.addf %8, %10 : vector<16x256xf32>
    %cst_17 = arith.constant 0.000000e+00 : f32
    %12 = vector.broadcast %cst_17 : f32 to vector<2x64xf32>
    %13 = vector.extract_strided_slice %11 {offsets = [0, 0], sizes = [2, 256], strides = [1, 1]} : vector<16x256xf32> to vector<2x256xf32>
    %cst_18 = arith.constant dense<0.000000e+00> : vector<2x256xf32>
    %14 = tpu.matmul %12, %0, %cst_18 {dimension_numbers = #tpu.dot_dimension_numbers<[1], [0], [0], [1], [0, 0, 1, 1], [], []>} : vector<2x64xf32>, vector<64x256xf32>, vector<2x256xf32> -> vector<2x256xf32>
    %15 = arith.addf %13, %14 : vector<2x256xf32>
    %16 = vector.extract_strided_slice %15 {offsets = [0, 0], sizes = [2, 192], strides = [1, 1]} : vector<2x256xf32> to vector<2x192xf32>
    %17 = arith.negf %16 : vector<2x192xf32>
    %18 = math.exp %17 : vector<2x192xf32>
    %cst_19 = arith.constant 1.000000e+00 : f32
    %19 = vector.broadcast %cst_19 : f32 to vector<2x192xf32>
    %20 = arith.addf %19, %18 : vector<2x192xf32>
    %21 = arith.divf %19, %20 : vector<2x192xf32>
    %22 = vector.extract_strided_slice %15 {offsets = [0, 192], sizes = [2, 64], strides = [1, 1]} : vector<2x256xf32> to vector<2x64xf32>
    %23 = math.tanh %22 : vector<2x64xf32>
    %24 = vector.extract_strided_slice %21 {offsets = [0, 64], sizes = [2, 64], strides = [1, 1]} : vector<2x192xf32> to vector<2x64xf32>
    %25 = arith.mulf %24, %12 : vector<2x64xf32>
    %26 = vector.extract_strided_slice %21 {offsets = [0, 0], sizes = [2, 64], strides = [1, 1]} : vector<2x192xf32> to vector<2x64xf32>
    %27 = arith.mulf %26, %23 : vector<2x64xf32>
    %28 = arith.addf %25, %27 : vector<2x64xf32>
    %29 = vector.extract_strided_slice %21 {offsets = [0, 128], sizes = [2, 64], strides = [1, 1]} : vector<2x192xf32> to vector<2x64xf32>
    %30 = math.tanh %28 : vector<2x64xf32>
    %31 = arith.mulf %29, %30 : vector<2x64xf32>
    %32 = tpu.concatenate %31, %12 in 1 : vector<2x64xf32>, vector<2x64xf32> -> vector<2x128xf32>
    %cst_20 = arith.constant dense<0.000000e+00> : vector<2x256xf32>
    %33 = tpu.matmul %32, %1, %cst_20 {dimension_numbers = #tpu.dot_dimension_numbers<[1], [0], [0], [1], [0, 0, 1, 1], [], []>} : vector<2x128xf32>, vector<128x256xf32>, vector<2x256xf32> -> vector<2x256xf32>
    %34 = vector.broadcast %2 : vector<1x256xf32> to vector<2x256xf32>
    %35 = arith.addf %33, %34 : vector<2x256xf32>
    %36 = vector.extract_strided_slice %35 {offsets = [0, 0], sizes = [2, 192], strides = [1, 1]} : vector<2x256xf32> to vector<2x192xf32>
    %37 = arith.negf %36 : vector<2x192xf32>
    %38 = math.exp %37 : vector<2x192xf32>
    %cst_21 = arith.constant 1.000000e+00 : f32
    %39 = vector.broadcast %cst_21 : f32 to vector<2x192xf32>
    %40 = arith.addf %39, %38 : vector<2x192xf32>
    %41 = arith.divf %39, %40 : vector<2x192xf32>
    %42 = vector.extract_strided_slice %35 {offsets = [0, 192], sizes = [2, 64], strides = [1, 1]} : vector<2x256xf32> to vector<2x64xf32>
    %43 = math.tanh %42 : vector<2x64xf32>
    %44 = vector.extract_strided_slice %41 {offsets = [0, 64], sizes = [2, 64], strides = [1, 1]} : vector<2x192xf32> to vector<2x64xf32>
    %45 = arith.mulf %44, %12 : vector<2x64xf32>
    %46 = vector.extract_strided_slice %41 {offsets = [0, 0], sizes = [2, 64], strides = [1, 1]} : vector<2x192xf32> to vector<2x64xf32>
    %47 = arith.mulf %46, %43 : vector<2x64xf32>
    %48 = arith.addf %45, %47 : vector<2x64xf32>
    %49 = vector.extract_strided_slice %41 {offsets = [0, 128], sizes = [2, 64], strides = [1, 1]} : vector<2x192xf32> to vector<2x64xf32>
    %50 = math.tanh %48 : vector<2x64xf32>
    %51 = arith.mulf %49, %50 : vector<2x64xf32>
    %cst_22 = arith.constant dense<0.000000e+00> : vector<2x64xf32>
    %52 = tpu.matmul %51, %3, %cst_22 {dimension_numbers = #tpu.dot_dimension_numbers<[1], [0], [0], [1], [0, 0, 1, 1], [], []>} : vector<2x64xf32>, vector<64x64xf32>, vector<2x64xf32> -> vector<2x64xf32>
    %53 = vector.broadcast %4 : vector<1x64xf32> to vector<2x64xf32>
    %54 = arith.addf %52, %53 : vector<2x64xf32>
    %55 = math.tanh %54 : vector<2x64xf32>
    %56 = vector.broadcast %5 : vector<1x64xf32> to vector<2x64xf32>
    %57 = arith.mulf %55, %56 : vector<2x64xf32>
    %cst_23 = arith.constant dense<0.000000e+00> : vector<2xf32>
    %58 = vector.multi_reduction <add>, %57, %cst_23 [1] : vector<2x64xf32> to vector<2xf32>
    %59 = vector.shape_cast %58 : vector<2xf32> to vector<2x1xf32>
    %60 = vector.extract_strided_slice %11 {offsets = [2, 0], sizes = [2, 256], strides = [1, 1]} : vector<16x256xf32> to vector<2x256xf32>
    %cst_24 = arith.constant dense<0.000000e+00> : vector<2x256xf32>
    %61 = tpu.matmul %31, %0, %cst_24 {dimension_numbers = #tpu.dot_dimension_numbers<[1], [0], [0], [1], [0, 0, 1, 1], [], []>} : vector<2x64xf32>, vector<64x256xf32>, vector<2x256xf32> -> vector<2x256xf32>
    %62 = arith.addf %60, %61 : vector<2x256xf32>
    %63 = vector.extract_strided_slice %62 {offsets = [0, 0], sizes = [2, 192], strides = [1, 1]} : vector<2x256xf32> to vector<2x192xf32>
    %64 = arith.negf %63 : vector<2x192xf32>
    %65 = math.exp %64 : vector<2x192xf32>
    %cst_25 = arith.constant 1.000000e+00 : f32
    %66 = vector.broadcast %cst_25 : f32 to vector<2x192xf32>
    %67 = arith.addf %66, %65 : vector<2x192xf32>
    %68 = arith.divf %66, %67 : vector<2x192xf32>
    %69 = vector.extract_strided_slice %62 {offsets = [0, 192], sizes = [2, 64], strides = [1, 1]} : vector<2x256xf32> to vector<2x64xf32>
    %70 = math.tanh %69 : vector<2x64xf32>
    %71 = vector.extract_strided_slice %68 {offsets = [0, 64], sizes = [2, 64], strides = [1, 1]} : vector<2x192xf32> to vector<2x64xf32>
    %72 = arith.mulf %71, %28 : vector<2x64xf32>
    %73 = vector.extract_strided_slice %68 {offsets = [0, 0], sizes = [2, 64], strides = [1, 1]} : vector<2x192xf32> to vector<2x64xf32>
    %74 = arith.mulf %73, %70 : vector<2x64xf32>
    %75 = arith.addf %72, %74 : vector<2x64xf32>
    %76 = vector.extract_strided_slice %68 {offsets = [0, 128], sizes = [2, 64], strides = [1, 1]} : vector<2x192xf32> to vector<2x64xf32>
    %77 = math.tanh %75 : vector<2x64xf32>
    %78 = arith.mulf %76, %77 : vector<2x64xf32>
    %79 = tpu.concatenate %78, %51 in 1 : vector<2x64xf32>, vector<2x64xf32> -> vector<2x128xf32>
    %cst_26 = arith.constant dense<0.000000e+00> : vector<2x256xf32>
    %80 = tpu.matmul %79, %1, %cst_26 {dimension_numbers = #tpu.dot_dimension_numbers<[1], [0], [0], [1], [0, 0, 1, 1], [], []>} : vector<2x128xf32>, vector<128x256xf32>, vector<2x256xf32> -> vector<2x256xf32>
    %81 = vector.broadcast %2 : vector<1x256xf32> to vector<2x256xf32>
    %82 = arith.addf %80, %81 : vector<2x256xf32>
    %83 = vector.extract_strided_slice %82 {offsets = [0, 0], sizes = [2, 192], strides = [1, 1]} : vector<2x256xf32> to vector<2x192xf32>
    %84 = arith.negf %83 : vector<2x192xf32>
    %85 = math.exp %84 : vector<2x192xf32>
    %cst_27 = arith.constant 1.000000e+00 : f32
    %86 = vector.broadcast %cst_27 : f32 to vector<2x192xf32>
    %87 = arith.addf %86, %85 : vector<2x192xf32>
    %88 = arith.divf %86, %87 : vector<2x192xf32>
    %89 = vector.extract_strided_slice %82 {offsets = [0, 192], sizes = [2, 64], strides = [1, 1]} : vector<2x256xf32> to vector<2x64xf32>
    %90 = math.tanh %89 : vector<2x64xf32>
    %91 = vector.extract_strided_slice %88 {offsets = [0, 64], sizes = [2, 64], strides = [1, 1]} : vector<2x192xf32> to vector<2x64xf32>
    %92 = arith.mulf %91, %48 : vector<2x64xf32>
    %93 = vector.extract_strided_slice %88 {offsets = [0, 0], sizes = [2, 64], strides = [1, 1]} : vector<2x192xf32> to vector<2x64xf32>
    %94 = arith.mulf %93, %90 : vector<2x64xf32>
    %95 = arith.addf %92, %94 : vector<2x64xf32>
    %96 = vector.extract_strided_slice %88 {offsets = [0, 128], sizes = [2, 64], strides = [1, 1]} : vector<2x192xf32> to vector<2x64xf32>
    %97 = math.tanh %95 : vector<2x64xf32>
    %98 = arith.mulf %96, %97 : vector<2x64xf32>
    %cst_28 = arith.constant dense<0.000000e+00> : vector<2x64xf32>
    %99 = tpu.matmul %98, %3, %cst_28 {dimension_numbers = #tpu.dot_dimension_numbers<[1], [0], [0], [1], [0, 0, 1, 1], [], []>} : vector<2x64xf32>, vector<64x64xf32>, vector<2x64xf32> -> vector<2x64xf32>
    %100 = vector.broadcast %4 : vector<1x64xf32> to vector<2x64xf32>
    %101 = arith.addf %99, %100 : vector<2x64xf32>
    %102 = math.tanh %101 : vector<2x64xf32>
    %103 = vector.broadcast %5 : vector<1x64xf32> to vector<2x64xf32>
    %104 = arith.mulf %102, %103 : vector<2x64xf32>
    %cst_29 = arith.constant dense<0.000000e+00> : vector<2xf32>
    %105 = vector.multi_reduction <add>, %104, %cst_29 [1] : vector<2x64xf32> to vector<2xf32>
    %106 = vector.shape_cast %105 : vector<2xf32> to vector<2x1xf32>
    %107 = vector.extract_strided_slice %11 {offsets = [4, 0], sizes = [2, 256], strides = [1, 1]} : vector<16x256xf32> to vector<2x256xf32>
    %cst_30 = arith.constant dense<0.000000e+00> : vector<2x256xf32>
    %108 = tpu.matmul %78, %0, %cst_30 {dimension_numbers = #tpu.dot_dimension_numbers<[1], [0], [0], [1], [0, 0, 1, 1], [], []>} : vector<2x64xf32>, vector<64x256xf32>, vector<2x256xf32> -> vector<2x256xf32>
    %109 = arith.addf %107, %108 : vector<2x256xf32>
    %110 = vector.extract_strided_slice %109 {offsets = [0, 0], sizes = [2, 192], strides = [1, 1]} : vector<2x256xf32> to vector<2x192xf32>
    %111 = arith.negf %110 : vector<2x192xf32>
    %112 = math.exp %111 : vector<2x192xf32>
    %cst_31 = arith.constant 1.000000e+00 : f32
    %113 = vector.broadcast %cst_31 : f32 to vector<2x192xf32>
    %114 = arith.addf %113, %112 : vector<2x192xf32>
    %115 = arith.divf %113, %114 : vector<2x192xf32>
    %116 = vector.extract_strided_slice %109 {offsets = [0, 192], sizes = [2, 64], strides = [1, 1]} : vector<2x256xf32> to vector<2x64xf32>
    %117 = math.tanh %116 : vector<2x64xf32>
    %118 = vector.extract_strided_slice %115 {offsets = [0, 64], sizes = [2, 64], strides = [1, 1]} : vector<2x192xf32> to vector<2x64xf32>
    %119 = arith.mulf %118, %75 : vector<2x64xf32>
    %120 = vector.extract_strided_slice %115 {offsets = [0, 0], sizes = [2, 64], strides = [1, 1]} : vector<2x192xf32> to vector<2x64xf32>
    %121 = arith.mulf %120, %117 : vector<2x64xf32>
    %122 = arith.addf %119, %121 : vector<2x64xf32>
    %123 = vector.extract_strided_slice %115 {offsets = [0, 128], sizes = [2, 64], strides = [1, 1]} : vector<2x192xf32> to vector<2x64xf32>
    %124 = math.tanh %122 : vector<2x64xf32>
    %125 = arith.mulf %123, %124 : vector<2x64xf32>
    %126 = tpu.concatenate %125, %98 in 1 : vector<2x64xf32>, vector<2x64xf32> -> vector<2x128xf32>
    %cst_32 = arith.constant dense<0.000000e+00> : vector<2x256xf32>
    %127 = tpu.matmul %126, %1, %cst_32 {dimension_numbers = #tpu.dot_dimension_numbers<[1], [0], [0], [1], [0, 0, 1, 1], [], []>} : vector<2x128xf32>, vector<128x256xf32>, vector<2x256xf32> -> vector<2x256xf32>
    %128 = vector.broadcast %2 : vector<1x256xf32> to vector<2x256xf32>
    %129 = arith.addf %127, %128 : vector<2x256xf32>
    %130 = vector.extract_strided_slice %129 {offsets = [0, 0], sizes = [2, 192], strides = [1, 1]} : vector<2x256xf32> to vector<2x192xf32>
    %131 = arith.negf %130 : vector<2x192xf32>
    %132 = math.exp %131 : vector<2x192xf32>
    %cst_33 = arith.constant 1.000000e+00 : f32
    %133 = vector.broadcast %cst_33 : f32 to vector<2x192xf32>
    %134 = arith.addf %133, %132 : vector<2x192xf32>
    %135 = arith.divf %133, %134 : vector<2x192xf32>
    %136 = vector.extract_strided_slice %129 {offsets = [0, 192], sizes = [2, 64], strides = [1, 1]} : vector<2x256xf32> to vector<2x64xf32>
    %137 = math.tanh %136 : vector<2x64xf32>
    %138 = vector.extract_strided_slice %135 {offsets = [0, 64], sizes = [2, 64], strides = [1, 1]} : vector<2x192xf32> to vector<2x64xf32>
    %139 = arith.mulf %138, %95 : vector<2x64xf32>
    %140 = vector.extract_strided_slice %135 {offsets = [0, 0], sizes = [2, 64], strides = [1, 1]} : vector<2x192xf32> to vector<2x64xf32>
    %141 = arith.mulf %140, %137 : vector<2x64xf32>
    %142 = arith.addf %139, %141 : vector<2x64xf32>
    %143 = vector.extract_strided_slice %135 {offsets = [0, 128], sizes = [2, 64], strides = [1, 1]} : vector<2x192xf32> to vector<2x64xf32>
    %144 = math.tanh %142 : vector<2x64xf32>
    %145 = arith.mulf %143, %144 : vector<2x64xf32>
    %cst_34 = arith.constant dense<0.000000e+00> : vector<2x64xf32>
    %146 = tpu.matmul %145, %3, %cst_34 {dimension_numbers = #tpu.dot_dimension_numbers<[1], [0], [0], [1], [0, 0, 1, 1], [], []>} : vector<2x64xf32>, vector<64x64xf32>, vector<2x64xf32> -> vector<2x64xf32>
    %147 = vector.broadcast %4 : vector<1x64xf32> to vector<2x64xf32>
    %148 = arith.addf %146, %147 : vector<2x64xf32>
    %149 = math.tanh %148 : vector<2x64xf32>
    %150 = vector.broadcast %5 : vector<1x64xf32> to vector<2x64xf32>
    %151 = arith.mulf %149, %150 : vector<2x64xf32>
    %cst_35 = arith.constant dense<0.000000e+00> : vector<2xf32>
    %152 = vector.multi_reduction <add>, %151, %cst_35 [1] : vector<2x64xf32> to vector<2xf32>
    %153 = vector.shape_cast %152 : vector<2xf32> to vector<2x1xf32>
    %154 = vector.extract_strided_slice %11 {offsets = [6, 0], sizes = [2, 256], strides = [1, 1]} : vector<16x256xf32> to vector<2x256xf32>
    %cst_36 = arith.constant dense<0.000000e+00> : vector<2x256xf32>
    %155 = tpu.matmul %125, %0, %cst_36 {dimension_numbers = #tpu.dot_dimension_numbers<[1], [0], [0], [1], [0, 0, 1, 1], [], []>} : vector<2x64xf32>, vector<64x256xf32>, vector<2x256xf32> -> vector<2x256xf32>
    %156 = arith.addf %154, %155 : vector<2x256xf32>
    %157 = vector.extract_strided_slice %156 {offsets = [0, 0], sizes = [2, 192], strides = [1, 1]} : vector<2x256xf32> to vector<2x192xf32>
    %158 = arith.negf %157 : vector<2x192xf32>
    %159 = math.exp %158 : vector<2x192xf32>
    %cst_37 = arith.constant 1.000000e+00 : f32
    %160 = vector.broadcast %cst_37 : f32 to vector<2x192xf32>
    %161 = arith.addf %160, %159 : vector<2x192xf32>
    %162 = arith.divf %160, %161 : vector<2x192xf32>
    %163 = vector.extract_strided_slice %156 {offsets = [0, 192], sizes = [2, 64], strides = [1, 1]} : vector<2x256xf32> to vector<2x64xf32>
    %164 = math.tanh %163 : vector<2x64xf32>
    %165 = vector.extract_strided_slice %162 {offsets = [0, 64], sizes = [2, 64], strides = [1, 1]} : vector<2x192xf32> to vector<2x64xf32>
    %166 = arith.mulf %165, %122 : vector<2x64xf32>
    %167 = vector.extract_strided_slice %162 {offsets = [0, 0], sizes = [2, 64], strides = [1, 1]} : vector<2x192xf32> to vector<2x64xf32>
    %168 = arith.mulf %167, %164 : vector<2x64xf32>
    %169 = arith.addf %166, %168 : vector<2x64xf32>
    %170 = vector.extract_strided_slice %162 {offsets = [0, 128], sizes = [2, 64], strides = [1, 1]} : vector<2x192xf32> to vector<2x64xf32>
    %171 = math.tanh %169 : vector<2x64xf32>
    %172 = arith.mulf %170, %171 : vector<2x64xf32>
    %173 = tpu.concatenate %172, %145 in 1 : vector<2x64xf32>, vector<2x64xf32> -> vector<2x128xf32>
    %cst_38 = arith.constant dense<0.000000e+00> : vector<2x256xf32>
    %174 = tpu.matmul %173, %1, %cst_38 {dimension_numbers = #tpu.dot_dimension_numbers<[1], [0], [0], [1], [0, 0, 1, 1], [], []>} : vector<2x128xf32>, vector<128x256xf32>, vector<2x256xf32> -> vector<2x256xf32>
    %175 = vector.broadcast %2 : vector<1x256xf32> to vector<2x256xf32>
    %176 = arith.addf %174, %175 : vector<2x256xf32>
    %177 = vector.extract_strided_slice %176 {offsets = [0, 0], sizes = [2, 192], strides = [1, 1]} : vector<2x256xf32> to vector<2x192xf32>
    %178 = arith.negf %177 : vector<2x192xf32>
    %179 = math.exp %178 : vector<2x192xf32>
    %cst_39 = arith.constant 1.000000e+00 : f32
    %180 = vector.broadcast %cst_39 : f32 to vector<2x192xf32>
    %181 = arith.addf %180, %179 : vector<2x192xf32>
    %182 = arith.divf %180, %181 : vector<2x192xf32>
    %183 = vector.extract_strided_slice %176 {offsets = [0, 192], sizes = [2, 64], strides = [1, 1]} : vector<2x256xf32> to vector<2x64xf32>
    %184 = math.tanh %183 : vector<2x64xf32>
    %185 = vector.extract_strided_slice %182 {offsets = [0, 64], sizes = [2, 64], strides = [1, 1]} : vector<2x192xf32> to vector<2x64xf32>
    %186 = arith.mulf %185, %142 : vector<2x64xf32>
    %187 = vector.extract_strided_slice %182 {offsets = [0, 0], sizes = [2, 64], strides = [1, 1]} : vector<2x192xf32> to vector<2x64xf32>
    %188 = arith.mulf %187, %184 : vector<2x64xf32>
    %189 = arith.addf %186, %188 : vector<2x64xf32>
    %190 = vector.extract_strided_slice %182 {offsets = [0, 128], sizes = [2, 64], strides = [1, 1]} : vector<2x192xf32> to vector<2x64xf32>
    %191 = math.tanh %189 : vector<2x64xf32>
    %192 = arith.mulf %190, %191 : vector<2x64xf32>
    %cst_40 = arith.constant dense<0.000000e+00> : vector<2x64xf32>
    %193 = tpu.matmul %192, %3, %cst_40 {dimension_numbers = #tpu.dot_dimension_numbers<[1], [0], [0], [1], [0, 0, 1, 1], [], []>} : vector<2x64xf32>, vector<64x64xf32>, vector<2x64xf32> -> vector<2x64xf32>
    %194 = vector.broadcast %4 : vector<1x64xf32> to vector<2x64xf32>
    %195 = arith.addf %193, %194 : vector<2x64xf32>
    %196 = math.tanh %195 : vector<2x64xf32>
    %197 = vector.broadcast %5 : vector<1x64xf32> to vector<2x64xf32>
    %198 = arith.mulf %196, %197 : vector<2x64xf32>
    %cst_41 = arith.constant dense<0.000000e+00> : vector<2xf32>
    %199 = vector.multi_reduction <add>, %198, %cst_41 [1] : vector<2x64xf32> to vector<2xf32>
    %200 = vector.shape_cast %199 : vector<2xf32> to vector<2x1xf32>
    %201 = vector.extract_strided_slice %11 {offsets = [8, 0], sizes = [2, 256], strides = [1, 1]} : vector<16x256xf32> to vector<2x256xf32>
    %cst_42 = arith.constant dense<0.000000e+00> : vector<2x256xf32>
    %202 = tpu.matmul %172, %0, %cst_42 {dimension_numbers = #tpu.dot_dimension_numbers<[1], [0], [0], [1], [0, 0, 1, 1], [], []>} : vector<2x64xf32>, vector<64x256xf32>, vector<2x256xf32> -> vector<2x256xf32>
    %203 = arith.addf %201, %202 : vector<2x256xf32>
    %204 = vector.extract_strided_slice %203 {offsets = [0, 0], sizes = [2, 192], strides = [1, 1]} : vector<2x256xf32> to vector<2x192xf32>
    %205 = arith.negf %204 : vector<2x192xf32>
    %206 = math.exp %205 : vector<2x192xf32>
    %cst_43 = arith.constant 1.000000e+00 : f32
    %207 = vector.broadcast %cst_43 : f32 to vector<2x192xf32>
    %208 = arith.addf %207, %206 : vector<2x192xf32>
    %209 = arith.divf %207, %208 : vector<2x192xf32>
    %210 = vector.extract_strided_slice %203 {offsets = [0, 192], sizes = [2, 64], strides = [1, 1]} : vector<2x256xf32> to vector<2x64xf32>
    %211 = math.tanh %210 : vector<2x64xf32>
    %212 = vector.extract_strided_slice %209 {offsets = [0, 64], sizes = [2, 64], strides = [1, 1]} : vector<2x192xf32> to vector<2x64xf32>
    %213 = arith.mulf %212, %169 : vector<2x64xf32>
    %214 = vector.extract_strided_slice %209 {offsets = [0, 0], sizes = [2, 64], strides = [1, 1]} : vector<2x192xf32> to vector<2x64xf32>
    %215 = arith.mulf %214, %211 : vector<2x64xf32>
    %216 = arith.addf %213, %215 : vector<2x64xf32>
    %217 = vector.extract_strided_slice %209 {offsets = [0, 128], sizes = [2, 64], strides = [1, 1]} : vector<2x192xf32> to vector<2x64xf32>
    %218 = math.tanh %216 : vector<2x64xf32>
    %219 = arith.mulf %217, %218 : vector<2x64xf32>
    %220 = tpu.concatenate %219, %192 in 1 : vector<2x64xf32>, vector<2x64xf32> -> vector<2x128xf32>
    %cst_44 = arith.constant dense<0.000000e+00> : vector<2x256xf32>
    %221 = tpu.matmul %220, %1, %cst_44 {dimension_numbers = #tpu.dot_dimension_numbers<[1], [0], [0], [1], [0, 0, 1, 1], [], []>} : vector<2x128xf32>, vector<128x256xf32>, vector<2x256xf32> -> vector<2x256xf32>
    %222 = vector.broadcast %2 : vector<1x256xf32> to vector<2x256xf32>
    %223 = arith.addf %221, %222 : vector<2x256xf32>
    %224 = vector.extract_strided_slice %223 {offsets = [0, 0], sizes = [2, 192], strides = [1, 1]} : vector<2x256xf32> to vector<2x192xf32>
    %225 = arith.negf %224 : vector<2x192xf32>
    %226 = math.exp %225 : vector<2x192xf32>
    %cst_45 = arith.constant 1.000000e+00 : f32
    %227 = vector.broadcast %cst_45 : f32 to vector<2x192xf32>
    %228 = arith.addf %227, %226 : vector<2x192xf32>
    %229 = arith.divf %227, %228 : vector<2x192xf32>
    %230 = vector.extract_strided_slice %223 {offsets = [0, 192], sizes = [2, 64], strides = [1, 1]} : vector<2x256xf32> to vector<2x64xf32>
    %231 = math.tanh %230 : vector<2x64xf32>
    %232 = vector.extract_strided_slice %229 {offsets = [0, 64], sizes = [2, 64], strides = [1, 1]} : vector<2x192xf32> to vector<2x64xf32>
    %233 = arith.mulf %232, %189 : vector<2x64xf32>
    %234 = vector.extract_strided_slice %229 {offsets = [0, 0], sizes = [2, 64], strides = [1, 1]} : vector<2x192xf32> to vector<2x64xf32>
    %235 = arith.mulf %234, %231 : vector<2x64xf32>
    %236 = arith.addf %233, %235 : vector<2x64xf32>
    %237 = vector.extract_strided_slice %229 {offsets = [0, 128], sizes = [2, 64], strides = [1, 1]} : vector<2x192xf32> to vector<2x64xf32>
    %238 = math.tanh %236 : vector<2x64xf32>
    %239 = arith.mulf %237, %238 : vector<2x64xf32>
    %cst_46 = arith.constant dense<0.000000e+00> : vector<2x64xf32>
    %240 = tpu.matmul %239, %3, %cst_46 {dimension_numbers = #tpu.dot_dimension_numbers<[1], [0], [0], [1], [0, 0, 1, 1], [], []>} : vector<2x64xf32>, vector<64x64xf32>, vector<2x64xf32> -> vector<2x64xf32>
    %241 = vector.broadcast %4 : vector<1x64xf32> to vector<2x64xf32>
    %242 = arith.addf %240, %241 : vector<2x64xf32>
    %243 = math.tanh %242 : vector<2x64xf32>
    %244 = vector.broadcast %5 : vector<1x64xf32> to vector<2x64xf32>
    %245 = arith.mulf %243, %244 : vector<2x64xf32>
    %cst_47 = arith.constant dense<0.000000e+00> : vector<2xf32>
    %246 = vector.multi_reduction <add>, %245, %cst_47 [1] : vector<2x64xf32> to vector<2xf32>
    %247 = vector.shape_cast %246 : vector<2xf32> to vector<2x1xf32>
    %248 = vector.extract_strided_slice %11 {offsets = [10, 0], sizes = [2, 256], strides = [1, 1]} : vector<16x256xf32> to vector<2x256xf32>
    %cst_48 = arith.constant dense<0.000000e+00> : vector<2x256xf32>
    %249 = tpu.matmul %219, %0, %cst_48 {dimension_numbers = #tpu.dot_dimension_numbers<[1], [0], [0], [1], [0, 0, 1, 1], [], []>} : vector<2x64xf32>, vector<64x256xf32>, vector<2x256xf32> -> vector<2x256xf32>
    %250 = arith.addf %248, %249 : vector<2x256xf32>
    %251 = vector.extract_strided_slice %250 {offsets = [0, 0], sizes = [2, 192], strides = [1, 1]} : vector<2x256xf32> to vector<2x192xf32>
    %252 = arith.negf %251 : vector<2x192xf32>
    %253 = math.exp %252 : vector<2x192xf32>
    %cst_49 = arith.constant 1.000000e+00 : f32
    %254 = vector.broadcast %cst_49 : f32 to vector<2x192xf32>
    %255 = arith.addf %254, %253 : vector<2x192xf32>
    %256 = arith.divf %254, %255 : vector<2x192xf32>
    %257 = vector.extract_strided_slice %250 {offsets = [0, 192], sizes = [2, 64], strides = [1, 1]} : vector<2x256xf32> to vector<2x64xf32>
    %258 = math.tanh %257 : vector<2x64xf32>
    %259 = vector.extract_strided_slice %256 {offsets = [0, 64], sizes = [2, 64], strides = [1, 1]} : vector<2x192xf32> to vector<2x64xf32>
    %260 = arith.mulf %259, %216 : vector<2x64xf32>
    %261 = vector.extract_strided_slice %256 {offsets = [0, 0], sizes = [2, 64], strides = [1, 1]} : vector<2x192xf32> to vector<2x64xf32>
    %262 = arith.mulf %261, %258 : vector<2x64xf32>
    %263 = arith.addf %260, %262 : vector<2x64xf32>
    %264 = vector.extract_strided_slice %256 {offsets = [0, 128], sizes = [2, 64], strides = [1, 1]} : vector<2x192xf32> to vector<2x64xf32>
    %265 = math.tanh %263 : vector<2x64xf32>
    %266 = arith.mulf %264, %265 : vector<2x64xf32>
    %267 = tpu.concatenate %266, %239 in 1 : vector<2x64xf32>, vector<2x64xf32> -> vector<2x128xf32>
    %cst_50 = arith.constant dense<0.000000e+00> : vector<2x256xf32>
    %268 = tpu.matmul %267, %1, %cst_50 {dimension_numbers = #tpu.dot_dimension_numbers<[1], [0], [0], [1], [0, 0, 1, 1], [], []>} : vector<2x128xf32>, vector<128x256xf32>, vector<2x256xf32> -> vector<2x256xf32>
    %269 = vector.broadcast %2 : vector<1x256xf32> to vector<2x256xf32>
    %270 = arith.addf %268, %269 : vector<2x256xf32>
    %271 = vector.extract_strided_slice %270 {offsets = [0, 0], sizes = [2, 192], strides = [1, 1]} : vector<2x256xf32> to vector<2x192xf32>
    %272 = arith.negf %271 : vector<2x192xf32>
    %273 = math.exp %272 : vector<2x192xf32>
    %cst_51 = arith.constant 1.000000e+00 : f32
    %274 = vector.broadcast %cst_51 : f32 to vector<2x192xf32>
    %275 = arith.addf %274, %273 : vector<2x192xf32>
    %276 = arith.divf %274, %275 : vector<2x192xf32>
    %277 = vector.extract_strided_slice %270 {offsets = [0, 192], sizes = [2, 64], strides = [1, 1]} : vector<2x256xf32> to vector<2x64xf32>
    %278 = math.tanh %277 : vector<2x64xf32>
    %279 = vector.extract_strided_slice %276 {offsets = [0, 64], sizes = [2, 64], strides = [1, 1]} : vector<2x192xf32> to vector<2x64xf32>
    %280 = arith.mulf %279, %236 : vector<2x64xf32>
    %281 = vector.extract_strided_slice %276 {offsets = [0, 0], sizes = [2, 64], strides = [1, 1]} : vector<2x192xf32> to vector<2x64xf32>
    %282 = arith.mulf %281, %278 : vector<2x64xf32>
    %283 = arith.addf %280, %282 : vector<2x64xf32>
    %284 = vector.extract_strided_slice %276 {offsets = [0, 128], sizes = [2, 64], strides = [1, 1]} : vector<2x192xf32> to vector<2x64xf32>
    %285 = math.tanh %283 : vector<2x64xf32>
    %286 = arith.mulf %284, %285 : vector<2x64xf32>
    %cst_52 = arith.constant dense<0.000000e+00> : vector<2x64xf32>
    %287 = tpu.matmul %286, %3, %cst_52 {dimension_numbers = #tpu.dot_dimension_numbers<[1], [0], [0], [1], [0, 0, 1, 1], [], []>} : vector<2x64xf32>, vector<64x64xf32>, vector<2x64xf32> -> vector<2x64xf32>
    %288 = vector.broadcast %4 : vector<1x64xf32> to vector<2x64xf32>
    %289 = arith.addf %287, %288 : vector<2x64xf32>
    %290 = math.tanh %289 : vector<2x64xf32>
    %291 = vector.broadcast %5 : vector<1x64xf32> to vector<2x64xf32>
    %292 = arith.mulf %290, %291 : vector<2x64xf32>
    %cst_53 = arith.constant dense<0.000000e+00> : vector<2xf32>
    %293 = vector.multi_reduction <add>, %292, %cst_53 [1] : vector<2x64xf32> to vector<2xf32>
    %294 = vector.shape_cast %293 : vector<2xf32> to vector<2x1xf32>
    %295 = vector.extract_strided_slice %11 {offsets = [12, 0], sizes = [2, 256], strides = [1, 1]} : vector<16x256xf32> to vector<2x256xf32>
    %cst_54 = arith.constant dense<0.000000e+00> : vector<2x256xf32>
    %296 = tpu.matmul %266, %0, %cst_54 {dimension_numbers = #tpu.dot_dimension_numbers<[1], [0], [0], [1], [0, 0, 1, 1], [], []>} : vector<2x64xf32>, vector<64x256xf32>, vector<2x256xf32> -> vector<2x256xf32>
    %297 = arith.addf %295, %296 : vector<2x256xf32>
    %298 = vector.extract_strided_slice %297 {offsets = [0, 0], sizes = [2, 192], strides = [1, 1]} : vector<2x256xf32> to vector<2x192xf32>
    %299 = arith.negf %298 : vector<2x192xf32>
    %300 = math.exp %299 : vector<2x192xf32>
    %cst_55 = arith.constant 1.000000e+00 : f32
    %301 = vector.broadcast %cst_55 : f32 to vector<2x192xf32>
    %302 = arith.addf %301, %300 : vector<2x192xf32>
    %303 = arith.divf %301, %302 : vector<2x192xf32>
    %304 = vector.extract_strided_slice %297 {offsets = [0, 192], sizes = [2, 64], strides = [1, 1]} : vector<2x256xf32> to vector<2x64xf32>
    %305 = math.tanh %304 : vector<2x64xf32>
    %306 = vector.extract_strided_slice %303 {offsets = [0, 64], sizes = [2, 64], strides = [1, 1]} : vector<2x192xf32> to vector<2x64xf32>
    %307 = arith.mulf %306, %263 : vector<2x64xf32>
    %308 = vector.extract_strided_slice %303 {offsets = [0, 0], sizes = [2, 64], strides = [1, 1]} : vector<2x192xf32> to vector<2x64xf32>
    %309 = arith.mulf %308, %305 : vector<2x64xf32>
    %310 = arith.addf %307, %309 : vector<2x64xf32>
    %311 = vector.extract_strided_slice %303 {offsets = [0, 128], sizes = [2, 64], strides = [1, 1]} : vector<2x192xf32> to vector<2x64xf32>
    %312 = math.tanh %310 : vector<2x64xf32>
    %313 = arith.mulf %311, %312 : vector<2x64xf32>
    %314 = tpu.concatenate %313, %286 in 1 : vector<2x64xf32>, vector<2x64xf32> -> vector<2x128xf32>
    %cst_56 = arith.constant dense<0.000000e+00> : vector<2x256xf32>
    %315 = tpu.matmul %314, %1, %cst_56 {dimension_numbers = #tpu.dot_dimension_numbers<[1], [0], [0], [1], [0, 0, 1, 1], [], []>} : vector<2x128xf32>, vector<128x256xf32>, vector<2x256xf32> -> vector<2x256xf32>
    %316 = vector.broadcast %2 : vector<1x256xf32> to vector<2x256xf32>
    %317 = arith.addf %315, %316 : vector<2x256xf32>
    %318 = vector.extract_strided_slice %317 {offsets = [0, 0], sizes = [2, 192], strides = [1, 1]} : vector<2x256xf32> to vector<2x192xf32>
    %319 = arith.negf %318 : vector<2x192xf32>
    %320 = math.exp %319 : vector<2x192xf32>
    %cst_57 = arith.constant 1.000000e+00 : f32
    %321 = vector.broadcast %cst_57 : f32 to vector<2x192xf32>
    %322 = arith.addf %321, %320 : vector<2x192xf32>
    %323 = arith.divf %321, %322 : vector<2x192xf32>
    %324 = vector.extract_strided_slice %317 {offsets = [0, 192], sizes = [2, 64], strides = [1, 1]} : vector<2x256xf32> to vector<2x64xf32>
    %325 = math.tanh %324 : vector<2x64xf32>
    %326 = vector.extract_strided_slice %323 {offsets = [0, 64], sizes = [2, 64], strides = [1, 1]} : vector<2x192xf32> to vector<2x64xf32>
    %327 = arith.mulf %326, %283 : vector<2x64xf32>
    %328 = vector.extract_strided_slice %323 {offsets = [0, 0], sizes = [2, 64], strides = [1, 1]} : vector<2x192xf32> to vector<2x64xf32>
    %329 = arith.mulf %328, %325 : vector<2x64xf32>
    %330 = arith.addf %327, %329 : vector<2x64xf32>
    %331 = vector.extract_strided_slice %323 {offsets = [0, 128], sizes = [2, 64], strides = [1, 1]} : vector<2x192xf32> to vector<2x64xf32>
    %332 = math.tanh %330 : vector<2x64xf32>
    %333 = arith.mulf %331, %332 : vector<2x64xf32>
    %cst_58 = arith.constant dense<0.000000e+00> : vector<2x64xf32>
    %334 = tpu.matmul %333, %3, %cst_58 {dimension_numbers = #tpu.dot_dimension_numbers<[1], [0], [0], [1], [0, 0, 1, 1], [], []>} : vector<2x64xf32>, vector<64x64xf32>, vector<2x64xf32> -> vector<2x64xf32>
    %335 = vector.broadcast %4 : vector<1x64xf32> to vector<2x64xf32>
    %336 = arith.addf %334, %335 : vector<2x64xf32>
    %337 = math.tanh %336 : vector<2x64xf32>
    %338 = vector.broadcast %5 : vector<1x64xf32> to vector<2x64xf32>
    %339 = arith.mulf %337, %338 : vector<2x64xf32>
    %cst_59 = arith.constant dense<0.000000e+00> : vector<2xf32>
    %340 = vector.multi_reduction <add>, %339, %cst_59 [1] : vector<2x64xf32> to vector<2xf32>
    %341 = vector.shape_cast %340 : vector<2xf32> to vector<2x1xf32>
    %342 = vector.extract_strided_slice %11 {offsets = [14, 0], sizes = [2, 256], strides = [1, 1]} : vector<16x256xf32> to vector<2x256xf32>
    %cst_60 = arith.constant dense<0.000000e+00> : vector<2x256xf32>
    %343 = tpu.matmul %313, %0, %cst_60 {dimension_numbers = #tpu.dot_dimension_numbers<[1], [0], [0], [1], [0, 0, 1, 1], [], []>} : vector<2x64xf32>, vector<64x256xf32>, vector<2x256xf32> -> vector<2x256xf32>
    %344 = arith.addf %342, %343 : vector<2x256xf32>
    %345 = vector.extract_strided_slice %344 {offsets = [0, 0], sizes = [2, 192], strides = [1, 1]} : vector<2x256xf32> to vector<2x192xf32>
    %346 = arith.negf %345 : vector<2x192xf32>
    %347 = math.exp %346 : vector<2x192xf32>
    %cst_61 = arith.constant 1.000000e+00 : f32
    %348 = vector.broadcast %cst_61 : f32 to vector<2x192xf32>
    %349 = arith.addf %348, %347 : vector<2x192xf32>
    %350 = arith.divf %348, %349 : vector<2x192xf32>
    %351 = vector.extract_strided_slice %344 {offsets = [0, 192], sizes = [2, 64], strides = [1, 1]} : vector<2x256xf32> to vector<2x64xf32>
    %352 = math.tanh %351 : vector<2x64xf32>
    %353 = vector.extract_strided_slice %350 {offsets = [0, 64], sizes = [2, 64], strides = [1, 1]} : vector<2x192xf32> to vector<2x64xf32>
    %354 = arith.mulf %353, %310 : vector<2x64xf32>
    %355 = vector.extract_strided_slice %350 {offsets = [0, 0], sizes = [2, 64], strides = [1, 1]} : vector<2x192xf32> to vector<2x64xf32>
    %356 = arith.mulf %355, %352 : vector<2x64xf32>
    %357 = arith.addf %354, %356 : vector<2x64xf32>
    %358 = vector.extract_strided_slice %350 {offsets = [0, 128], sizes = [2, 64], strides = [1, 1]} : vector<2x192xf32> to vector<2x64xf32>
    %359 = math.tanh %357 : vector<2x64xf32>
    %360 = arith.mulf %358, %359 : vector<2x64xf32>
    %361 = tpu.concatenate %360, %333 in 1 : vector<2x64xf32>, vector<2x64xf32> -> vector<2x128xf32>
    %cst_62 = arith.constant dense<0.000000e+00> : vector<2x256xf32>
    %362 = tpu.matmul %361, %1, %cst_62 {dimension_numbers = #tpu.dot_dimension_numbers<[1], [0], [0], [1], [0, 0, 1, 1], [], []>} : vector<2x128xf32>, vector<128x256xf32>, vector<2x256xf32> -> vector<2x256xf32>
    %363 = vector.broadcast %2 : vector<1x256xf32> to vector<2x256xf32>
    %364 = arith.addf %362, %363 : vector<2x256xf32>
    %365 = vector.extract_strided_slice %364 {offsets = [0, 0], sizes = [2, 192], strides = [1, 1]} : vector<2x256xf32> to vector<2x192xf32>
    %366 = arith.negf %365 : vector<2x192xf32>
    %367 = math.exp %366 : vector<2x192xf32>
    %cst_63 = arith.constant 1.000000e+00 : f32
    %368 = vector.broadcast %cst_63 : f32 to vector<2x192xf32>
    %369 = arith.addf %368, %367 : vector<2x192xf32>
    %370 = arith.divf %368, %369 : vector<2x192xf32>
    %371 = vector.extract_strided_slice %364 {offsets = [0, 192], sizes = [2, 64], strides = [1, 1]} : vector<2x256xf32> to vector<2x64xf32>
    %372 = math.tanh %371 : vector<2x64xf32>
    %373 = vector.extract_strided_slice %370 {offsets = [0, 64], sizes = [2, 64], strides = [1, 1]} : vector<2x192xf32> to vector<2x64xf32>
    %374 = arith.mulf %373, %330 : vector<2x64xf32>
    %375 = vector.extract_strided_slice %370 {offsets = [0, 0], sizes = [2, 64], strides = [1, 1]} : vector<2x192xf32> to vector<2x64xf32>
    %376 = arith.mulf %375, %372 : vector<2x64xf32>
    %377 = arith.addf %374, %376 : vector<2x64xf32>
    %378 = vector.extract_strided_slice %370 {offsets = [0, 128], sizes = [2, 64], strides = [1, 1]} : vector<2x192xf32> to vector<2x64xf32>
    %379 = math.tanh %377 : vector<2x64xf32>
    %380 = arith.mulf %378, %379 : vector<2x64xf32>
    %cst_64 = arith.constant dense<0.000000e+00> : vector<2x64xf32>
    %381 = tpu.matmul %380, %3, %cst_64 {dimension_numbers = #tpu.dot_dimension_numbers<[1], [0], [0], [1], [0, 0, 1, 1], [], []>} : vector<2x64xf32>, vector<64x64xf32>, vector<2x64xf32> -> vector<2x64xf32>
    %382 = vector.broadcast %4 : vector<1x64xf32> to vector<2x64xf32>
    %383 = arith.addf %381, %382 : vector<2x64xf32>
    %384 = math.tanh %383 : vector<2x64xf32>
    %385 = vector.broadcast %5 : vector<1x64xf32> to vector<2x64xf32>
    %386 = arith.mulf %384, %385 : vector<2x64xf32>
    %cst_65 = arith.constant dense<0.000000e+00> : vector<2xf32>
    %387 = vector.multi_reduction <add>, %386, %cst_65 [1] : vector<2x64xf32> to vector<2xf32>
    %388 = vector.shape_cast %387 : vector<2xf32> to vector<2x1xf32>
    %389 = arith.maximumf %59, %106 : vector<2x1xf32>
    %390 = arith.maximumf %389, %153 : vector<2x1xf32>
    %391 = arith.maximumf %390, %200 : vector<2x1xf32>
    %392 = arith.maximumf %391, %247 : vector<2x1xf32>
    %393 = arith.maximumf %392, %294 : vector<2x1xf32>
    %394 = arith.maximumf %393, %341 : vector<2x1xf32>
    %395 = arith.maximumf %394, %388 : vector<2x1xf32>
    %396 = arith.subf %59, %395 : vector<2x1xf32>
    %397 = math.exp %396 : vector<2x1xf32>
    %398 = arith.subf %106, %395 : vector<2x1xf32>
    %399 = math.exp %398 : vector<2x1xf32>
    %400 = arith.subf %153, %395 : vector<2x1xf32>
    %401 = math.exp %400 : vector<2x1xf32>
    %402 = arith.subf %200, %395 : vector<2x1xf32>
    %403 = math.exp %402 : vector<2x1xf32>
    %404 = arith.subf %247, %395 : vector<2x1xf32>
    %405 = math.exp %404 : vector<2x1xf32>
    %406 = arith.subf %294, %395 : vector<2x1xf32>
    %407 = math.exp %406 : vector<2x1xf32>
    %408 = arith.subf %341, %395 : vector<2x1xf32>
    %409 = math.exp %408 : vector<2x1xf32>
    %410 = arith.subf %388, %395 : vector<2x1xf32>
    %411 = math.exp %410 : vector<2x1xf32>
    %412 = vector.broadcast %397 : vector<2x1xf32> to vector<2x64xf32>
    %413 = arith.mulf %412, %51 : vector<2x64xf32>
    %414 = arith.addf %397, %399 : vector<2x1xf32>
    %415 = vector.broadcast %399 : vector<2x1xf32> to vector<2x64xf32>
    %416 = arith.mulf %415, %98 : vector<2x64xf32>
    %417 = arith.addf %413, %416 : vector<2x64xf32>
    %418 = arith.addf %414, %401 : vector<2x1xf32>
    %419 = vector.broadcast %401 : vector<2x1xf32> to vector<2x64xf32>
    %420 = arith.mulf %419, %145 : vector<2x64xf32>
    %421 = arith.addf %417, %420 : vector<2x64xf32>
    %422 = arith.addf %418, %403 : vector<2x1xf32>
    %423 = vector.broadcast %403 : vector<2x1xf32> to vector<2x64xf32>
    %424 = arith.mulf %423, %192 : vector<2x64xf32>
    %425 = arith.addf %421, %424 : vector<2x64xf32>
    %426 = arith.addf %422, %405 : vector<2x1xf32>
    %427 = vector.broadcast %405 : vector<2x1xf32> to vector<2x64xf32>
    %428 = arith.mulf %427, %239 : vector<2x64xf32>
    %429 = arith.addf %425, %428 : vector<2x64xf32>
    %430 = arith.addf %426, %407 : vector<2x1xf32>
    %431 = vector.broadcast %407 : vector<2x1xf32> to vector<2x64xf32>
    %432 = arith.mulf %431, %286 : vector<2x64xf32>
    %433 = arith.addf %429, %432 : vector<2x64xf32>
    %434 = arith.addf %430, %409 : vector<2x1xf32>
    %435 = vector.broadcast %409 : vector<2x1xf32> to vector<2x64xf32>
    %436 = arith.mulf %435, %333 : vector<2x64xf32>
    %437 = arith.addf %433, %436 : vector<2x64xf32>
    %438 = arith.addf %434, %411 : vector<2x1xf32>
    %439 = vector.broadcast %411 : vector<2x1xf32> to vector<2x64xf32>
    %440 = arith.mulf %439, %380 : vector<2x64xf32>
    %441 = arith.addf %437, %440 : vector<2x64xf32>
    %442 = vector.broadcast %438 : vector<2x1xf32> to vector<2x64xf32>
    %443 = arith.divf %441, %442 : vector<2x64xf32>
    %444 = tpu.concatenate %380, %443 in 1 : vector<2x64xf32>, vector<2x64xf32> -> vector<2x128xf32>
    %c0_66 = arith.constant 0 : index
    %c0_67 = arith.constant 0 : index
    %445 = vector.load %arg9[%c0_66, %c0_67] : memref<2x128xf32, #tpu.memory_space<vmem>>, vector<2x128xf32>
    tpu.vector_store %arg9[%c0_66, %c0_67], %444 {strides = array<i32>} : memref<2x128xf32, #tpu.memory_space<vmem>>, vector<2x128xf32>,
    return
  }
}

</mosaic_0001>

<llo_original>
// kernel: lstm_attn_forward_pallas.1
$region0: #{lstm_attn_forward_pallas.1}
  #allocation0 [shape = 'u32[]', space=smem, size = 0x4, offset = 0x4, fixed_abs, tag = 'smem constant byte address 0x4 - core index']
  #allocation1 [shape = 'u32[144,128]{1,0:T(1,128)}', space=vmem, size = 0x12000, scoped, tag = 'internal scratch']
  %s0 = inlined_call_operand.vmem [shape: f32[16,14], index: 0, kind: input, shape index: {}]
  %s1 = inlined_call_operand.vmem [shape: f32[14,256], index: 1, kind: input, shape index: {}]
  %s2 = inlined_call_operand.hbm [shape: f32[64,256], index: 2, kind: input, shape index: {}]
  %s3 = inlined_call_operand.vmem [shape: f32[1,256], index: 3, kind: input, shape index: {}]
  %s4 = inlined_call_operand.hbm [shape: f32[128,256], index: 4, kind: input, shape index: {}]
  %s5 = inlined_call_operand.vmem [shape: f32[1,256], index: 5, kind: input, shape index: {}]
  %s6 = inlined_call_operand.hbm [shape: f32[64,64], index: 6, kind: input, shape index: {}]
  %s7 = inlined_call_operand.vmem [shape: f32[1,64], index: 7, kind: input, shape index: {}]
  %s8 = inlined_call_operand.vmem [shape: f32[1,64], index: 8, kind: input, shape index: {}]
  %s9 = inlined_call_operand.hbm [shape: f32[2,128], index: 9, kind: output, shape index: {}]
  %s10 = sld [smem:[#allocation0]]
  $region58: #{lstm_attn_forward_pallas.1} parent=0
    _
  %s12 = ssub.s32 1, %s10
  %s13 = scalar_select 0, %s12, %s10
  $region1: #{lstm_attn_forward_pallas.1} parent=0
    #allocation2 [shape = 'u8[65536]{0}', space=vmem, size = 0x10000, scoped, tag = 'input window, operand 2, single buffered']
    #allocation3 [shape = 's32[1]{0}', space=sflag, size = 0x4, scoped, tag = 'scoped memory for lstm_attn_forward_pallas.1']
    #allocation4 [shape = 's32[1]{0}', space=sflag, size = 0x4, scoped, tag = 'scoped memory for lstm_attn_forward_pallas.1']
    #allocation5 [shape = 'u8[131072]{0}', space=vmem, size = 0x20000, scoped, tag = 'input window, operand 4, single buffered']
    #allocation6 [shape = 's32[1]{0}', space=sflag, size = 0x4, scoped, tag = 'scoped memory for lstm_attn_forward_pallas.1']
    #allocation7 [shape = 'u8[32768]{0}', space=vmem, size = 0x8000, scoped, tag = 'input window, operand 6, single buffered']
    #allocation8 [shape = 'u8[1024]{0}', space=vmem, size = 0x400, scoped, tag = 'output window, operand 0, single buffered']
    %14 = vsyncpa [#allocation3], 0
    %15 = vsyncpa [#allocation6], 0
    %16 = vsyncpa [#allocation4], 0
    // Predicated region
    $region2: #{lstm_attn_forward_pallas.1} parent=1 // pred_check
      _
    $region3: #{lstm_attn_forward_pallas.1} parent=1 // pred_check_branch
      %18 = sbr.rel (0) target = $region5
    $region4: #{lstm_attn_forward_pallas.1} parent=1 // pred_region
      _
    $region5: #{lstm_attn_forward_pallas.1} parent=1 // pred_fallthru
      _
    // Predicated region
    $region6: #{lstm_attn_forward_pallas.1} parent=1 // pred_check
      _
    $region7: #{lstm_attn_forward_pallas.1} parent=1 // pred_check_branch
      %20 = sbr.rel (0) target = $region9
    $region8: #{lstm_attn_forward_pallas.1} parent=1 // pred_region
      _
    $region9: #{lstm_attn_forward_pallas.1} parent=1 // pred_fallthru
      _
    // Predicated region
    $region10: #{lstm_attn_forward_pallas.1} parent=1 // pred_check
      _
    $region11: #{lstm_attn_forward_pallas.1} parent=1 // pred_check_branch
      %22 = sbr.rel (0) target = $region13
    $region12: #{lstm_attn_forward_pallas.1} parent=1 // pred_region
      %s24 = ssub.s32 2048, 2048
      %25 = vsyncadd [#allocation3], %s24
      %s26 = sshll.u32 [#allocation2], 4
      %s27 = int_to_ptr.vmem [resolvable:$true] %s26
      %32 = dma.hbm_to_vmem [thread:$0]  %s2, 2048, %s27, [#allocation3], 256, 256, 16
    $region13: #{lstm_attn_forward_pallas.1} parent=1 // pred_fallthru
      _
    // Predicated region
    $region14: #{lstm_attn_forward_pallas.1} parent=1 // pred_check
      _
    $region15: #{lstm_attn_forward_pallas.1} parent=1 // pred_check_branch
      %34 = sbr.rel (0) target = $region17
    $region16: #{lstm_attn_forward_pallas.1} parent=1 // pred_region
      _
    $region17: #{lstm_attn_forward_pallas.1} parent=1 // pred_fallthru
      _
    // Predicated region
    $region18: #{lstm_attn_forward_pallas.1} parent=1 // pred_check
      _
    $region19: #{lstm_attn_forward_pallas.1} parent=1 // pred_check_branch
      %36 = sbr.rel (0) target = $region21
    $region20: #{lstm_attn_forward_pallas.1} parent=1 // pred_region
      %s38 = ssub.s32 4096, 4096
      %39 = vsyncadd [#allocation6], %s38
      %s40 = sshll.u32 [#allocation5], 4
      %s41 = int_to_ptr.vmem [resolvable:$true] %s40
      %46 = dma.hbm_to_vmem [thread:$0]  %s4, 4096, %s41, [#allocation6], 256, 256, 16
    $region21: #{lstm_attn_forward_pallas.1} parent=1 // pred_fallthru
      _
    // Predicated region
    $region22: #{lstm_attn_forward_pallas.1} parent=1 // pred_check
      _
    $region23: #{lstm_attn_forward_pallas.1} parent=1 // pred_check_branch
      %48 = sbr.rel (0) target = $region25
    $region24: #{lstm_attn_forward_pallas.1} parent=1 // pred_region
      _
    $region25: #{lstm_attn_forward_pallas.1} parent=1 // pred_fallthru
      _
    // Predicated region
    $region26: #{lstm_attn_forward_pallas.1} parent=1 // pred_check
      _
    $region27: #{lstm_attn_forward_pallas.1} parent=1 // pred_check_branch
      %50 = sbr.rel (0) target = $region29
    $region28: #{lstm_attn_forward_pallas.1} parent=1 // pred_region
      %s52 = ssub.s32 1024, 1024
      %53 = vsyncadd [#allocation6], %s52
      %s54 = sshll.u32 [#allocation7], 4
      %s55 = int_to_ptr.vmem [resolvable:$true] %s54
      %60 = dma.hbm_to_vmem [thread:$0]  %s6, 1024, %s55, [#allocation6], 128, 128, 8
    $region29: #{lstm_attn_forward_pallas.1} parent=1 // pred_fallthru
      _
    // Predicated region
    $region30: #{lstm_attn_forward_pallas.1} parent=1 // pred_check
      _
    $region31: #{lstm_attn_forward_pallas.1} parent=1 // pred_check_branch
      %62 = sbr.rel (0) target = $region33
    $region32: #{lstm_attn_forward_pallas.1} parent=1 // pred_region
      _
    $region33: #{lstm_attn_forward_pallas.1} parent=1 // pred_fallthru
      _
    // Predicated region
    $region34: #{lstm_attn_forward_pallas.1} parent=1 // pred_check
      _
    $region35: #{lstm_attn_forward_pallas.1} parent=1 // pred_check_branch
      %64 = sbr.rel (0) target = $region37
    $region36: #{lstm_attn_forward_pallas.1} parent=1 // pred_region
      _
    $region37: #{lstm_attn_forward_pallas.1} parent=1 // pred_fallthru
      _
    // Predicated region
    $region38: #{lstm_attn_forward_pallas.1} parent=1 // pred_check
      _
    $region39: #{lstm_attn_forward_pallas.1} parent=1 // pred_check_branch
      %66 = sbr.rel (0) target = $region41
    $region40: #{lstm_attn_forward_pallas.1} parent=1 // pred_region
      %67 = dma.done [#allocation3], 2048
    $region41: #{lstm_attn_forward_pallas.1} parent=1 // pred_fallthru
      _
    // Predicated region
    $region42: #{lstm_attn_forward_pallas.1} parent=1 // pred_check
      _
    $region43: #{lstm_attn_forward_pallas.1} parent=1 // pred_check_branch
      %69 = sbr.rel (0) target = $region45
    $region44: #{lstm_attn_forward_pallas.1} parent=1 // pred_region
      %70 = dma.done [#allocation6], 4096
    $region45: #{lstm_attn_forward_pallas.1} parent=1 // pred_fallthru
      _
    // Predicated region
    $region46: #{lstm_attn_forward_pallas.1} parent=1 // pred_check
      _
    $region47: #{lstm_attn_forward_pallas.1} parent=1 // pred_check_branch
      %72 = sbr.rel (0) target = $region49
    $region48: #{lstm_attn_forward_pallas.1} parent=1 // pred_region
      %73 = dma.done [#allocation6], 1024
    $region49: #{lstm_attn_forward_pallas.1} parent=1 // pred_fallthru
      _
    %v74 = vld [vmem:[#allocation2] sm:$0xff]
    %v75 = vld [vmem:[#allocation2 + $0x8] sm:$0xff]
    %v76 = vld [vmem:[#allocation2 + $0x10] sm:$0xff]
    %v77 = vld [vmem:[#allocation2 + $0x18] sm:$0xff]
    %v78 = vld [vmem:[#allocation2 + $0x20] sm:$0xff]
    %v79 = vld [vmem:[#allocation2 + $0x28] sm:$0xff]
    %v80 = vld [vmem:[#allocation2 + $0x30] sm:$0xff]
    %v81 = vld [vmem:[#allocation2 + $0x38] sm:$0xff]
    %v82 = vld [vmem:[#allocation2 + $0x40] sm:$0xff]
    %v83 = vld [vmem:[#allocation2 + $0x48] sm:$0xff]
    %v84 = vld [vmem:[#allocation2 + $0x50] sm:$0xff]
    %v85 = vld [vmem:[#allocation2 + $0x58] sm:$0xff]
    %v86 = vld [vmem:[#allocation2 + $0x60] sm:$0xff]
    %v87 = vld [vmem:[#allocation2 + $0x68] sm:$0xff]
    %v88 = vld [vmem:[#allocation2 + $0x70] sm:$0xff]
    %v89 = vld [vmem:[#allocation2 + $0x78] sm:$0xff]
    %v90 = vld [vmem:[#allocation5] sm:$0xff]
    %v91 = vld [vmem:[#allocation5 + $0x8] sm:$0xff]
    %v92 = vld [vmem:[#allocation5 + $0x10] sm:$0xff]
    %v93 = vld [vmem:[#allocation5 + $0x18] sm:$0xff]
    %v94 = vld [vmem:[#allocation5 + $0x20] sm:$0xff]
    %v95 = vld [vmem:[#allocation5 + $0x28] sm:$0xff]
    %v96 = vld [vmem:[#allocation5 + $0x30] sm:$0xff]
    %v97 = vld [vmem:[#allocation5 + $0x38] sm:$0xff]
    %v98 = vld [vmem:[#allocation5 + $0x40] sm:$0xff]
    %v99 = vld [vmem:[#allocation5 + $0x48] sm:$0xff]
    %v100 = vld [vmem:[#allocation5 + $0x50] sm:$0xff]
    %v101 = vld [vmem:[#allocation5 + $0x58] sm:$0xff]
    %v102 = vld [vmem:[#allocation5 + $0x60] sm:$0xff]
    %v103 = vld [vmem:[#allocation5 + $0x68] sm:$0xff]
    %v104 = vld [vmem:[#allocation5 + $0x70] sm:$0xff]
    %v105 = vld [vmem:[#allocation5 + $0x78] sm:$0xff]
    %v106 = vld [vmem:[#allocation5 + $0x80] sm:$0xff]
    %v107 = vld [vmem:[#allocation5 + $0x88] sm:$0xff]
    %v108 = vld [vmem:[#allocation5 + $0x90] sm:$0xff]
    %v109 = vld [vmem:[#allocation5 + $0x98] sm:$0xff]
    %v110 = vld [vmem:[#allocation5 + $0xa0] sm:$0xff]
    %v111 = vld [vmem:[#allocation5 + $0xa8] sm:$0xff]
    %v112 = vld [vmem:[#allocation5 + $0xb0] sm:$0xff]
    %v113 = vld [vmem:[#allocation5 + $0xb8] sm:$0xff]
    %v114 = vld [vmem:[#allocation5 + $0xc0] sm:$0xff]
    %v115 = vld [vmem:[#allocation5 + $0xc8] sm:$0xff]
    %v116 = vld [vmem:[#allocation5 + $0xd0] sm:$0xff]
    %v117 = vld [vmem:[#allocation5 + $0xd8] sm:$0xff]
    %v118 = vld [vmem:[#allocation5 + $0xe0] sm:$0xff]
    %v119 = vld [vmem:[#allocation5 + $0xe8] sm:$0xff]
    %v120 = vld [vmem:[#allocation5 + $0xf0] sm:$0xff]
    %v121 = vld [vmem:[#allocation5 + $0xf8] sm:$0xff]
    %v122 = vld [vmem:[%s5] sm:$0x3]
    %v123 = vld [vmem:[#allocation7] sm:$0xff]
    %v124 = vld [vmem:[#allocation7 + $0x8] sm:$0xff]
    %v125 = vld [vmem:[#allocation7 + $0x10] sm:$0xff]
    %v126 = vld [vmem:[#allocation7 + $0x18] sm:$0xff]
    %v127 = vld [vmem:[#allocation7 + $0x20] sm:$0xff]
    %v128 = vld [vmem:[#allocation7 + $0x28] sm:$0xff]
    %v129 = vld [vmem:[#allocation7 + $0x30] sm:$0xff]
    %v130 = vld [vmem:[#allocation7 + $0x38] sm:$0xff]
    %v131 = vld [vmem:[%s7] sm:$0x1]
    %v132 = vld [vmem:[%s8] sm:$0x1]
    %v133 = vld [vmem:[%s0] sm:$0xff]
    %v134 = vld [vmem:[%s0 + $0x8] sm:$0xff]
    %v135 = vld [vmem:[%s1] sm:$0xff]
    %v136 = vld [vmem:[%s1 + $0x8] sm:$0xff]
    %v137 = vld [vmem:[%s1 + $0x10] sm:$0x3f]
    %v138 = vld [vmem:[%s1 + $0x18] sm:$0x3f]
    %v139 = vld [vmem:[%s3] sm:$0x3]
    %v141 = vlaneseq
    %v142 = vshrl.u32 %v141, 7
    %v143 = vsub.s32 0, %v142
    %v144 = vrot.slane %v139, %v143
    %v145 = vlaneseq
    %v146 = vshrl.u32 %v145, 7
    %v147 = vsub.s32 1, %v146
    %v148 = vrot.slane %v139, %v147
    %vm151 = vcmask 113664
    %v153 = vsel %vm151, %v133, 0
    %v156 = vsel %vm151, %v134, 0
    %vm158 = vcmask 1045504
    %v160 = vsel %vm158, %v137, 0
    %v163 = vsel %vm158, %v138, 0
    %165 = vmatprep.subr.mxu0 0.0
    %166 = vmatpush1.msra.mxu0 0.0
    %167 = vmatprep.subr.mxu0 0.0
    %168 = vmatpush1.msra.mxu0 0.0
    %169 = vmatprep.subr.mxu0 0.0
    %170 = vmatpush1.msra.mxu0 0.0
    %171 = vmatprep.subr.mxu0 0.0
    %172 = vmatpush1.msra.mxu0 0.0
    %173 = vmatprep.subr.mxu0 0.0
    %174 = vmatpush1.msra.mxu0 0.0
    %175 = vmatprep.subr.mxu0 0.0
    %176 = vmatpush1.msra.mxu0 0.0
    %177 = vmatprep.subr.mxu0 0.0
    %178 = vmatpush1.msra.mxu0 0.0
    %179 = vmatprep.subr.mxu0 0.0
    %180 = vmatpush1.msra.mxu0 0.0
    %181 = vmatprep.subr.mxu0 0.0
    %182 = vmatpush1.msra.mxu0 0.0
    %183 = vmatprep.subr.mxu0 0.0
    %184 = vmatpush1.msra.mxu0 0.0
    %185 = vmatprep.subr.mxu0 0.0
    %186 = vmatpush1.msra.mxu0 0.0
    %187 = vmatprep.subr.mxu0 0.0
    %188 = vmatpush1.msra.mxu0 0.0
    %189 = vmatprep.subr.mxu0 0.0
    %190 = vmatpush1.msra.mxu0 0.0
    %191 = vmatprep.subr.mxu0 0.0
    %192 = vmatpush1.msra.mxu0 0.0
    %193 = vmatprep.subr.mxu0 %v163
    %194 = vmatpush1.msra.mxu0 %v160
    %195 = vmatprep.subr.mxu0 %v136
    %196 = vmatpush1.msra.mxu0 %v135
    %197 = vmatprep.subr.mxu0 0.0
    %198 = vmatpush2.msra.mxu0 0.0
    %199 = vmatprep.subr.mxu0 0.0
    %200 = vmatpush2.msra.mxu0 0.0
    %201 = vmatprep.subr.mxu0 0.0
    %202 = vmatpush2.msra.mxu0 0.0
    %203 = vmatprep.subr.mxu0 0.0
    %204 = vmatpush2.msra.mxu0 0.0
    %205 = vmatprep.subr.mxu0 0.0
    %206 = vmatpush2.msra.mxu0 0.0
    %207 = vmatprep.subr.mxu0 0.0
    %208 = vmatpush2.msra.mxu0 0.0
    %209 = vmatprep.subr.mxu0 0.0
    %210 = vmatpush2.msra.mxu0 0.0
    %211 = vmatprep.subr.mxu0 0.0
    %212 = vmatpush2.msra.mxu0 0.0
    %213 = vmatprep.subr.mxu0 0.0
    %214 = vmatpush2.msra.mxu0 0.0
    %215 = vmatprep.subr.mxu0 0.0
    %216 = vmatpush2.msra.mxu0 0.0
    %217 = vmatprep.subr.mxu0 0.0
    %218 = vmatpush2.msra.mxu0 0.0
    %219 = vmatprep.subr.mxu0 0.0
    %220 = vmatpush2.msra.mxu0 0.0
    %221 = vmatprep.subr.mxu0 0.0
    %222 = vmatpush2.msra.mxu0 0.0
    %223 = vmatprep.subr.mxu0 0.0
    %224 = vmatpush2.msra.mxu0 0.0
    %225 = vmatprep.subr.mxu0 0.0
    %226 = vmatpush2.msra.mxu0 0.0
    %227 = vmatprep.subr.mxu0 0.0
    %228 = vmatpush2.msra.mxu0 0.0
    %229 = vmatprep.mubr.f32.mxu0 0.0
    %230 = vmatmul.mubr.f32.gmra.mxu0 %v153
    %v231 = vpop.f32.mrf.mxu0
    %v232 = vadd.f32 %v144, %v231
    %v233 = vpop.f32.mrf.mxu0
    %v234 = vadd.f32 %v148, %v233
    %235 = vmatprep.mubr.f32.mxu0 0.0
    %236 = vmatmul.mubr.f32.gmra.mxu0 %v156
    %v237 = vpop.f32.mrf.mxu0
    %v238 = vadd.f32 %v144, %v237
    %v239 = vpop.f32.mrf.mxu0
    %v240 = vadd.f32 %v148, %v239
    %241 = vdwg.mxu0
    %vm242 = vcmask 523264
    %v244 = vsel %vm242, 0.0, 0
    %246 = vmatprep.subr.mxu0 0.0
    %247 = vmatpush1.msra.mxu0 0.0
    %248 = vmatprep.subr.mxu0 0.0
    %249 = vmatpush1.msra.mxu0 0.0
    %250 = vmatprep.subr.mxu0 0.0
    %251 = vmatpush1.msra.mxu0 0.0
    %252 = vmatprep.subr.mxu0 0.0
    %253 = vmatpush1.msra.mxu0 0.0
    %254 = vmatprep.subr.mxu0 0.0
    %255 = vmatpush1.msra.mxu0 0.0
    %256 = vmatprep.subr.mxu0 0.0
    %257 = vmatpush1.msra.mxu0 0.0
    %258 = vmatprep.subr.mxu0 0.0
    %259 = vmatpush1.msra.mxu0 0.0
    %260 = vmatprep.subr.mxu0 0.0
    %261 = vmatpush1.msra.mxu0 0.0
    %262 = vmatprep.subr.mxu0 %v89
    %263 = vmatpush1.msra.mxu0 %v88
    %264 = vmatprep.subr.mxu0 %v87
    %265 = vmatpush1.msra.mxu0 %v86
    %266 = vmatprep.subr.mxu0 %v85
    %267 = vmatpush1.msra.mxu0 %v84
    %268 = vmatprep.subr.mxu0 %v83
    %269 = vmatpush1.msra.mxu0 %v82
    %270 = vmatprep.subr.mxu0 %v81
    %271 = vmatpush1.msra.mxu0 %v80
    %272 = vmatprep.subr.mxu0 %v79
    %273 = vmatpush1.msra.mxu0 %v78
    %274 = vmatprep.subr.mxu0 %v77
    %275 = vmatpush1.msra.mxu0 %v76
    %276 = vmatprep.subr.mxu0 %v75
    %277 = vmatpush1.msra.mxu0 %v74
    %278 = vmatprep.subr.mxu0 0.0
    %279 = vmatpush2.msra.mxu0 0.0
    %280 = vmatprep.subr.mxu0 0.0
    %281 = vmatpush2.msra.mxu0 0.0
    %282 = vmatprep.subr.mxu0 0.0
    %283 = vmatpush2.msra.mxu0 0.0
    %284 = vmatprep.subr.mxu0 0.0
    %285 = vmatpush2.msra.mxu0 0.0
    %286 = vmatprep.subr.mxu0 0.0
    %287 = vmatpush2.msra.mxu0 0.0
    %288 = vmatprep.subr.mxu0 0.0
    %289 = vmatpush2.msra.mxu0 0.0
    %290 = vmatprep.subr.mxu0 0.0
    %291 = vmatpush2.msra.mxu0 0.0
    %292 = vmatprep.subr.mxu0 0.0
    %293 = vmatpush2.msra.mxu0 0.0
    %294 = vmatprep.subr.mxu0 0.0
    %295 = vmatpush2.msra.mxu0 0.0
    %296 = vmatprep.subr.mxu0 0.0
    %297 = vmatpush2.msra.mxu0 0.0
    %298 = vmatprep.subr.mxu0 0.0
    %299 = vmatpush2.msra.mxu0 0.0
    %300 = vmatprep.subr.mxu0 0.0
    %301 = vmatpush2.msra.mxu0 0.0
    %302 = vmatprep.subr.mxu0 0.0
    %303 = vmatpush2.msra.mxu0 0.0
    %304 = vmatprep.subr.mxu0 0.0
    %305 = vmatpush2.msra.mxu0 0.0
    %306 = vmatprep.subr.mxu0 0.0
    %307 = vmatpush2.msra.mxu0 0.0
    %308 = vmatprep.subr.mxu0 0.0
    %309 = vmatpush2.msra.mxu0 0.0
    %310 = vmatprep.mubr.f32.mxu0 0.0
    %311 = vmatmul.mubr.f32.gmra.mxu0 %v244
    %v312 = vpop.f32.mrf.mxu0
    %v313 = vadd.f32 0.0, %v312
    %v314 = vpop.f32.mrf.mxu0
    %v315 = vadd.f32 0.0, %v314
    %316 = vdwg.mxu0
    %v317 = vadd.f32 %v232, %v313
    %v318 = vadd.f32 %v234, %v315
    %v319 = vxor.u32 %v317, 2147483648
    %v320 = vxor.u32 %v318, 2147483648
    %v321 = vmul.f32 %v319, 1.442695
    %v322 = vpow.pop %v321
    %v323 = vmul.f32 %v320, 1.442695
    %v324 = vpow.pop %v323
    %v325 = vadd.f32 %v322, 1.0
    %v326 = vadd.f32 %v324, 1.0
    %v327 = vrcp.pop %v325
    %v328 = vmul.f32 1.0, %v327
    %v329 = vrcp.pop %v326
    %v330 = vmul.f32 1.0, %v329
    %v331 = vtanh.pop %v318
    %v332 = vmul.f32 %v328, 0.0
    %334 = vrot.lane.b32.xlu0 %v331, 64
    %v335 = vpop.permute.xlu0 %334
    %v337 = vmul.f32 %v328, %v335
    %339 = vrot.lane.b32.xlu0 %v337, 64
    %v340 = vpop.permute.xlu0 %339
    %v342 = vadd.f32 %v332, %v340
    %v343 = vtanh.pop %v342
    %345 = vrot.lane.b32.xlu0 %v343, 64
    %v346 = vpop.permute.xlu0 %345
    %v348 = vmul.f32 %v330, %v346
    %v349 = vsel %vm242, %v348, 0.0
    %v351 = vlaneseq
    %v352 = vshrl.u32 %v351, 7
    %v353 = vsub.s32 0, %v352
    %v354 = vrot.slane %v122, %v353
    %v355 = vlaneseq
    %v356 = vshrl.u32 %v355, 7
    %v357 = vsub.s32 1, %v356
    %v358 = vrot.slane %v122, %v357
    %361 = vmatprep.subr.mxu0 %v121
    %362 = vmatpush1.msra.mxu0 %v120
    %363 = vmatprep.subr.mxu0 %v119
    %364 = vmatpush1.msra.mxu0 %v118
    %365 = vmatprep.subr.mxu0 %v117
    %366 = vmatpush1.msra.mxu0 %v116
    %367 = vmatprep.subr.mxu0 %v115
    %368 = vmatpush1.msra.mxu0 %v114
    %369 = vmatprep.subr.mxu0 %v113
    %370 = vmatpush1.msra.mxu0 %v112
    %371 = vmatprep.subr.mxu0 %v111
    %372 = vmatpush1.msra.mxu0 %v110
    %373 = vmatprep.subr.mxu0 %v109
    %374 = vmatpush1.msra.mxu0 %v108
    %375 = vmatprep.subr.mxu0 %v107
    %376 = vmatpush1.msra.mxu0 %v106
    %377 = vmatprep.subr.mxu0 %v105
    %378 = vmatpush1.msra.mxu0 %v104
    %379 = vmatprep.subr.mxu0 %v103
    %380 = vmatpush1.msra.mxu0 %v102
    %381 = vmatprep.subr.mxu0 %v101
    %382 = vmatpush1.msra.mxu0 %v100
    %383 = vmatprep.subr.mxu0 %v99
    %384 = vmatpush1.msra.mxu0 %v98
    %385 = vmatprep.subr.mxu0 %v97
    %386 = vmatpush1.msra.mxu0 %v96
    %387 = vmatprep.subr.mxu0 %v95
    %388 = vmatpush1.msra.mxu0 %v94
    %389 = vmatprep.subr.mxu0 %v93
    %390 = vmatpush1.msra.mxu0 %v92
    %391 = vmatprep.subr.mxu0 %v91
    %392 = vmatpush1.msra.mxu0 %v90
    %393 = vmatprep.subr.mxu0 0.0
    %394 = vmatpush2.msra.mxu0 0.0
    %395 = vmatprep.subr.mxu0 0.0
    %396 = vmatpush2.msra.mxu0 0.0
    %397 = vmatprep.subr.mxu0 0.0
    %398 = vmatpush2.msra.mxu0 0.0
    %399 = vmatprep.subr.mxu0 0.0
    %400 = vmatpush2.msra.mxu0 0.0
    %401 = vmatprep.subr.mxu0 0.0
    %402 = vmatpush2.msra.mxu0 0.0
    %403 = vmatprep.subr.mxu0 0.0
    %404 = vmatpush2.msra.mxu0 0.0
    %405 = vmatprep.subr.mxu0 0.0
    %406 = vmatpush2.msra.mxu0 0.0
    %407 = vmatprep.subr.mxu0 0.0
    %408 = vmatpush2.msra.mxu0 0.0
    %409 = vmatprep.subr.mxu0 0.0
    %410 = vmatpush2.msra.mxu0 0.0
    %411 = vmatprep.subr.mxu0 0.0
    %412 = vmatpush2.msra.mxu0 0.0
    %413 = vmatprep.subr.mxu0 0.0
    %414 = vmatpush2.msra.mxu0 0.0
    %415 = vmatprep.subr.mxu0 0.0
    %416 = vmatpush2.msra.mxu0 0.0
    %417 = vmatprep.subr.mxu0 0.0
    %418 = vmatpush2.msra.mxu0 0.0
    %419 = vmatprep.subr.mxu0 0.0
    %420 = vmatpush2.msra.mxu0 0.0
    %421 = vmatprep.subr.mxu0 0.0
    %422 = vmatpush2.msra.mxu0 0.0
    %423 = vmatprep.subr.mxu0 0.0
    %424 = vmatpush2.msra.mxu0 0.0
    %425 = vmatprep.mubr.f32.mxu0 0.0
    %426 = vmatmul.mubr.f32.gmra.mxu0 %v349
    %v427 = vpop.f32.mrf.mxu0
    %v428 = vadd.f32 %v354, %v427
    %v429 = vpop.f32.mrf.mxu0
    %v430 = vadd.f32 %v358, %v429
    %431 = vdwg.mxu0
    %v432 = vxor.u32 %v428, 2147483648
    %v433 = vxor.u32 %v430, 2147483648
    %v434 = vmul.f32 %v432, 1.442695
    %v435 = vpow.pop %v434
    %v436 = vmul.f32 %v433, 1.442695
    %v437 = vpow.pop %v436
    %v438 = vadd.f32 %v435, 1.0
    %v439 = vadd.f32 %v437, 1.0
    %v440 = vrcp.pop %v438
    %v441 = vmul.f32 1.0, %v440
    %v442 = vrcp.pop %v439
    %v443 = vmul.f32 1.0, %v442
    %v444 = vtanh.pop %v430
    %v445 = vmul.f32 %v441, 0.0
    %447 = vrot.lane.b32.xlu0 %v444, 64
    %v448 = vpop.permute.xlu0 %447
    %v450 = vmul.f32 %v441, %v448
    %452 = vrot.lane.b32.xlu0 %v450, 64
    %v453 = vpop.permute.xlu0 %452
    %v455 = vadd.f32 %v445, %v453
    %v456 = vtanh.pop %v455
    %458 = vrot.lane.b32.xlu0 %v456, 64
    %v459 = vpop.permute.xlu0 %458
    %v461 = vmul.f32 %v443, %v459
    %v463 = vlaneseq
    %v464 = vshrl.u32 %v463, 7
    %v465 = vsub.s32 0, %v464
    %v466 = vrot.slane %v131, %v465
    %v469 = vsel %vm242, %v461, 0
    %471 = vmatprep.subr.mxu0 0.0
    %472 = vmatpush1.msra.mxu0 0.0
    %473 = vmatprep.subr.mxu0 0.0
    %474 = vmatpush1.msra.mxu0 0.0
    %475 = vmatprep.subr.mxu0 0.0
    %476 = vmatpush1.msra.mxu0 0.0
    %477 = vmatprep.subr.mxu0 0.0
    %478 = vmatpush1.msra.mxu0 0.0
    %479 = vmatprep.subr.mxu0 0.0
    %480 = vmatpush1.msra.mxu0 0.0
    %481 = vmatprep.subr.mxu0 0.0
    %482 = vmatpush1.msra.mxu0 0.0
    %483 = vmatprep.subr.mxu0 0.0
    %484 = vmatpush1.msra.mxu0 0.0
    %485 = vmatprep.subr.mxu0 0.0
    %486 = vmatpush1.msra.mxu0 0.0
    %487 = vmatprep.subr.mxu0 0.0
    %488 = vmatpush1.msra.mxu0 %v130
    %489 = vmatprep.subr.mxu0 0.0
    %490 = vmatpush1.msra.mxu0 %v129
    %491 = vmatprep.subr.mxu0 0.0
    %492 = vmatpush1.msra.mxu0 %v128
    %493 = vmatprep.subr.mxu0 0.0
    %494 = vmatpush1.msra.mxu0 %v127
    %495 = vmatprep.subr.mxu0 0.0
    %496 = vmatpush1.msra.mxu0 %v126
    %497 = vmatprep.subr.mxu0 0.0
    %498 = vmatpush1.msra.mxu0 %v125
    %499 = vmatprep.subr.mxu0 0.0
    %500 = vmatpush1.msra.mxu0 %v124
    %501 = vmatprep.subr.mxu0 0.0
    %502 = vmatpush1.msra.mxu0 %v123
    %503 = vmatprep.subr.mxu0 0.0
    %504 = vmatpush2.msra.mxu0 0.0
    %505 = vmatprep.subr.mxu0 0.0
    %506 = vmatpush2.msra.mxu0 0.0
    %507 = vmatprep.subr.mxu0 0.0
    %508 = vmatpush2.msra.mxu0 0.0
    %509 = vmatprep.subr.mxu0 0.0
    %510 = vmatpush2.msra.mxu0 0.0
    %511 = vmatprep.subr.mxu0 0.0
    %512 = vmatpush2.msra.mxu0 0.0
    %513 = vmatprep.subr.mxu0 0.0
    %514 = vmatpush2.msra.mxu0 0.0
    %515 = vmatprep.subr.mxu0 0.0
    %516 = vmatpush2.msra.mxu0 0.0
    %517 = vmatprep.subr.mxu0 0.0
    %518 = vmatpush2.msra.mxu0 0.0
    %519 = vmatprep.subr.mxu0 0.0
    %520 = vmatpush2.msra.mxu0 0.0
    %521 = vmatprep.subr.mxu0 0.0
    %522 = vmatpush2.msra.mxu0 0.0
    %523 = vmatprep.subr.mxu0 0.0
    %524 = vmatpush2.msra.mxu0 0.0
    %525 = vmatprep.subr.mxu0 0.0
    %526 = vmatpush2.msra.mxu0 0.0
    %527 = vmatprep.subr.mxu0 0.0
    %528 = vmatpush2.msra.mxu0 0.0
    %529 = vmatprep.subr.mxu0 0.0
    %530 = vmatpush2.msra.mxu0 0.0
    %531 = vmatprep.subr.mxu0 0.0
    %532 = vmatpush2.msra.mxu0 0.0
    %533 = vmatprep.subr.mxu0 0.0
    %534 = vmatpush2.msra.mxu0 0.0
    %535 = vmatprep.mubr.f32.mxu0 0.0
    %536 = vmatmul.mubr.f32.gmra.mxu0 %v469
    %v537 = vpop.f32.mrf.mxu0
    %v538 = vadd.f32 %v466, %v537
    %v539 = vpop.f32.mrf.mxu0
    %540 = vdwg.mxu0
    %v541 = vtanh.pop %v538
    %v543 = vlaneseq
    %v544 = vshrl.u32 %v543, 7
    %v545 = vsub.s32 0, %v544
    %v546 = vrot.slane %v132, %v545
    %v548 = vmul.f32 %v541, %v546
    %vm549 = vcmask 517120
    %v550 = vsel %vm549, %v548, 0.0
    %551 = vadd.xlane.f32.xlu0 %v550
    %v552 = vpop.xlane.xlu0 %551
    %v554 = vsel %vm242, %v348, 0
    %556 = vmatprep.subr.mxu0 0.0
    %557 = vmatpush1.msra.mxu0 0.0
    %558 = vmatprep.subr.mxu0 0.0
    %559 = vmatpush1.msra.mxu0 0.0
    %560 = vmatprep.subr.mxu0 0.0
    %561 = vmatpush1.msra.mxu0 0.0
    %562 = vmatprep.subr.mxu0 0.0
    %563 = vmatpush1.msra.mxu0 0.0
    %564 = vmatprep.subr.mxu0 0.0
    %565 = vmatpush1.msra.mxu0 0.0
    %566 = vmatprep.subr.mxu0 0.0
    %567 = vmatpush1.msra.mxu0 0.0
    %568 = vmatprep.subr.mxu0 0.0
    %569 = vmatpush1.msra.mxu0 0.0
    %570 = vmatprep.subr.mxu0 0.0
    %571 = vmatpush1.msra.mxu0 0.0
    %572 = vmatprep.subr.mxu0 %v89
    %573 = vmatpush1.msra.mxu0 %v88
    %574 = vmatprep.subr.mxu0 %v87
    %575 = vmatpush1.msra.mxu0 %v86
    %576 = vmatprep.subr.mxu0 %v85
    %577 = vmatpush1.msra.mxu0 %v84
    %578 = vmatprep.subr.mxu0 %v83
    %579 = vmatpush1.msra.mxu0 %v82
    %580 = vmatprep.subr.mxu0 %v81
    %581 = vmatpush1.msra.mxu0 %v80
    %582 = vmatprep.subr.mxu0 %v79
    %583 = vmatpush1.msra.mxu0 %v78
    %584 = vmatprep.subr.mxu0 %v77
    %585 = vmatpush1.msra.mxu0 %v76
    %586 = vmatprep.subr.mxu0 %v75
    %587 = vmatpush1.msra.mxu0 %v74
    %588 = vmatprep.subr.mxu0 0.0
    %589 = vmatpush2.msra.mxu0 0.0
    %590 = vmatprep.subr.mxu0 0.0
    %591 = vmatpush2.msra.mxu0 0.0
    %592 = vmatprep.subr.mxu0 0.0
    %593 = vmatpush2.msra.mxu0 0.0
    %594 = vmatprep.subr.mxu0 0.0
    %595 = vmatpush2.msra.mxu0 0.0
    %596 = vmatprep.subr.mxu0 0.0
    %597 = vmatpush2.msra.mxu0 0.0
    %598 = vmatprep.subr.mxu0 0.0
    %599 = vmatpush2.msra.mxu0 0.0
    %600 = vmatprep.subr.mxu0 0.0
    %601 = vmatpush2.msra.mxu0 0.0
    %602 = vmatprep.subr.mxu0 0.0
    %603 = vmatpush2.msra.mxu0 0.0
    %604 = vmatprep.subr.mxu0 0.0
    %605 = vmatpush2.msra.mxu0 0.0
    %606 = vmatprep.subr.mxu0 0.0
    %607 = vmatpush2.msra.mxu0 0.0
    %608 = vmatprep.subr.mxu0 0.0
    %609 = vmatpush2.msra.mxu0 0.0
    %610 = vmatprep.subr.mxu0 0.0
    %611 = vmatpush2.msra.mxu0 0.0
    %612 = vmatprep.subr.mxu0 0.0
    %613 = vmatpush2.msra.mxu0 0.0
    %614 = vmatprep.subr.mxu0 0.0
    %615 = vmatpush2.msra.mxu0 0.0
    %616 = vmatprep.subr.mxu0 0.0
    %617 = vmatpush2.msra.mxu0 0.0
    %618 = vmatprep.subr.mxu0 0.0
    %619 = vmatpush2.msra.mxu0 0.0
    %620 = vmatprep.mubr.f32.mxu0 0.0
    %621 = vmatmul.mubr.f32.gmra.mxu0 %v554
    %v622 = vpop.f32.mrf.mxu0
    %v623 = vadd.f32 0.0, %v622
    %v624 = vpop.f32.mrf.mxu0
    %v625 = vadd.f32 0.0, %v624
    %626 = vdwg.mxu0
    %v629 = vrot.slane %v623, 6
    %v630 = vrot.slane %v625, 6
    %v633 = vadd.f32 %v232, %v629
    %v634 = vadd.f32 %v234, %v630
    %v635 = vxor.u32 %v633, 2147483648
    %v636 = vxor.u32 %v634, 2147483648
    %v637 = vmul.f32 %v635, 1.442695
    %v638 = vpow.pop %v637
    %v639 = vmul.f32 %v636, 1.442695
    %v640 = vpow.pop %v639
    %v641 = vadd.f32 %v638, 1.0
    %v642 = vadd.f32 %v640, 1.0
    %v643 = vrcp.pop %v641
    %v644 = vmul.f32 1.0, %v643
    %v645 = vrcp.pop %v642
    %v646 = vmul.f32 1.0, %v645
    %v647 = vtanh.pop %v634
    %v649 = vrot.slane %v342, 6
    %v651 = vmul.f32 %v644, %v649
    %653 = vrot.lane.b32.xlu0 %v647, 64
    %v654 = vpop.permute.xlu0 %653
    %v656 = vmul.f32 %v644, %v654
    %658 = vrot.lane.b32.xlu0 %v656, 64
    %v659 = vpop.permute.xlu0 %658
    %v661 = vadd.f32 %v651, %v659
    %v662 = vtanh.pop %v661
    %664 = vrot.lane.b32.xlu0 %v662, 64
    %v665 = vpop.permute.xlu0 %664
    %v667 = vmul.f32 %v646, %v665
    %v668 = vrot.slane %v461, 6
    %669 = vrot.lane.b32.xlu0 %v668, 64
    %v670 = vpop.permute.xlu0 %669
    %v672 = vsel %vm242, %v667, %v670
    %v674 = vrot.slane %v672, 2
    %676 = vmatprep.subr.mxu0 %v121
    %677 = vmatpush1.msra.mxu0 %v120
    %678 = vmatprep.subr.mxu0 %v119
    %679 = vmatpush1.msra.mxu0 %v118
    %680 = vmatprep.subr.mxu0 %v117
    %681 = vmatpush1.msra.mxu0 %v116
    %682 = vmatprep.subr.mxu0 %v115
    %683 = vmatpush1.msra.mxu0 %v114
    %684 = vmatprep.subr.mxu0 %v113
    %685 = vmatpush1.msra.mxu0 %v112
    %686 = vmatprep.subr.mxu0 %v111
    %687 = vmatpush1.msra.mxu0 %v110
    %688 = vmatprep.subr.mxu0 %v109
    %689 = vmatpush1.msra.mxu0 %v108
    %690 = vmatprep.subr.mxu0 %v107
    %691 = vmatpush1.msra.mxu0 %v106
    %692 = vmatprep.subr.mxu0 %v105
    %693 = vmatpush1.msra.mxu0 %v104
    %694 = vmatprep.subr.mxu0 %v103
    %695 = vmatpush1.msra.mxu0 %v102
    %696 = vmatprep.subr.mxu0 %v101
    %697 = vmatpush1.msra.mxu0 %v100
    %698 = vmatprep.subr.mxu0 %v99
    %699 = vmatpush1.msra.mxu0 %v98
    %700 = vmatprep.subr.mxu0 %v97
    %701 = vmatpush1.msra.mxu0 %v96
    %702 = vmatprep.subr.mxu0 %v95
    %703 = vmatpush1.msra.mxu0 %v94
    %704 = vmatprep.subr.mxu0 %v93
    %705 = vmatpush1.msra.mxu0 %v92
    %706 = vmatprep.subr.mxu0 %v91
    %707 = vmatpush1.msra.mxu0 %v90
    %708 = vmatprep.subr.mxu0 0.0
    %709 = vmatpush2.msra.mxu0 0.0
    %710 = vmatprep.subr.mxu0 0.0
    %711 = vmatpush2.msra.mxu0 0.0
    %712 = vmatprep.subr.mxu0 0.0
    %713 = vmatpush2.msra.mxu0 0.0
    %714 = vmatprep.subr.mxu0 0.0
    %715 = vmatpush2.msra.mxu0 0.0
    %716 = vmatprep.subr.mxu0 0.0
    %717 = vmatpush2.msra.mxu0 0.0
    %718 = vmatprep.subr.mxu0 0.0
    %719 = vmatpush2.msra.mxu0 0.0
    %720 = vmatprep.subr.mxu0 0.0
    %721 = vmatpush2.msra.mxu0 0.0
    %722 = vmatprep.subr.mxu0 0.0
    %723 = vmatpush2.msra.mxu0 0.0
    %724 = vmatprep.subr.mxu0 0.0
    %725 = vmatpush2.msra.mxu0 0.0
    %726 = vmatprep.subr.mxu0 0.0
    %727 = vmatpush2.msra.mxu0 0.0
    %728 = vmatprep.subr.mxu0 0.0
    %729 = vmatpush2.msra.mxu0 0.0
    %730 = vmatprep.subr.mxu0 0.0
    %731 = vmatpush2.msra.mxu0 0.0
    %732 = vmatprep.subr.mxu0 0.0
    %733 = vmatpush2.msra.mxu0 0.0
    %734 = vmatprep.subr.mxu0 0.0
    %735 = vmatpush2.msra.mxu0 0.0
    %736 = vmatprep.subr.mxu0 0.0
    %737 = vmatpush2.msra.mxu0 0.0
    %738 = vmatprep.subr.mxu0 0.0
    %739 = vmatpush2.msra.mxu0 0.0
    %740 = vmatprep.mubr.f32.mxu0 0.0
    %741 = vmatmul.mubr.f32.gmra.mxu0 %v674
    %v742 = vpop.f32.mrf.mxu0
    %v743 = vadd.f32 %v354, %v742
    %v744 = vpop.f32.mrf.mxu0
    %v745 = vadd.f32 %v358, %v744
    %746 = vdwg.mxu0
    %v747 = vxor.u32 %v743, 2147483648
    %v748 = vxor.u32 %v745, 2147483648
    %v749 = vmul.f32 %v747, 1.442695
    %v750 = vpow.pop %v749
    %v751 = vmul.f32 %v748, 1.442695
    %v752 = vpow.pop %v751
    %v753 = vadd.f32 %v750, 1.0
    %v754 = vadd.f32 %v752, 1.0
    %v755 = vrcp.pop %v753
    %v756 = vmul.f32 1.0, %v755
    %v757 = vrcp.pop %v754
    %v758 = vmul.f32 1.0, %v757
    %v759 = vtanh.pop %v745
    %v760 = vmul.f32 %v756, %v455
    %762 = vrot.lane.b32.xlu0 %v759, 64
    %v763 = vpop.permute.xlu0 %762
    %v765 = vmul.f32 %v756, %v763
    %767 = vrot.lane.b32.xlu0 %v765, 64
    %v768 = vpop.permute.xlu0 %767
    %v770 = vadd.f32 %v760, %v768
    %v771 = vtanh.pop %v770
    %773 = vrot.lane.b32.xlu0 %v771, 64
    %v774 = vpop.permute.xlu0 %773
    %v776 = vmul.f32 %v758, %v774
    %v778 = vsel %vm242, %v776, 0
    %780 = vmatprep.subr.mxu0 0.0
    %781 = vmatpush1.msra.mxu0 0.0
    %782 = vmatprep.subr.mxu0 0.0
    %783 = vmatpush1.msra.mxu0 0.0
    %784 = vmatprep.subr.mxu0 0.0
    %785 = vmatpush1.msra.mxu0 0.0
    %786 = vmatprep.subr.mxu0 0.0
    %787 = vmatpush1.msra.mxu0 0.0
    %788 = vmatprep.subr.mxu0 0.0
    %789 = vmatpush1.msra.mxu0 0.0
    %790 = vmatprep.subr.mxu0 0.0
    %791 = vmatpush1.msra.mxu0 0.0
    %792 = vmatprep.subr.mxu0 0.0
    %793 = vmatpush1.msra.mxu0 0.0
    %794 = vmatprep.subr.mxu0 0.0
    %795 = vmatpush1.msra.mxu0 0.0
    %796 = vmatprep.subr.mxu0 0.0
    %797 = vmatpush1.msra.mxu0 %v130
    %798 = vmatprep.subr.mxu0 0.0
    %799 = vmatpush1.msra.mxu0 %v129
    %800 = vmatprep.subr.mxu0 0.0
    %801 = vmatpush1.msra.mxu0 %v128
    %802 = vmatprep.subr.mxu0 0.0
    %803 = vmatpush1.msra.mxu0 %v127
    %804 = vmatprep.subr.mxu0 0.0
    %805 = vmatpush1.msra.mxu0 %v126
    %806 = vmatprep.subr.mxu0 0.0
    %807 = vmatpush1.msra.mxu0 %v125
    %808 = vmatprep.subr.mxu0 0.0
    %809 = vmatpush1.msra.mxu0 %v124
    %810 = vmatprep.subr.mxu0 0.0
    %811 = vmatpush1.msra.mxu0 %v123
    %812 = vmatprep.subr.mxu0 0.0
    %813 = vmatpush2.msra.mxu0 0.0
    %814 = vmatprep.subr.mxu0 0.0
    %815 = vmatpush2.msra.mxu0 0.0
    %816 = vmatprep.subr.mxu0 0.0
    %817 = vmatpush2.msra.mxu0 0.0
    %818 = vmatprep.subr.mxu0 0.0
    %819 = vmatpush2.msra.mxu0 0.0
    %820 = vmatprep.subr.mxu0 0.0
    %821 = vmatpush2.msra.mxu0 0.0
    %822 = vmatprep.subr.mxu0 0.0
    %823 = vmatpush2.msra.mxu0 0.0
    %824 = vmatprep.subr.mxu0 0.0
    %825 = vmatpush2.msra.mxu0 0.0
    %826 = vmatprep.subr.mxu0 0.0
    %827 = vmatpush2.msra.mxu0 0.0
    %828 = vmatprep.subr.mxu0 0.0
    %829 = vmatpush2.msra.mxu0 0.0
    %830 = vmatprep.subr.mxu0 0.0
    %831 = vmatpush2.msra.mxu0 0.0
    %832 = vmatprep.subr.mxu0 0.0
    %833 = vmatpush2.msra.mxu0 0.0
    %834 = vmatprep.subr.mxu0 0.0
    %835 = vmatpush2.msra.mxu0 0.0
    %836 = vmatprep.subr.mxu0 0.0
    %837 = vmatpush2.msra.mxu0 0.0
    %838 = vmatprep.subr.mxu0 0.0
    %839 = vmatpush2.msra.mxu0 0.0
    %840 = vmatprep.subr.mxu0 0.0
    %841 = vmatpush2.msra.mxu0 0.0
    %842 = vmatprep.subr.mxu0 0.0
    %843 = vmatpush2.msra.mxu0 0.0
    %844 = vmatprep.mubr.f32.mxu0 0.0
    %845 = vmatmul.mubr.f32.gmra.mxu0 %v778
    %v846 = vpop.f32.mrf.mxu0
    %v847 = vadd.f32 %v466, %v846
    %v848 = vpop.f32.mrf.mxu0
    %849 = vdwg.mxu0
    %v850 = vtanh.pop %v847
    %v851 = vmul.f32 %v850, %v546
    %v852 = vsel %vm549, %v851, 0.0
    %853 = vadd.xlane.f32.xlu0 %v852
    %v854 = vpop.xlane.xlu0 %853
    %v856 = vrot.slane %v667, 2
    %v857 = vsel %vm242, %v856, 0
    %859 = vmatprep.subr.mxu0 0.0
    %860 = vmatpush1.msra.mxu0 0.0
    %861 = vmatprep.subr.mxu0 0.0
    %862 = vmatpush1.msra.mxu0 0.0
    %863 = vmatprep.subr.mxu0 0.0
    %864 = vmatpush1.msra.mxu0 0.0
    %865 = vmatprep.subr.mxu0 0.0
    %866 = vmatpush1.msra.mxu0 0.0
    %867 = vmatprep.subr.mxu0 0.0
    %868 = vmatpush1.msra.mxu0 0.0
    %869 = vmatprep.subr.mxu0 0.0
    %870 = vmatpush1.msra.mxu0 0.0
    %871 = vmatprep.subr.mxu0 0.0
    %872 = vmatpush1.msra.mxu0 0.0
    %873 = vmatprep.subr.mxu0 0.0
    %874 = vmatpush1.msra.mxu0 0.0
    %875 = vmatprep.subr.mxu0 %v89
    %876 = vmatpush1.msra.mxu0 %v88
    %877 = vmatprep.subr.mxu0 %v87
    %878 = vmatpush1.msra.mxu0 %v86
    %879 = vmatprep.subr.mxu0 %v85
    %880 = vmatpush1.msra.mxu0 %v84
    %881 = vmatprep.subr.mxu0 %v83
    %882 = vmatpush1.msra.mxu0 %v82
    %883 = vmatprep.subr.mxu0 %v81
    %884 = vmatpush1.msra.mxu0 %v80
    %885 = vmatprep.subr.mxu0 %v79
    %886 = vmatpush1.msra.mxu0 %v78
    %887 = vmatprep.subr.mxu0 %v77
    %888 = vmatpush1.msra.mxu0 %v76
    %889 = vmatprep.subr.mxu0 %v75
    %890 = vmatpush1.msra.mxu0 %v74
    %891 = vmatprep.subr.mxu0 0.0
    %892 = vmatpush2.msra.mxu0 0.0
    %893 = vmatprep.subr.mxu0 0.0
    %894 = vmatpush2.msra.mxu0 0.0
    %895 = vmatprep.subr.mxu0 0.0
    %896 = vmatpush2.msra.mxu0 0.0
    %897 = vmatprep.subr.mxu0 0.0
    %898 = vmatpush2.msra.mxu0 0.0
    %899 = vmatprep.subr.mxu0 0.0
    %900 = vmatpush2.msra.mxu0 0.0
    %901 = vmatprep.subr.mxu0 0.0
    %902 = vmatpush2.msra.mxu0 0.0
    %903 = vmatprep.subr.mxu0 0.0
    %904 = vmatpush2.msra.mxu0 0.0
    %905 = vmatprep.subr.mxu0 0.0
    %906 = vmatpush2.msra.mxu0 0.0
    %907 = vmatprep.subr.mxu0 0.0
    %908 = vmatpush2.msra.mxu0 0.0
    %909 = vmatprep.subr.mxu0 0.0
    %910 = vmatpush2.msra.mxu0 0.0
    %911 = vmatprep.subr.mxu0 0.0
    %912 = vmatpush2.msra.mxu0 0.0
    %913 = vmatprep.subr.mxu0 0.0
    %914 = vmatpush2.msra.mxu0 0.0
    %915 = vmatprep.subr.mxu0 0.0
    %916 = vmatpush2.msra.mxu0 0.0
    %917 = vmatprep.subr.mxu0 0.0
    %918 = vmatpush2.msra.mxu0 0.0
    %919 = vmatprep.subr.mxu0 0.0
    %920 = vmatpush2.msra.mxu0 0.0
    %921 = vmatprep.subr.mxu0 0.0
    %922 = vmatpush2.msra.mxu0 0.0
    %923 = vmatprep.mubr.f32.mxu0 0.0
    %924 = vmatmul.mubr.f32.gmra.mxu0 %v857
    %v925 = vpop.f32.mrf.mxu0
    %v926 = vadd.f32 0.0, %v925
    %v927 = vpop.f32.mrf.mxu0
    %v928 = vadd.f32 0.0, %v927
    %929 = vdwg.mxu0
    %v932 = vrot.slane %v926, 4
    %v933 = vrot.slane %v928, 4
    %v936 = vadd.f32 %v232, %v932
    %v937 = vadd.f32 %v234, %v933
    %v938 = vxor.u32 %v936, 2147483648
    %v939 = vxor.u32 %v937, 2147483648
    %v940 = vmul.f32 %v938, 1.442695
    %v941 = vpow.pop %v940
    %v942 = vmul.f32 %v939, 1.442695
    %v943 = vpow.pop %v942
    %v944 = vadd.f32 %v941, 1.0
    %v945 = vadd.f32 %v943, 1.0
    %v946 = vrcp.pop %v944
    %v947 = vmul.f32 1.0, %v946
    %v948 = vrcp.pop %v945
    %v949 = vmul.f32 1.0, %v948
    %v950 = vtanh.pop %v937
    %v952 = vrot.slane %v661, 6
    %v954 = vmul.f32 %v947, %v952
    %956 = vrot.lane.b32.xlu0 %v950, 64
    %v957 = vpop.permute.xlu0 %956
    %v959 = vmul.f32 %v947, %v957
    %961 = vrot.lane.b32.xlu0 %v959, 64
    %v962 = vpop.permute.xlu0 %961
    %v964 = vadd.f32 %v954, %v962
    %v965 = vtanh.pop %v964
    %967 = vrot.lane.b32.xlu0 %v965, 64
    %v968 = vpop.permute.xlu0 %967
    %v970 = vmul.f32 %v949, %v968
    %v971 = vrot.slane %v776, 4
    %972 = vrot.lane.b32.xlu0 %v971, 64
    %v973 = vpop.permute.xlu0 %972
    %v975 = vsel %vm242, %v970, %v973
    %v977 = vrot.slane %v975, 4
    %979 = vmatprep.subr.mxu0 %v121
    %980 = vmatpush1.msra.mxu0 %v120
    %981 = vmatprep.subr.mxu0 %v119
    %982 = vmatpush1.msra.mxu0 %v118
    %983 = vmatprep.subr.mxu0 %v117
    %984 = vmatpush1.msra.mxu0 %v116
    %985 = vmatprep.subr.mxu0 %v115
    %986 = vmatpush1.msra.mxu0 %v114
    %987 = vmatprep.subr.mxu0 %v113
    %988 = vmatpush1.msra.mxu0 %v112
    %989 = vmatprep.subr.mxu0 %v111
    %990 = vmatpush1.msra.mxu0 %v110
    %991 = vmatprep.subr.mxu0 %v109
    %992 = vmatpush1.msra.mxu0 %v108
    %993 = vmatprep.subr.mxu0 %v107
    %994 = vmatpush1.msra.mxu0 %v106
    %995 = vmatprep.subr.mxu0 %v105
    %996 = vmatpush1.msra.mxu0 %v104
    %997 = vmatprep.subr.mxu0 %v103
    %998 = vmatpush1.msra.mxu0 %v102
    %999 = vmatprep.subr.mxu0 %v101
    %1000 = vmatpush1.msra.mxu0 %v100
    %1001 = vmatprep.subr.mxu0 %v99
    %1002 = vmatpush1.msra.mxu0 %v98
    %1003 = vmatprep.subr.mxu0 %v97
    %1004 = vmatpush1.msra.mxu0 %v96
    %1005 = vmatprep.subr.mxu0 %v95
    %1006 = vmatpush1.msra.mxu0 %v94
    %1007 = vmatprep.subr.mxu0 %v93
    %1008 = vmatpush1.msra.mxu0 %v92
    %1009 = vmatprep.subr.mxu0 %v91
    %1010 = vmatpush1.msra.mxu0 %v90
    %1011 = vmatprep.subr.mxu0 0.0
    %1012 = vmatpush2.msra.mxu0 0.0
    %1013 = vmatprep.subr.mxu0 0.0
    %1014 = vmatpush2.msra.mxu0 0.0
    %1015 = vmatprep.subr.mxu0 0.0
    %1016 = vmatpush2.msra.mxu0 0.0
    %1017 = vmatprep.subr.mxu0 0.0
    %1018 = vmatpush2.msra.mxu0 0.0
    %1019 = vmatprep.subr.mxu0 0.0
    %1020 = vmatpush2.msra.mxu0 0.0
    %1021 = vmatprep.subr.mxu0 0.0
    %1022 = vmatpush2.msra.mxu0 0.0
    %1023 = vmatprep.subr.mxu0 0.0
    %1024 = vmatpush2.msra.mxu0 0.0
    %1025 = vmatprep.subr.mxu0 0.0
    %1026 = vmatpush2.msra.mxu0 0.0
    %1027 = vmatprep.subr.mxu0 0.0
    %1028 = vmatpush2.msra.mxu0 0.0
    %1029 = vmatprep.subr.mxu0 0.0
    %1030 = vmatpush2.msra.mxu0 0.0
    %1031 = vmatprep.subr.mxu0 0.0
    %1032 = vmatpush2.msra.mxu0 0.0
    %1033 = vmatprep.subr.mxu0 0.0
    %1034 = vmatpush2.msra.mxu0 0.0
    %1035 = vmatprep.subr.mxu0 0.0
    %1036 = vmatpush2.msra.mxu0 0.0
    %1037 = vmatprep.subr.mxu0 0.0
    %1038 = vmatpush2.msra.mxu0 0.0
    %1039 = vmatprep.subr.mxu0 0.0
    %1040 = vmatpush2.msra.mxu0 0.0
    %1041 = vmatprep.subr.mxu0 0.0
    %1042 = vmatpush2.msra.mxu0 0.0
    %1043 = vmatprep.mubr.f32.mxu0 0.0
    %1044 = vmatmul.mubr.f32.gmra.mxu0 %v977
    %v1045 = vpop.f32.mrf.mxu0
    %v1046 = vadd.f32 %v354, %v1045
    %v1047 = vpop.f32.mrf.mxu0
    %v1048 = vadd.f32 %v358, %v1047
    %1049 = vdwg.mxu0
    %v1050 = vxor.u32 %v1046, 2147483648
    %v1051 = vxor.u32 %v1048, 2147483648
    %v1052 = vmul.f32 %v1050, 1.442695
    %v1053 = vpow.pop %v1052
    %v1054 = vmul.f32 %v1051, 1.442695
    %v1055 = vpow.pop %v1054
    %v1056 = vadd.f32 %v1053, 1.0
    %v1057 = vadd.f32 %v1055, 1.0
    %v1058 = vrcp.pop %v1056
    %v1059 = vmul.f32 1.0, %v1058
    %v1060 = vrcp.pop %v1057
    %v1061 = vmul.f32 1.0, %v1060
    %v1062 = vtanh.pop %v1048
    %v1063 = vmul.f32 %v1059, %v770
    %1065 = vrot.lane.b32.xlu0 %v1062, 64
    %v1066 = vpop.permute.xlu0 %1065
    %v1068 = vmul.f32 %v1059, %v1066
    %1070 = vrot.lane.b32.xlu0 %v1068, 64
    %v1071 = vpop.permute.xlu0 %1070
    %v1073 = vadd.f32 %v1063, %v1071
    %v1074 = vtanh.pop %v1073
    %1076 = vrot.lane.b32.xlu0 %v1074, 64
    %v1077 = vpop.permute.xlu0 %1076
    %v1079 = vmul.f32 %v1061, %v1077
    %v1081 = vsel %vm242, %v1079, 0
    %1083 = vmatprep.subr.mxu0 0.0
    %1084 = vmatpush1.msra.mxu0 0.0
    %1085 = vmatprep.subr.mxu0 0.0
    %1086 = vmatpush1.msra.mxu0 0.0
    %1087 = vmatprep.subr.mxu0 0.0
    %1088 = vmatpush1.msra.mxu0 0.0
    %1089 = vmatprep.subr.mxu0 0.0
    %1090 = vmatpush1.msra.mxu0 0.0
    %1091 = vmatprep.subr.mxu0 0.0
    %1092 = vmatpush1.msra.mxu0 0.0
    %1093 = vmatprep.subr.mxu0 0.0
    %1094 = vmatpush1.msra.mxu0 0.0
    %1095 = vmatprep.subr.mxu0 0.0
    %1096 = vmatpush1.msra.mxu0 0.0
    %1097 = vmatprep.subr.mxu0 0.0
    %1098 = vmatpush1.msra.mxu0 0.0
    %1099 = vmatprep.subr.mxu0 0.0
    %1100 = vmatpush1.msra.mxu0 %v130
    %1101 = vmatprep.subr.mxu0 0.0
    %1102 = vmatpush1.msra.mxu0 %v129
    %1103 = vmatprep.subr.mxu0 0.0
    %1104 = vmatpush1.msra.mxu0 %v128
    %1105 = vmatprep.subr.mxu0 0.0
    %1106 = vmatpush1.msra.mxu0 %v127
    %1107 = vmatprep.subr.mxu0 0.0
    %1108 = vmatpush1.msra.mxu0 %v126
    %1109 = vmatprep.subr.mxu0 0.0
    %1110 = vmatpush1.msra.mxu0 %v125
    %1111 = vmatprep.subr.mxu0 0.0
    %1112 = vmatpush1.msra.mxu0 %v124
    %1113 = vmatprep.subr.mxu0 0.0
    %1114 = vmatpush1.msra.mxu0 %v123
    %1115 = vmatprep.subr.mxu0 0.0
    %1116 = vmatpush2.msra.mxu0 0.0
    %1117 = vmatprep.subr.mxu0 0.0
    %1118 = vmatpush2.msra.mxu0 0.0
    %1119 = vmatprep.subr.mxu0 0.0
    %1120 = vmatpush2.msra.mxu0 0.0
    %1121 = vmatprep.subr.mxu0 0.0
    %1122 = vmatpush2.msra.mxu0 0.0
    %1123 = vmatprep.subr.mxu0 0.0
    %1124 = vmatpush2.msra.mxu0 0.0
    %1125 = vmatprep.subr.mxu0 0.0
    %1126 = vmatpush2.msra.mxu0 0.0
    %1127 = vmatprep.subr.mxu0 0.0
    %1128 = vmatpush2.msra.mxu0 0.0
    %1129 = vmatprep.subr.mxu0 0.0
    %1130 = vmatpush2.msra.mxu0 0.0
    %1131 = vmatprep.subr.mxu0 0.0
    %1132 = vmatpush2.msra.mxu0 0.0
    %1133 = vmatprep.subr.mxu0 0.0
    %1134 = vmatpush2.msra.mxu0 0.0
    %1135 = vmatprep.subr.mxu0 0.0
    %1136 = vmatpush2.msra.mxu0 0.0
    %1137 = vmatprep.subr.mxu0 0.0
    %1138 = vmatpush2.msra.mxu0 0.0
    %1139 = vmatprep.subr.mxu0 0.0
    %1140 = vmatpush2.msra.mxu0 0.0
    %1141 = vmatprep.subr.mxu0 0.0
    %1142 = vmatpush2.msra.mxu0 0.0
    %1143 = vmatprep.subr.mxu0 0.0
    %1144 = vmatpush2.msra.mxu0 0.0
    %1145 = vmatprep.subr.mxu0 0.0
    %1146 = vmatpush2.msra.mxu0 0.0
    %1147 = vmatprep.mubr.f32.mxu0 0.0
    %1148 = vmatmul.mubr.f32.gmra.mxu0 %v1081
    %v1149 = vpop.f32.mrf.mxu0
    %v1150 = vadd.f32 %v466, %v1149
    %v1151 = vpop.f32.mrf.mxu0
    %1152 = vdwg.mxu0
    %v1153 = vtanh.pop %v1150
    %v1154 = vmul.f32 %v1153, %v546
    %v1155 = vsel %vm549, %v1154, 0.0
    %1156 = vadd.xlane.f32.xlu0 %v1155
    %v1157 = vpop.xlane.xlu0 %1156
    %v1159 = vrot.slane %v970, 4
    %v1160 = vsel %vm242, %v1159, 0
    %1162 = vmatprep.subr.mxu0 0.0
    %1163 = vmatpush1.msra.mxu0 0.0
    %1164 = vmatprep.subr.mxu0 0.0
    %1165 = vmatpush1.msra.mxu0 0.0
    %1166 = vmatprep.subr.mxu0 0.0
    %1167 = vmatpush1.msra.mxu0 0.0
    %1168 = vmatprep.subr.mxu0 0.0
    %1169 = vmatpush1.msra.mxu0 0.0
    %1170 = vmatprep.subr.mxu0 0.0
    %1171 = vmatpush1.msra.mxu0 0.0
    %1172 = vmatprep.subr.mxu0 0.0
    %1173 = vmatpush1.msra.mxu0 0.0
    %1174 = vmatprep.subr.mxu0 0.0
    %1175 = vmatpush1.msra.mxu0 0.0
    %1176 = vmatprep.subr.mxu0 0.0
    %1177 = vmatpush1.msra.mxu0 0.0
    %1178 = vmatprep.subr.mxu0 %v89
    %1179 = vmatpush1.msra.mxu0 %v88
    %1180 = vmatprep.subr.mxu0 %v87
    %1181 = vmatpush1.msra.mxu0 %v86
    %1182 = vmatprep.subr.mxu0 %v85
    %1183 = vmatpush1.msra.mxu0 %v84
    %1184 = vmatprep.subr.mxu0 %v83
    %1185 = vmatpush1.msra.mxu0 %v82
    %1186 = vmatprep.subr.mxu0 %v81
    %1187 = vmatpush1.msra.mxu0 %v80
    %1188 = vmatprep.subr.mxu0 %v79
    %1189 = vmatpush1.msra.mxu0 %v78
    %1190 = vmatprep.subr.mxu0 %v77
    %1191 = vmatpush1.msra.mxu0 %v76
    %1192 = vmatprep.subr.mxu0 %v75
    %1193 = vmatpush1.msra.mxu0 %v74
    %1194 = vmatprep.subr.mxu0 0.0
    %1195 = vmatpush2.msra.mxu0 0.0
    %1196 = vmatprep.subr.mxu0 0.0
    %1197 = vmatpush2.msra.mxu0 0.0
    %1198 = vmatprep.subr.mxu0 0.0
    %1199 = vmatpush2.msra.mxu0 0.0
    %1200 = vmatprep.subr.mxu0 0.0
    %1201 = vmatpush2.msra.mxu0 0.0
    %1202 = vmatprep.subr.mxu0 0.0
    %1203 = vmatpush2.msra.mxu0 0.0
    %1204 = vmatprep.subr.mxu0 0.0
    %1205 = vmatpush2.msra.mxu0 0.0
    %1206 = vmatprep.subr.mxu0 0.0
    %1207 = vmatpush2.msra.mxu0 0.0
    %1208 = vmatprep.subr.mxu0 0.0
    %1209 = vmatpush2.msra.mxu0 0.0
    %1210 = vmatprep.subr.mxu0 0.0
    %1211 = vmatpush2.msra.mxu0 0.0
    %1212 = vmatprep.subr.mxu0 0.0
    %1213 = vmatpush2.msra.mxu0 0.0
    %1214 = vmatprep.subr.mxu0 0.0
    %1215 = vmatpush2.msra.mxu0 0.0
    %1216 = vmatprep.subr.mxu0 0.0
    %1217 = vmatpush2.msra.mxu0 0.0
    %1218 = vmatprep.subr.mxu0 0.0
    %1219 = vmatpush2.msra.mxu0 0.0
    %1220 = vmatprep.subr.mxu0 0.0
    %1221 = vmatpush2.msra.mxu0 0.0
    %1222 = vmatprep.subr.mxu0 0.0
    %1223 = vmatpush2.msra.mxu0 0.0
    %1224 = vmatprep.subr.mxu0 0.0
    %1225 = vmatpush2.msra.mxu0 0.0
    %1226 = vmatprep.mubr.f32.mxu0 0.0
    %1227 = vmatmul.mubr.f32.gmra.mxu0 %v1160
    %v1228 = vpop.f32.mrf.mxu0
    %v1229 = vadd.f32 0.0, %v1228
    %v1230 = vpop.f32.mrf.mxu0
    %v1231 = vadd.f32 0.0, %v1230
    %1232 = vdwg.mxu0
    %v1235 = vrot.slane %v1229, 2
    %v1236 = vrot.slane %v1231, 2
    %v1239 = vadd.f32 %v232, %v1235
    %v1240 = vadd.f32 %v234, %v1236
    %v1241 = vxor.u32 %v1239, 2147483648
    %v1242 = vxor.u32 %v1240, 2147483648
    %v1243 = vmul.f32 %v1241, 1.442695
    %v1244 = vpow.pop %v1243
    %v1245 = vmul.f32 %v1242, 1.442695
    %v1246 = vpow.pop %v1245
    %v1247 = vadd.f32 %v1244, 1.0
    %v1248 = vadd.f32 %v1246, 1.0
    %v1249 = vrcp.pop %v1247
    %v1250 = vmul.f32 1.0, %v1249
    %v1251 = vrcp.pop %v1248
    %v1252 = vmul.f32 1.0, %v1251
    %v1253 = vtanh.pop %v1240
    %v1255 = vrot.slane %v964, 6
    %v1257 = vmul.f32 %v1250, %v1255
    %1259 = vrot.lane.b32.xlu0 %v1253, 64
    %v1260 = vpop.permute.xlu0 %1259
    %v1262 = vmul.f32 %v1250, %v1260
    %1264 = vrot.lane.b32.xlu0 %v1262, 64
    %v1265 = vpop.permute.xlu0 %1264
    %v1267 = vadd.f32 %v1257, %v1265
    %v1268 = vtanh.pop %v1267
    %1270 = vrot.lane.b32.xlu0 %v1268, 64
    %v1271 = vpop.permute.xlu0 %1270
    %v1273 = vmul.f32 %v1252, %v1271
    %v1274 = vrot.slane %v1079, 2
    %1275 = vrot.lane.b32.xlu0 %v1274, 64
    %v1276 = vpop.permute.xlu0 %1275
    %v1278 = vsel %vm242, %v1273, %v1276
    %v1280 = vrot.slane %v1278, 6
    %1282 = vmatprep.subr.mxu0 %v121
    %1283 = vmatpush1.msra.mxu0 %v120
    %1284 = vmatprep.subr.mxu0 %v119
    %1285 = vmatpush1.msra.mxu0 %v118
    %1286 = vmatprep.subr.mxu0 %v117
    %1287 = vmatpush1.msra.mxu0 %v116
    %1288 = vmatprep.subr.mxu0 %v115
    %1289 = vmatpush1.msra.mxu0 %v114
    %1290 = vmatprep.subr.mxu0 %v113
    %1291 = vmatpush1.msra.mxu0 %v112
    %1292 = vmatprep.subr.mxu0 %v111
    %1293 = vmatpush1.msra.mxu0 %v110
    %1294 = vmatprep.subr.mxu0 %v109
    %1295 = vmatpush1.msra.mxu0 %v108
    %1296 = vmatprep.subr.mxu0 %v107
    %1297 = vmatpush1.msra.mxu0 %v106
    %1298 = vmatprep.subr.mxu0 %v105
    %1299 = vmatpush1.msra.mxu0 %v104
    %1300 = vmatprep.subr.mxu0 %v103
    %1301 = vmatpush1.msra.mxu0 %v102
    %1302 = vmatprep.subr.mxu0 %v101
    %1303 = vmatpush1.msra.mxu0 %v100
    %1304 = vmatprep.subr.mxu0 %v99
    %1305 = vmatpush1.msra.mxu0 %v98
    %1306 = vmatprep.subr.mxu0 %v97
    %1307 = vmatpush1.msra.mxu0 %v96
    %1308 = vmatprep.subr.mxu0 %v95
    %1309 = vmatpush1.msra.mxu0 %v94
    %1310 = vmatprep.subr.mxu0 %v93
    %1311 = vmatpush1.msra.mxu0 %v92
    %1312 = vmatprep.subr.mxu0 %v91
    %1313 = vmatpush1.msra.mxu0 %v90
    %1314 = vmatprep.subr.mxu0 0.0
    %1315 = vmatpush2.msra.mxu0 0.0
    %1316 = vmatprep.subr.mxu0 0.0
    %1317 = vmatpush2.msra.mxu0 0.0
    %1318 = vmatprep.subr.mxu0 0.0
    %1319 = vmatpush2.msra.mxu0 0.0
    %1320 = vmatprep.subr.mxu0 0.0
    %1321 = vmatpush2.msra.mxu0 0.0
    %1322 = vmatprep.subr.mxu0 0.0
    %1323 = vmatpush2.msra.mxu0 0.0
    %1324 = vmatprep.subr.mxu0 0.0
    %1325 = vmatpush2.msra.mxu0 0.0
    %1326 = vmatprep.subr.mxu0 0.0
    %1327 = vmatpush2.msra.mxu0 0.0
    %1328 = vmatprep.subr.mxu0 0.0
    %1329 = vmatpush2.msra.mxu0 0.0
    %1330 = vmatprep.subr.mxu0 0.0
    %1331 = vmatpush2.msra.mxu0 0.0
    %1332 = vmatprep.subr.mxu0 0.0
    %1333 = vmatpush2.msra.mxu0 0.0
    %1334 = vmatprep.subr.mxu0 0.0
    %1335 = vmatpush2.msra.mxu0 0.0
    %1336 = vmatprep.subr.mxu0 0.0
    %1337 = vmatpush2.msra.mxu0 0.0
    %1338 = vmatprep.subr.mxu0 0.0
    %1339 = vmatpush2.msra.mxu0 0.0
    %1340 = vmatprep.subr.mxu0 0.0
    %1341 = vmatpush2.msra.mxu0 0.0
    %1342 = vmatprep.subr.mxu0 0.0
    %1343 = vmatpush2.msra.mxu0 0.0
    %1344 = vmatprep.subr.mxu0 0.0
    %1345 = vmatpush2.msra.mxu0 0.0
    %1346 = vmatprep.mubr.f32.mxu0 0.0
    %1347 = vmatmul.mubr.f32.gmra.mxu0 %v1280
    %v1348 = vpop.f32.mrf.mxu0
    %v1349 = vadd.f32 %v354, %v1348
    %v1350 = vpop.f32.mrf.mxu0
    %v1351 = vadd.f32 %v358, %v1350
    %1352 = vdwg.mxu0
    %v1353 = vxor.u32 %v1349, 2147483648
    %v1354 = vxor.u32 %v1351, 2147483648
    %v1355 = vmul.f32 %v1353, 1.442695
    %v1356 = vpow.pop %v1355
    %v1357 = vmul.f32 %v1354, 1.442695
    %v1358 = vpow.pop %v1357
    %v1359 = vadd.f32 %v1356, 1.0
    %v1360 = vadd.f32 %v1358, 1.0
    %v1361 = vrcp.pop %v1359
    %v1362 = vmul.f32 1.0, %v1361
    %v1363 = vrcp.pop %v1360
    %v1364 = vmul.f32 1.0, %v1363
    %v1365 = vtanh.pop %v1351
    %v1366 = vmul.f32 %v1362, %v1073
    %1368 = vrot.lane.b32.xlu0 %v1365, 64
    %v1369 = vpop.permute.xlu0 %1368
    %v1371 = vmul.f32 %v1362, %v1369
    %1373 = vrot.lane.b32.xlu0 %v1371, 64
    %v1374 = vpop.permute.xlu0 %1373
    %v1376 = vadd.f32 %v1366, %v1374
    %v1377 = vtanh.pop %v1376
    %1379 = vrot.lane.b32.xlu0 %v1377, 64
    %v1380 = vpop.permute.xlu0 %1379
    %v1382 = vmul.f32 %v1364, %v1380
    %v1384 = vsel %vm242, %v1382, 0
    %1386 = vmatprep.subr.mxu0 0.0
    %1387 = vmatpush1.msra.mxu0 0.0
    %1388 = vmatprep.subr.mxu0 0.0
    %1389 = vmatpush1.msra.mxu0 0.0
    %1390 = vmatprep.subr.mxu0 0.0
    %1391 = vmatpush1.msra.mxu0 0.0
    %1392 = vmatprep.subr.mxu0 0.0
    %1393 = vmatpush1.msra.mxu0 0.0
    %1394 = vmatprep.subr.mxu0 0.0
    %1395 = vmatpush1.msra.mxu0 0.0
    %1396 = vmatprep.subr.mxu0 0.0
    %1397 = vmatpush1.msra.mxu0 0.0
    %1398 = vmatprep.subr.mxu0 0.0
    %1399 = vmatpush1.msra.mxu0 0.0
    %1400 = vmatprep.subr.mxu0 0.0
    %1401 = vmatpush1.msra.mxu0 0.0
    %1402 = vmatprep.subr.mxu0 0.0
    %1403 = vmatpush1.msra.mxu0 %v130
    %1404 = vmatprep.subr.mxu0 0.0
    %1405 = vmatpush1.msra.mxu0 %v129
    %1406 = vmatprep.subr.mxu0 0.0
    %1407 = vmatpush1.msra.mxu0 %v128
    %1408 = vmatprep.subr.mxu0 0.0
    %1409 = vmatpush1.msra.mxu0 %v127
    %1410 = vmatprep.subr.mxu0 0.0
    %1411 = vmatpush1.msra.mxu0 %v126
    %1412 = vmatprep.subr.mxu0 0.0
    %1413 = vmatpush1.msra.mxu0 %v125
    %1414 = vmatprep.subr.mxu0 0.0
    %1415 = vmatpush1.msra.mxu0 %v124
    %1416 = vmatprep.subr.mxu0 0.0
    %1417 = vmatpush1.msra.mxu0 %v123
    %1418 = vmatprep.subr.mxu0 0.0
    %1419 = vmatpush2.msra.mxu0 0.0
    %1420 = vmatprep.subr.mxu0 0.0
    %1421 = vmatpush2.msra.mxu0 0.0
    %1422 = vmatprep.subr.mxu0 0.0
    %1423 = vmatpush2.msra.mxu0 0.0
    %1424 = vmatprep.subr.mxu0 0.0
    %1425 = vmatpush2.msra.mxu0 0.0
    %1426 = vmatprep.subr.mxu0 0.0
    %1427 = vmatpush2.msra.mxu0 0.0
    %1428 = vmatprep.subr.mxu0 0.0
    %1429 = vmatpush2.msra.mxu0 0.0
    %1430 = vmatprep.subr.mxu0 0.0
    %1431 = vmatpush2.msra.mxu0 0.0
    %1432 = vmatprep.subr.mxu0 0.0
    %1433 = vmatpush2.msra.mxu0 0.0
    %1434 = vmatprep.subr.mxu0 0.0
    %1435 = vmatpush2.msra.mxu0 0.0
    %1436 = vmatprep.subr.mxu0 0.0
    %1437 = vmatpush2.msra.mxu0 0.0
    %1438 = vmatprep.subr.mxu0 0.0
    %1439 = vmatpush2.msra.mxu0 0.0
    %1440 = vmatprep.subr.mxu0 0.0
    %1441 = vmatpush2.msra.mxu0 0.0
    %1442 = vmatprep.subr.mxu0 0.0
    %1443 = vmatpush2.msra.mxu0 0.0
    %1444 = vmatprep.subr.mxu0 0.0
    %1445 = vmatpush2.msra.mxu0 0.0
    %1446 = vmatprep.subr.mxu0 0.0
    %1447 = vmatpush2.msra.mxu0 0.0
    %1448 = vmatprep.subr.mxu0 0.0
    %1449 = vmatpush2.msra.mxu0 0.0
    %1450 = vmatprep.mubr.f32.mxu0 0.0
    %1451 = vmatmul.mubr.f32.gmra.mxu0 %v1384
    %v1452 = vpop.f32.mrf.mxu0
    %v1453 = vadd.f32 %v466, %v1452
    %v1454 = vpop.f32.mrf.mxu0
    %1455 = vdwg.mxu0
    %v1456 = vtanh.pop %v1453
    %v1457 = vmul.f32 %v1456, %v546
    %v1458 = vsel %vm549, %v1457, 0.0
    %1459 = vadd.xlane.f32.xlu0 %v1458
    %v1460 = vpop.xlane.xlu0 %1459
    %v1462 = vrot.slane %v1273, 6
    %v1463 = vsel %vm242, %v1462, 0
    %1465 = vmatprep.subr.mxu0 0.0
    %1466 = vmatpush1.msra.mxu0 0.0
    %1467 = vmatprep.subr.mxu0 0.0
    %1468 = vmatpush1.msra.mxu0 0.0
    %1469 = vmatprep.subr.mxu0 0.0
    %1470 = vmatpush1.msra.mxu0 0.0
    %1471 = vmatprep.subr.mxu0 0.0
    %1472 = vmatpush1.msra.mxu0 0.0
    %1473 = vmatprep.subr.mxu0 0.0
    %1474 = vmatpush1.msra.mxu0 0.0
    %1475 = vmatprep.subr.mxu0 0.0
    %1476 = vmatpush1.msra.mxu0 0.0
    %1477 = vmatprep.subr.mxu0 0.0
    %1478 = vmatpush1.msra.mxu0 0.0
    %1479 = vmatprep.subr.mxu0 0.0
    %1480 = vmatpush1.msra.mxu0 0.0
    %1481 = vmatprep.subr.mxu0 %v89
    %1482 = vmatpush1.msra.mxu0 %v88
    %1483 = vmatprep.subr.mxu0 %v87
    %1484 = vmatpush1.msra.mxu0 %v86
    %1485 = vmatprep.subr.mxu0 %v85
    %1486 = vmatpush1.msra.mxu0 %v84
    %1487 = vmatprep.subr.mxu0 %v83
    %1488 = vmatpush1.msra.mxu0 %v82
    %1489 = vmatprep.subr.mxu0 %v81
    %1490 = vmatpush1.msra.mxu0 %v80
    %1491 = vmatprep.subr.mxu0 %v79
    %1492 = vmatpush1.msra.mxu0 %v78
    %1493 = vmatprep.subr.mxu0 %v77
    %1494 = vmatpush1.msra.mxu0 %v76
    %1495 = vmatprep.subr.mxu0 %v75
    %1496 = vmatpush1.msra.mxu0 %v74
    %1497 = vmatprep.subr.mxu0 0.0
    %1498 = vmatpush2.msra.mxu0 0.0
    %1499 = vmatprep.subr.mxu0 0.0
    %1500 = vmatpush2.msra.mxu0 0.0
    %1501 = vmatprep.subr.mxu0 0.0
    %1502 = vmatpush2.msra.mxu0 0.0
    %1503 = vmatprep.subr.mxu0 0.0
    %1504 = vmatpush2.msra.mxu0 0.0
    %1505 = vmatprep.subr.mxu0 0.0
    %1506 = vmatpush2.msra.mxu0 0.0
    %1507 = vmatprep.subr.mxu0 0.0
    %1508 = vmatpush2.msra.mxu0 0.0
    %1509 = vmatprep.subr.mxu0 0.0
    %1510 = vmatpush2.msra.mxu0 0.0
    %1511 = vmatprep.subr.mxu0 0.0
    %1512 = vmatpush2.msra.mxu0 0.0
    %1513 = vmatprep.subr.mxu0 0.0
    %1514 = vmatpush2.msra.mxu0 0.0
    %1515 = vmatprep.subr.mxu0 0.0
    %1516 = vmatpush2.msra.mxu0 0.0
    %1517 = vmatprep.subr.mxu0 0.0
    %1518 = vmatpush2.msra.mxu0 0.0
    %1519 = vmatprep.subr.mxu0 0.0
    %1520 = vmatpush2.msra.mxu0 0.0
    %1521 = vmatprep.subr.mxu0 0.0
    %1522 = vmatpush2.msra.mxu0 0.0
    %1523 = vmatprep.subr.mxu0 0.0
    %1524 = vmatpush2.msra.mxu0 0.0
    %1525 = vmatprep.subr.mxu0 0.0
    %1526 = vmatpush2.msra.mxu0 0.0
    %1527 = vmatprep.subr.mxu0 0.0
    %1528 = vmatpush2.msra.mxu0 0.0
    %1529 = vmatprep.mubr.f32.mxu0 0.0
    %1530 = vmatmul.mubr.f32.gmra.mxu0 %v1463
    %v1531 = vpop.f32.mrf.mxu0
    %v1532 = vadd.f32 0.0, %v1531
    %v1533 = vpop.f32.mrf.mxu0
    %v1534 = vadd.f32 0.0, %v1533
    %1535 = vdwg.mxu0
    %v1536 = vadd.f32 %v238, %v1532
    %v1537 = vadd.f32 %v240, %v1534
    %v1538 = vxor.u32 %v1536, 2147483648
    %v1539 = vxor.u32 %v1537, 2147483648
    %v1540 = vmul.f32 %v1538, 1.442695
    %v1541 = vpow.pop %v1540
    %v1542 = vmul.f32 %v1539, 1.442695
    %v1543 = vpow.pop %v1542
    %v1544 = vadd.f32 %v1541, 1.0
    %v1545 = vadd.f32 %v1543, 1.0
    %v1546 = vrcp.pop %v1544
    %v1547 = vmul.f32 1.0, %v1546
    %v1548 = vrcp.pop %v1545
    %v1549 = vmul.f32 1.0, %v1548
    %v1550 = vtanh.pop %v1537
    %v1552 = vrot.slane %v1267, 6
    %v1554 = vmul.f32 %v1547, %v1552
    %1556 = vrot.lane.b32.xlu0 %v1550, 64
    %v1557 = vpop.permute.xlu0 %1556
    %v1559 = vmul.f32 %v1547, %v1557
    %1561 = vrot.lane.b32.xlu0 %v1559, 64
    %v1562 = vpop.permute.xlu0 %1561
    %v1564 = vadd.f32 %v1554, %v1562
    %v1565 = vtanh.pop %v1564
    %1567 = vrot.lane.b32.xlu0 %v1565, 64
    %v1568 = vpop.permute.xlu0 %1567
    %v1570 = vmul.f32 %v1549, %v1568
    %1571 = vrot.lane.b32.xlu0 %v1382, 64
    %v1572 = vpop.permute.xlu0 %1571
    %v1574 = vsel %vm242, %v1570, %v1572
    %1575 = vmatprep.subr.mxu0 %v121
    %1576 = vmatpush1.msra.mxu0 %v120
    %1577 = vmatprep.subr.mxu0 %v119
    %1578 = vmatpush1.msra.mxu0 %v118
    %1579 = vmatprep.subr.mxu0 %v117
    %1580 = vmatpush1.msra.mxu0 %v116
    %1581 = vmatprep.subr.mxu0 %v115
    %1582 = vmatpush1.msra.mxu0 %v114
    %1583 = vmatprep.subr.mxu0 %v113
    %1584 = vmatpush1.msra.mxu0 %v112
    %1585 = vmatprep.subr.mxu0 %v111
    %1586 = vmatpush1.msra.mxu0 %v110
    %1587 = vmatprep.subr.mxu0 %v109
    %1588 = vmatpush1.msra.mxu0 %v108
    %1589 = vmatprep.subr.mxu0 %v107
    %1590 = vmatpush1.msra.mxu0 %v106
    %1591 = vmatprep.subr.mxu0 %v105
    %1592 = vmatpush1.msra.mxu0 %v104
    %1593 = vmatprep.subr.mxu0 %v103
    %1594 = vmatpush1.msra.mxu0 %v102
    %1595 = vmatprep.subr.mxu0 %v101
    %1596 = vmatpush1.msra.mxu0 %v100
    %1597 = vmatprep.subr.mxu0 %v99
    %1598 = vmatpush1.msra.mxu0 %v98
    %1599 = vmatprep.subr.mxu0 %v97
    %1600 = vmatpush1.msra.mxu0 %v96
    %1601 = vmatprep.subr.mxu0 %v95
    %1602 = vmatpush1.msra.mxu0 %v94
    %1603 = vmatprep.subr.mxu0 %v93
    %1604 = vmatpush1.msra.mxu0 %v92
    %1605 = vmatprep.subr.mxu0 %v91
    %1606 = vmatpush1.msra.mxu0 %v90
    %1607 = vmatprep.subr.mxu0 0.0
    %1608 = vmatpush2.msra.mxu0 0.0
    %1609 = vmatprep.subr.mxu0 0.0
    %1610 = vmatpush2.msra.mxu0 0.0
    %1611 = vmatprep.subr.mxu0 0.0
    %1612 = vmatpush2.msra.mxu0 0.0
    %1613 = vmatprep.subr.mxu0 0.0
    %1614 = vmatpush2.msra.mxu0 0.0
    %1615 = vmatprep.subr.mxu0 0.0
    %1616 = vmatpush2.msra.mxu0 0.0
    %1617 = vmatprep.subr.mxu0 0.0
    %1618 = vmatpush2.msra.mxu0 0.0
    %1619 = vmatprep.subr.mxu0 0.0
    %1620 = vmatpush2.msra.mxu0 0.0
    %1621 = vmatprep.subr.mxu0 0.0
    %1622 = vmatpush2.msra.mxu0 0.0
    %1623 = vmatprep.subr.mxu0 0.0
    %1624 = vmatpush2.msra.mxu0 0.0
    %1625 = vmatprep.subr.mxu0 0.0
    %1626 = vmatpush2.msra.mxu0 0.0
    %1627 = vmatprep.subr.mxu0 0.0
    %1628 = vmatpush2.msra.mxu0 0.0
    %1629 = vmatprep.subr.mxu0 0.0
    %1630 = vmatpush2.msra.mxu0 0.0
    %1631 = vmatprep.subr.mxu0 0.0
    %1632 = vmatpush2.msra.mxu0 0.0
    %1633 = vmatprep.subr.mxu0 0.0
    %1634 = vmatpush2.msra.mxu0 0.0
    %1635 = vmatprep.subr.mxu0 0.0
    %1636 = vmatpush2.msra.mxu0 0.0
    %1637 = vmatprep.subr.mxu0 0.0
    %1638 = vmatpush2.msra.mxu0 0.0
    %1639 = vmatprep.mubr.f32.mxu0 0.0
    %1640 = vmatmul.mubr.f32.gmra.mxu0 %v1574
    %v1641 = vpop.f32.mrf.mxu0
    %v1642 = vadd.f32 %v354, %v1641
    %v1643 = vpop.f32.mrf.mxu0
    %v1644 = vadd.f32 %v358, %v1643
    %1645 = vdwg.mxu0
    %v1646 = vxor.u32 %v1642, 2147483648
    %v1647 = vxor.u32 %v1644, 2147483648
    %v1648 = vmul.f32 %v1646, 1.442695
    %v1649 = vpow.pop %v1648
    %v1650 = vmul.f32 %v1647, 1.442695
    %v1651 = vpow.pop %v1650
    %v1652 = vadd.f32 %v1649, 1.0
    %v1653 = vadd.f32 %v1651, 1.0
    %v1654 = vrcp.pop %v1652
    %v1655 = vmul.f32 1.0, %v1654
    %v1656 = vrcp.pop %v1653
    %v1657 = vmul.f32 1.0, %v1656
    %v1658 = vtanh.pop %v1644
    %v1659 = vmul.f32 %v1655, %v1376
    %1661 = vrot.lane.b32.xlu0 %v1658, 64
    %v1662 = vpop.permute.xlu0 %1661
    %v1664 = vmul.f32 %v1655, %v1662
    %1666 = vrot.lane.b32.xlu0 %v1664, 64
    %v1667 = vpop.permute.xlu0 %1666
    %v1669 = vadd.f32 %v1659, %v1667
    %v1670 = vtanh.pop %v1669
    %1672 = vrot.lane.b32.xlu0 %v1670, 64
    %v1673 = vpop.permute.xlu0 %1672
    %v1675 = vmul.f32 %v1657, %v1673
    %v1677 = vsel %vm242, %v1675, 0
    %1679 = vmatprep.subr.mxu0 0.0
    %1680 = vmatpush1.msra.mxu0 0.0
    %1681 = vmatprep.subr.mxu0 0.0
    %1682 = vmatpush1.msra.mxu0 0.0
    %1683 = vmatprep.subr.mxu0 0.0
    %1684 = vmatpush1.msra.mxu0 0.0
    %1685 = vmatprep.subr.mxu0 0.0
    %1686 = vmatpush1.msra.mxu0 0.0
    %1687 = vmatprep.subr.mxu0 0.0
    %1688 = vmatpush1.msra.mxu0 0.0
    %1689 = vmatprep.subr.mxu0 0.0
    %1690 = vmatpush1.msra.mxu0 0.0
    %1691 = vmatprep.subr.mxu0 0.0
    %1692 = vmatpush1.msra.mxu0 0.0
    %1693 = vmatprep.subr.mxu0 0.0
    %1694 = vmatpush1.msra.mxu0 0.0
    %1695 = vmatprep.subr.mxu0 0.0
    %1696 = vmatpush1.msra.mxu0 %v130
    %1697 = vmatprep.subr.mxu0 0.0
    %1698 = vmatpush1.msra.mxu0 %v129
    %1699 = vmatprep.subr.mxu0 0.0
    %1700 = vmatpush1.msra.mxu0 %v128
    %1701 = vmatprep.subr.mxu0 0.0
    %1702 = vmatpush1.msra.mxu0 %v127
    %1703 = vmatprep.subr.mxu0 0.0
    %1704 = vmatpush1.msra.mxu0 %v126
    %1705 = vmatprep.subr.mxu0 0.0
    %1706 = vmatpush1.msra.mxu0 %v125
    %1707 = vmatprep.subr.mxu0 0.0
    %1708 = vmatpush1.msra.mxu0 %v124
    %1709 = vmatprep.subr.mxu0 0.0
    %1710 = vmatpush1.msra.mxu0 %v123
    %1711 = vmatprep.subr.mxu0 0.0
    %1712 = vmatpush2.msra.mxu0 0.0
    %1713 = vmatprep.subr.mxu0 0.0
    %1714 = vmatpush2.msra.mxu0 0.0
    %1715 = vmatprep.subr.mxu0 0.0
    %1716 = vmatpush2.msra.mxu0 0.0
    %1717 = vmatprep.subr.mxu0 0.0
    %1718 = vmatpush2.msra.mxu0 0.0
    %1719 = vmatprep.subr.mxu0 0.0
    %1720 = vmatpush2.msra.mxu0 0.0
    %1721 = vmatprep.subr.mxu0 0.0
    %1722 = vmatpush2.msra.mxu0 0.0
    %1723 = vmatprep.subr.mxu0 0.0
    %1724 = vmatpush2.msra.mxu0 0.0
    %1725 = vmatprep.subr.mxu0 0.0
    %1726 = vmatpush2.msra.mxu0 0.0
    %1727 = vmatprep.subr.mxu0 0.0
    %1728 = vmatpush2.msra.mxu0 0.0
    %1729 = vmatprep.subr.mxu0 0.0
    %1730 = vmatpush2.msra.mxu0 0.0
    %1731 = vmatprep.subr.mxu0 0.0
    %1732 = vmatpush2.msra.mxu0 0.0
    %1733 = vmatprep.subr.mxu0 0.0
    %1734 = vmatpush2.msra.mxu0 0.0
    %1735 = vmatprep.subr.mxu0 0.0
    %1736 = vmatpush2.msra.mxu0 0.0
    %1737 = vmatprep.subr.mxu0 0.0
    %1738 = vmatpush2.msra.mxu0 0.0
    %1739 = vmatprep.subr.mxu0 0.0
    %1740 = vmatpush2.msra.mxu0 0.0
    %1741 = vmatprep.subr.mxu0 0.0
    %1742 = vmatpush2.msra.mxu0 0.0
    %1743 = vmatprep.mubr.f32.mxu0 0.0
    %1744 = vmatmul.mubr.f32.gmra.mxu0 %v1677
    %v1745 = vpop.f32.mrf.mxu0
    %v1746 = vadd.f32 %v466, %v1745
    %v1747 = vpop.f32.mrf.mxu0
    %1748 = vdwg.mxu0
    %v1749 = vtanh.pop %v1746
    %v1750 = vmul.f32 %v1749, %v546
    %v1751 = vsel %vm549, %v1750, 0.0
    %1752 = vadd.xlane.f32.xlu0 %v1751
    %v1753 = vpop.xlane.xlu0 %1752
    %v1755 = vsel %vm242, %v1570, 0
    %1757 = vmatprep.subr.mxu0 0.0
    %1758 = vmatpush1.msra.mxu0 0.0
    %1759 = vmatprep.subr.mxu0 0.0
    %1760 = vmatpush1.msra.mxu0 0.0
    %1761 = vmatprep.subr.mxu0 0.0
    %1762 = vmatpush1.msra.mxu0 0.0
    %1763 = vmatprep.subr.mxu0 0.0
    %1764 = vmatpush1.msra.mxu0 0.0
    %1765 = vmatprep.subr.mxu0 0.0
    %1766 = vmatpush1.msra.mxu0 0.0
    %1767 = vmatprep.subr.mxu0 0.0
    %1768 = vmatpush1.msra.mxu0 0.0
    %1769 = vmatprep.subr.mxu0 0.0
    %1770 = vmatpush1.msra.mxu0 0.0
    %1771 = vmatprep.subr.mxu0 0.0
    %1772 = vmatpush1.msra.mxu0 0.0
    %1773 = vmatprep.subr.mxu0 %v89
    %1774 = vmatpush1.msra.mxu0 %v88
    %1775 = vmatprep.subr.mxu0 %v87
    %1776 = vmatpush1.msra.mxu0 %v86
    %1777 = vmatprep.subr.mxu0 %v85
    %1778 = vmatpush1.msra.mxu0 %v84
    %1779 = vmatprep.subr.mxu0 %v83
    %1780 = vmatpush1.msra.mxu0 %v82
    %1781 = vmatprep.subr.mxu0 %v81
    %1782 = vmatpush1.msra.mxu0 %v80
    %1783 = vmatprep.subr.mxu0 %v79
    %1784 = vmatpush1.msra.mxu0 %v78
    %1785 = vmatprep.subr.mxu0 %v77
    %1786 = vmatpush1.msra.mxu0 %v76
    %1787 = vmatprep.subr.mxu0 %v75
    %1788 = vmatpush1.msra.mxu0 %v74
    %1789 = vmatprep.subr.mxu0 0.0
    %1790 = vmatpush2.msra.mxu0 0.0
    %1791 = vmatprep.subr.mxu0 0.0
    %1792 = vmatpush2.msra.mxu0 0.0
    %1793 = vmatprep.subr.mxu0 0.0
    %1794 = vmatpush2.msra.mxu0 0.0
    %1795 = vmatprep.subr.mxu0 0.0
    %1796 = vmatpush2.msra.mxu0 0.0
    %1797 = vmatprep.subr.mxu0 0.0
    %1798 = vmatpush2.msra.mxu0 0.0
    %1799 = vmatprep.subr.mxu0 0.0
    %1800 = vmatpush2.msra.mxu0 0.0
    %1801 = vmatprep.subr.mxu0 0.0
    %1802 = vmatpush2.msra.mxu0 0.0
    %1803 = vmatprep.subr.mxu0 0.0
    %1804 = vmatpush2.msra.mxu0 0.0
    %1805 = vmatprep.subr.mxu0 0.0
    %1806 = vmatpush2.msra.mxu0 0.0
    %1807 = vmatprep.subr.mxu0 0.0
    %1808 = vmatpush2.msra.mxu0 0.0
    %1809 = vmatprep.subr.mxu0 0.0
    %1810 = vmatpush2.msra.mxu0 0.0
    %1811 = vmatprep.subr.mxu0 0.0
    %1812 = vmatpush2.msra.mxu0 0.0
    %1813 = vmatprep.subr.mxu0 0.0
    %1814 = vmatpush2.msra.mxu0 0.0
    %1815 = vmatprep.subr.mxu0 0.0
    %1816 = vmatpush2.msra.mxu0 0.0
    %1817 = vmatprep.subr.mxu0 0.0
    %1818 = vmatpush2.msra.mxu0 0.0
    %1819 = vmatprep.subr.mxu0 0.0
    %1820 = vmatpush2.msra.mxu0 0.0
    %1821 = vmatprep.mubr.f32.mxu0 0.0
    %1822 = vmatmul.mubr.f32.gmra.mxu0 %v1755
    %v1823 = vpop.f32.mrf.mxu0
    %v1824 = vadd.f32 0.0, %v1823
    %v1825 = vpop.f32.mrf.mxu0
    %v1826 = vadd.f32 0.0, %v1825
    %1827 = vdwg.mxu0
    %v1830 = vrot.slane %v1824, 6
    %v1831 = vrot.slane %v1826, 6
    %v1834 = vadd.f32 %v238, %v1830
    %v1835 = vadd.f32 %v240, %v1831
    %v1836 = vxor.u32 %v1834, 2147483648
    %v1837 = vxor.u32 %v1835, 2147483648
    %v1838 = vmul.f32 %v1836, 1.442695
    %v1839 = vpow.pop %v1838
    %v1840 = vmul.f32 %v1837, 1.442695
    %v1841 = vpow.pop %v1840
    %v1842 = vadd.f32 %v1839, 1.0
    %v1843 = vadd.f32 %v1841, 1.0
    %v1844 = vrcp.pop %v1842
    %v1845 = vmul.f32 1.0, %v1844
    %v1846 = vrcp.pop %v1843
    %v1847 = vmul.f32 1.0, %v1846
    %v1848 = vtanh.pop %v1835
    %v1850 = vrot.slane %v1564, 6
    %v1852 = vmul.f32 %v1845, %v1850
    %1854 = vrot.lane.b32.xlu0 %v1848, 64
    %v1855 = vpop.permute.xlu0 %1854
    %v1857 = vmul.f32 %v1845, %v1855
    %1859 = vrot.lane.b32.xlu0 %v1857, 64
    %v1860 = vpop.permute.xlu0 %1859
    %v1862 = vadd.f32 %v1852, %v1860
    %v1863 = vtanh.pop %v1862
    %1865 = vrot.lane.b32.xlu0 %v1863, 64
    %v1866 = vpop.permute.xlu0 %1865
    %v1868 = vmul.f32 %v1847, %v1866
    %v1869 = vrot.slane %v1675, 6
    %1870 = vrot.lane.b32.xlu0 %v1869, 64
    %v1871 = vpop.permute.xlu0 %1870
    %v1873 = vsel %vm242, %v1868, %v1871
    %v1875 = vrot.slane %v1873, 2
    %1877 = vmatprep.subr.mxu0 %v121
    %1878 = vmatpush1.msra.mxu0 %v120
    %1879 = vmatprep.subr.mxu0 %v119
    %1880 = vmatpush1.msra.mxu0 %v118
    %1881 = vmatprep.subr.mxu0 %v117
    %1882 = vmatpush1.msra.mxu0 %v116
    %1883 = vmatprep.subr.mxu0 %v115
    %1884 = vmatpush1.msra.mxu0 %v114
    %1885 = vmatprep.subr.mxu0 %v113
    %1886 = vmatpush1.msra.mxu0 %v112
    %1887 = vmatprep.subr.mxu0 %v111
    %1888 = vmatpush1.msra.mxu0 %v110
    %1889 = vmatprep.subr.mxu0 %v109
    %1890 = vmatpush1.msra.mxu0 %v108
    %1891 = vmatprep.subr.mxu0 %v107
    %1892 = vmatpush1.msra.mxu0 %v106
    %1893 = vmatprep.subr.mxu0 %v105
    %1894 = vmatpush1.msra.mxu0 %v104
    %1895 = vmatprep.subr.mxu0 %v103
    %1896 = vmatpush1.msra.mxu0 %v102
    %1897 = vmatprep.subr.mxu0 %v101
    %1898 = vmatpush1.msra.mxu0 %v100
    %1899 = vmatprep.subr.mxu0 %v99
    %1900 = vmatpush1.msra.mxu0 %v98
    %1901 = vmatprep.subr.mxu0 %v97
    %1902 = vmatpush1.msra.mxu0 %v96
    %1903 = vmatprep.subr.mxu0 %v95
    %1904 = vmatpush1.msra.mxu0 %v94
    %1905 = vmatprep.subr.mxu0 %v93
    %1906 = vmatpush1.msra.mxu0 %v92
    %1907 = vmatprep.subr.mxu0 %v91
    %1908 = vmatpush1.msra.mxu0 %v90
    %1909 = vmatprep.subr.mxu0 0.0
    %1910 = vmatpush2.msra.mxu0 0.0
    %1911 = vmatprep.subr.mxu0 0.0
    %1912 = vmatpush2.msra.mxu0 0.0
    %1913 = vmatprep.subr.mxu0 0.0
    %1914 = vmatpush2.msra.mxu0 0.0
    %1915 = vmatprep.subr.mxu0 0.0
    %1916 = vmatpush2.msra.mxu0 0.0
    %1917 = vmatprep.subr.mxu0 0.0
    %1918 = vmatpush2.msra.mxu0 0.0
    %1919 = vmatprep.subr.mxu0 0.0
    %1920 = vmatpush2.msra.mxu0 0.0
    %1921 = vmatprep.subr.mxu0 0.0
    %1922 = vmatpush2.msra.mxu0 0.0
    %1923 = vmatprep.subr.mxu0 0.0
    %1924 = vmatpush2.msra.mxu0 0.0
    %1925 = vmatprep.subr.mxu0 0.0
    %1926 = vmatpush2.msra.mxu0 0.0
    %1927 = vmatprep.subr.mxu0 0.0
    %1928 = vmatpush2.msra.mxu0 0.0
    %1929 = vmatprep.subr.mxu0 0.0
    %1930 = vmatpush2.msra.mxu0 0.0
    %1931 = vmatprep.subr.mxu0 0.0
    %1932 = vmatpush2.msra.mxu0 0.0
    %1933 = vmatprep.subr.mxu0 0.0
    %1934 = vmatpush2.msra.mxu0 0.0
    %1935 = vmatprep.subr.mxu0 0.0
    %1936 = vmatpush2.msra.mxu0 0.0
    %1937 = vmatprep.subr.mxu0 0.0
    %1938 = vmatpush2.msra.mxu0 0.0
    %1939 = vmatprep.subr.mxu0 0.0
    %1940 = vmatpush2.msra.mxu0 0.0
    %1941 = vmatprep.mubr.f32.mxu0 0.0
    %1942 = vmatmul.mubr.f32.gmra.mxu0 %v1875
    %v1943 = vpop.f32.mrf.mxu0
    %v1944 = vadd.f32 %v354, %v1943
    %v1945 = vpop.f32.mrf.mxu0
    %v1946 = vadd.f32 %v358, %v1945
    %1947 = vdwg.mxu0
    %v1948 = vxor.u32 %v1944, 2147483648
    %v1949 = vxor.u32 %v1946, 2147483648
    %v1950 = vmul.f32 %v1948, 1.442695
    %v1951 = vpow.pop %v1950
    %v1952 = vmul.f32 %v1949, 1.442695
    %v1953 = vpow.pop %v1952
    %v1954 = vadd.f32 %v1951, 1.0
    %v1955 = vadd.f32 %v1953, 1.0
    %v1956 = vrcp.pop %v1954
    %v1957 = vmul.f32 1.0, %v1956
    %v1958 = vrcp.pop %v1955
    %v1959 = vmul.f32 1.0, %v1958
    %v1960 = vtanh.pop %v1946
    %v1961 = vmul.f32 %v1957, %v1669
    %1963 = vrot.lane.b32.xlu0 %v1960, 64
    %v1964 = vpop.permute.xlu0 %1963
    %v1966 = vmul.f32 %v1957, %v1964
    %1968 = vrot.lane.b32.xlu0 %v1966, 64
    %v1969 = vpop.permute.xlu0 %1968
    %v1971 = vadd.f32 %v1961, %v1969
    %v1972 = vtanh.pop %v1971
    %1974 = vrot.lane.b32.xlu0 %v1972, 64
    %v1975 = vpop.permute.xlu0 %1974
    %v1977 = vmul.f32 %v1959, %v1975
    %v1979 = vsel %vm242, %v1977, 0
    %1981 = vmatprep.subr.mxu0 0.0
    %1982 = vmatpush1.msra.mxu0 0.0
    %1983 = vmatprep.subr.mxu0 0.0
    %1984 = vmatpush1.msra.mxu0 0.0
    %1985 = vmatprep.subr.mxu0 0.0
    %1986 = vmatpush1.msra.mxu0 0.0
    %1987 = vmatprep.subr.mxu0 0.0
    %1988 = vmatpush1.msra.mxu0 0.0
    %1989 = vmatprep.subr.mxu0 0.0
    %1990 = vmatpush1.msra.mxu0 0.0
    %1991 = vmatprep.subr.mxu0 0.0
    %1992 = vmatpush1.msra.mxu0 0.0
    %1993 = vmatprep.subr.mxu0 0.0
    %1994 = vmatpush1.msra.mxu0 0.0
    %1995 = vmatprep.subr.mxu0 0.0
    %1996 = vmatpush1.msra.mxu0 0.0
    %1997 = vmatprep.subr.mxu0 0.0
    %1998 = vmatpush1.msra.mxu0 %v130
    %1999 = vmatprep.subr.mxu0 0.0
    %2000 = vmatpush1.msra.mxu0 %v129
    %2001 = vmatprep.subr.mxu0 0.0
    %2002 = vmatpush1.msra.mxu0 %v128
    %2003 = vmatprep.subr.mxu0 0.0
    %2004 = vmatpush1.msra.mxu0 %v127
    %2005 = vmatprep.subr.mxu0 0.0
    %2006 = vmatpush1.msra.mxu0 %v126
    %2007 = vmatprep.subr.mxu0 0.0
    %2008 = vmatpush1.msra.mxu0 %v125
    %2009 = vmatprep.subr.mxu0 0.0
    %2010 = vmatpush1.msra.mxu0 %v124
    %2011 = vmatprep.subr.mxu0 0.0
    %2012 = vmatpush1.msra.mxu0 %v123
    %2013 = vmatprep.subr.mxu0 0.0
    %2014 = vmatpush2.msra.mxu0 0.0
    %2015 = vmatprep.subr.mxu0 0.0
    %2016 = vmatpush2.msra.mxu0 0.0
    %2017 = vmatprep.subr.mxu0 0.0
    %2018 = vmatpush2.msra.mxu0 0.0
    %2019 = vmatprep.subr.mxu0 0.0
    %2020 = vmatpush2.msra.mxu0 0.0
    %2021 = vmatprep.subr.mxu0 0.0
    %2022 = vmatpush2.msra.mxu0 0.0
    %2023 = vmatprep.subr.mxu0 0.0
    %2024 = vmatpush2.msra.mxu0 0.0
    %2025 = vmatprep.subr.mxu0 0.0
    %2026 = vmatpush2.msra.mxu0 0.0
    %2027 = vmatprep.subr.mxu0 0.0
    %2028 = vmatpush2.msra.mxu0 0.0
    %2029 = vmatprep.subr.mxu0 0.0
    %2030 = vmatpush2.msra.mxu0 0.0
    %2031 = vmatprep.subr.mxu0 0.0
    %2032 = vmatpush2.msra.mxu0 0.0
    %2033 = vmatprep.subr.mxu0 0.0
    %2034 = vmatpush2.msra.mxu0 0.0
    %2035 = vmatprep.subr.mxu0 0.0
    %2036 = vmatpush2.msra.mxu0 0.0
    %2037 = vmatprep.subr.mxu0 0.0
    %2038 = vmatpush2.msra.mxu0 0.0
    %2039 = vmatprep.subr.mxu0 0.0
    %2040 = vmatpush2.msra.mxu0 0.0
    %2041 = vmatprep.subr.mxu0 0.0
    %2042 = vmatpush2.msra.mxu0 0.0
    %2043 = vmatprep.subr.mxu0 0.0
    %2044 = vmatpush2.msra.mxu0 0.0
    %2045 = vmatprep.mubr.f32.mxu0 0.0
    %2046 = vmatmul.mubr.f32.gmra.mxu0 %v1979
    %v2047 = vpop.f32.mrf.mxu0
    %v2048 = vadd.f32 %v466, %v2047
    %v2049 = vpop.f32.mrf.mxu0
    %2050 = vdwg.mxu0
    %v2051 = vtanh.pop %v2048
    %v2052 = vmul.f32 %v2051, %v546
    %v2053 = vsel %vm549, %v2052, 0.0
    %2054 = vadd.xlane.f32.xlu0 %v2053
    %v2055 = vpop.xlane.xlu0 %2054
    %v2057 = vrot.slane %v1868, 2
    %v2058 = vsel %vm242, %v2057, 0
    %2060 = vmatprep.subr.mxu0 0.0
    %2061 = vmatpush1.msra.mxu0 0.0
    %2062 = vmatprep.subr.mxu0 0.0
    %2063 = vmatpush1.msra.mxu0 0.0
    %2064 = vmatprep.subr.mxu0 0.0
    %2065 = vmatpush1.msra.mxu0 0.0
    %2066 = vmatprep.subr.mxu0 0.0
    %2067 = vmatpush1.msra.mxu0 0.0
    %2068 = vmatprep.subr.mxu0 0.0
    %2069 = vmatpush1.msra.mxu0 0.0
    %2070 = vmatprep.subr.mxu0 0.0
    %2071 = vmatpush1.msra.mxu0 0.0
    %2072 = vmatprep.subr.mxu0 0.0
    %2073 = vmatpush1.msra.mxu0 0.0
    %2074 = vmatprep.subr.mxu0 0.0
    %2075 = vmatpush1.msra.mxu0 0.0
    %2076 = vmatprep.subr.mxu0 %v89
    %2077 = vmatpush1.msra.mxu0 %v88
    %2078 = vmatprep.subr.mxu0 %v87
    %2079 = vmatpush1.msra.mxu0 %v86
    %2080 = vmatprep.subr.mxu0 %v85
    %2081 = vmatpush1.msra.mxu0 %v84
    %2082 = vmatprep.subr.mxu0 %v83
    %2083 = vmatpush1.msra.mxu0 %v82
    %2084 = vmatprep.subr.mxu0 %v81
    %2085 = vmatpush1.msra.mxu0 %v80
    %2086 = vmatprep.subr.mxu0 %v79
    %2087 = vmatpush1.msra.mxu0 %v78
    %2088 = vmatprep.subr.mxu0 %v77
    %2089 = vmatpush1.msra.mxu0 %v76
    %2090 = vmatprep.subr.mxu0 %v75
    %2091 = vmatpush1.msra.mxu0 %v74
    %2092 = vmatprep.subr.mxu0 0.0
    %2093 = vmatpush2.msra.mxu0 0.0
    %2094 = vmatprep.subr.mxu0 0.0
    %2095 = vmatpush2.msra.mxu0 0.0
    %2096 = vmatprep.subr.mxu0 0.0
    %2097 = vmatpush2.msra.mxu0 0.0
    %2098 = vmatprep.subr.mxu0 0.0
    %2099 = vmatpush2.msra.mxu0 0.0
    %2100 = vmatprep.subr.mxu0 0.0
    %2101 = vmatpush2.msra.mxu0 0.0
    %2102 = vmatprep.subr.mxu0 0.0
    %2103 = vmatpush2.msra.mxu0 0.0
    %2104 = vmatprep.subr.mxu0 0.0
    %2105 = vmatpush2.msra.mxu0 0.0
    %2106 = vmatprep.subr.mxu0 0.0
    %2107 = vmatpush2.msra.mxu0 0.0
    %2108 = vmatprep.subr.mxu0 0.0
    %2109 = vmatpush2.msra.mxu0 0.0
    %2110 = vmatprep.subr.mxu0 0.0
    %2111 = vmatpush2.msra.mxu0 0.0
    %2112 = vmatprep.subr.mxu0 0.0
    %2113 = vmatpush2.msra.mxu0 0.0
    %2114 = vmatprep.subr.mxu0 0.0
    %2115 = vmatpush2.msra.mxu0 0.0
    %2116 = vmatprep.subr.mxu0 0.0
    %2117 = vmatpush2.msra.mxu0 0.0
    %2118 = vmatprep.subr.mxu0 0.0
    %2119 = vmatpush2.msra.mxu0 0.0
    %2120 = vmatprep.subr.mxu0 0.0
    %2121 = vmatpush2.msra.mxu0 0.0
    %2122 = vmatprep.subr.mxu0 0.0
    %2123 = vmatpush2.msra.mxu0 0.0
    %2124 = vmatprep.mubr.f32.mxu0 0.0
    %2125 = vmatmul.mubr.f32.gmra.mxu0 %v2058
    %v2126 = vpop.f32.mrf.mxu0
    %v2127 = vadd.f32 0.0, %v2126
    %v2128 = vpop.f32.mrf.mxu0
    %v2129 = vadd.f32 0.0, %v2128
    %2130 = vdwg.mxu0
    %v2133 = vrot.slane %v2127, 4
    %v2134 = vrot.slane %v2129, 4
    %v2137 = vadd.f32 %v238, %v2133
    %v2138 = vadd.f32 %v240, %v2134
    %v2139 = vxor.u32 %v2137, 2147483648
    %v2140 = vxor.u32 %v2138, 2147483648
    %v2141 = vmul.f32 %v2139, 1.442695
    %v2142 = vpow.pop %v2141
    %v2143 = vmul.f32 %v2140, 1.442695
    %v2144 = vpow.pop %v2143
    %v2145 = vadd.f32 %v2142, 1.0
    %v2146 = vadd.f32 %v2144, 1.0
    %v2147 = vrcp.pop %v2145
    %v2148 = vmul.f32 1.0, %v2147
    %v2149 = vrcp.pop %v2146
    %v2150 = vmul.f32 1.0, %v2149
    %v2151 = vtanh.pop %v2138
    %v2153 = vrot.slane %v1862, 6
    %v2155 = vmul.f32 %v2148, %v2153
    %2157 = vrot.lane.b32.xlu0 %v2151, 64
    %v2158 = vpop.permute.xlu0 %2157
    %v2160 = vmul.f32 %v2148, %v2158
    %2162 = vrot.lane.b32.xlu0 %v2160, 64
    %v2163 = vpop.permute.xlu0 %2162
    %v2165 = vadd.f32 %v2155, %v2163
    %v2166 = vtanh.pop %v2165
    %2168 = vrot.lane.b32.xlu0 %v2166, 64
    %v2169 = vpop.permute.xlu0 %2168
    %v2171 = vmul.f32 %v2150, %v2169
    %v2172 = vrot.slane %v1977, 4
    %2173 = vrot.lane.b32.xlu0 %v2172, 64
    %v2174 = vpop.permute.xlu0 %2173
    %v2176 = vsel %vm242, %v2171, %v2174
    %v2178 = vrot.slane %v2176, 4
    %2180 = vmatprep.subr.mxu0 %v121
    %2181 = vmatpush1.msra.mxu0 %v120
    %2182 = vmatprep.subr.mxu0 %v119
    %2183 = vmatpush1.msra.mxu0 %v118
    %2184 = vmatprep.subr.mxu0 %v117
    %2185 = vmatpush1.msra.mxu0 %v116
    %2186 = vmatprep.subr.mxu0 %v115
    %2187 = vmatpush1.msra.mxu0 %v114
    %2188 = vmatprep.subr.mxu0 %v113
    %2189 = vmatpush1.msra.mxu0 %v112
    %2190 = vmatprep.subr.mxu0 %v111
    %2191 = vmatpush1.msra.mxu0 %v110
    %2192 = vmatprep.subr.mxu0 %v109
    %2193 = vmatpush1.msra.mxu0 %v108
    %2194 = vmatprep.subr.mxu0 %v107
    %2195 = vmatpush1.msra.mxu0 %v106
    %2196 = vmatprep.subr.mxu0 %v105
    %2197 = vmatpush1.msra.mxu0 %v104
    %2198 = vmatprep.subr.mxu0 %v103
    %2199 = vmatpush1.msra.mxu0 %v102
    %2200 = vmatprep.subr.mxu0 %v101
    %2201 = vmatpush1.msra.mxu0 %v100
    %2202 = vmatprep.subr.mxu0 %v99
    %2203 = vmatpush1.msra.mxu0 %v98
    %2204 = vmatprep.subr.mxu0 %v97
    %2205 = vmatpush1.msra.mxu0 %v96
    %2206 = vmatprep.subr.mxu0 %v95
    %2207 = vmatpush1.msra.mxu0 %v94
    %2208 = vmatprep.subr.mxu0 %v93
    %2209 = vmatpush1.msra.mxu0 %v92
    %2210 = vmatprep.subr.mxu0 %v91
    %2211 = vmatpush1.msra.mxu0 %v90
    %2212 = vmatprep.subr.mxu0 0.0
    %2213 = vmatpush2.msra.mxu0 0.0
    %2214 = vmatprep.subr.mxu0 0.0
    %2215 = vmatpush2.msra.mxu0 0.0
    %2216 = vmatprep.subr.mxu0 0.0
    %2217 = vmatpush2.msra.mxu0 0.0
    %2218 = vmatprep.subr.mxu0 0.0
    %2219 = vmatpush2.msra.mxu0 0.0
    %2220 = vmatprep.subr.mxu0 0.0
    %2221 = vmatpush2.msra.mxu0 0.0
    %2222 = vmatprep.subr.mxu0 0.0
    %2223 = vmatpush2.msra.mxu0 0.0
    %2224 = vmatprep.subr.mxu0 0.0
    %2225 = vmatpush2.msra.mxu0 0.0
    %2226 = vmatprep.subr.mxu0 0.0
    %2227 = vmatpush2.msra.mxu0 0.0
    %2228 = vmatprep.subr.mxu0 0.0
    %2229 = vmatpush2.msra.mxu0 0.0
    %2230 = vmatprep.subr.mxu0 0.0
    %2231 = vmatpush2.msra.mxu0 0.0
    %2232 = vmatprep.subr.mxu0 0.0
    %2233 = vmatpush2.msra.mxu0 0.0
    %2234 = vmatprep.subr.mxu0 0.0
    %2235 = vmatpush2.msra.mxu0 0.0
    %2236 = vmatprep.subr.mxu0 0.0
    %2237 = vmatpush2.msra.mxu0 0.0
    %2238 = vmatprep.subr.mxu0 0.0
    %2239 = vmatpush2.msra.mxu0 0.0
    %2240 = vmatprep.subr.mxu0 0.0
    %2241 = vmatpush2.msra.mxu0 0.0
    %2242 = vmatprep.subr.mxu0 0.0
    %2243 = vmatpush2.msra.mxu0 0.0
    %2244 = vmatprep.mubr.f32.mxu0 0.0
    %2245 = vmatmul.mubr.f32.gmra.mxu0 %v2178
    %v2246 = vpop.f32.mrf.mxu0
    %v2247 = vadd.f32 %v354, %v2246
    %v2248 = vpop.f32.mrf.mxu0
    %v2249 = vadd.f32 %v358, %v2248
    %2250 = vdwg.mxu0
    %v2251 = vxor.u32 %v2247, 2147483648
    %v2252 = vxor.u32 %v2249, 2147483648
    %v2253 = vmul.f32 %v2251, 1.442695
    %v2254 = vpow.pop %v2253
    %v2255 = vmul.f32 %v2252, 1.442695
    %v2256 = vpow.pop %v2255
    %v2257 = vadd.f32 %v2254, 1.0
    %v2258 = vadd.f32 %v2256, 1.0
    %v2259 = vrcp.pop %v2257
    %v2260 = vmul.f32 1.0, %v2259
    %v2261 = vrcp.pop %v2258
    %v2262 = vmul.f32 1.0, %v2261
    %v2263 = vtanh.pop %v2249
    %v2264 = vmul.f32 %v2260, %v1971
    %2266 = vrot.lane.b32.xlu0 %v2263, 64
    %v2267 = vpop.permute.xlu0 %2266
    %v2269 = vmul.f32 %v2260, %v2267
    %2271 = vrot.lane.b32.xlu0 %v2269, 64
    %v2272 = vpop.permute.xlu0 %2271
    %v2274 = vadd.f32 %v2264, %v2272
    %v2275 = vtanh.pop %v2274
    %2277 = vrot.lane.b32.xlu0 %v2275, 64
    %v2278 = vpop.permute.xlu0 %2277
    %v2280 = vmul.f32 %v2262, %v2278
    %v2282 = vsel %vm242, %v2280, 0
    %2284 = vmatprep.subr.mxu0 0.0
    %2285 = vmatpush1.msra.mxu0 0.0
    %2286 = vmatprep.subr.mxu0 0.0
    %2287 = vmatpush1.msra.mxu0 0.0
    %2288 = vmatprep.subr.mxu0 0.0
    %2289 = vmatpush1.msra.mxu0 0.0
    %2290 = vmatprep.subr.mxu0 0.0
    %2291 = vmatpush1.msra.mxu0 0.0
    %2292 = vmatprep.subr.mxu0 0.0
    %2293 = vmatpush1.msra.mxu0 0.0
    %2294 = vmatprep.subr.mxu0 0.0
    %2295 = vmatpush1.msra.mxu0 0.0
    %2296 = vmatprep.subr.mxu0 0.0
    %2297 = vmatpush1.msra.mxu0 0.0
    %2298 = vmatprep.subr.mxu0 0.0
    %2299 = vmatpush1.msra.mxu0 0.0
    %2300 = vmatprep.subr.mxu0 0.0
    %2301 = vmatpush1.msra.mxu0 %v130
    %2302 = vmatprep.subr.mxu0 0.0
    %2303 = vmatpush1.msra.mxu0 %v129
    %2304 = vmatprep.subr.mxu0 0.0
    %2305 = vmatpush1.msra.mxu0 %v128
    %2306 = vmatprep.subr.mxu0 0.0
    %2307 = vmatpush1.msra.mxu0 %v127
    %2308 = vmatprep.subr.mxu0 0.0
    %2309 = vmatpush1.msra.mxu0 %v126
    %2310 = vmatprep.subr.mxu0 0.0
    %2311 = vmatpush1.msra.mxu0 %v125
    %2312 = vmatprep.subr.mxu0 0.0
    %2313 = vmatpush1.msra.mxu0 %v124
    %2314 = vmatprep.subr.mxu0 0.0
    %2315 = vmatpush1.msra.mxu0 %v123
    %2316 = vmatprep.subr.mxu0 0.0
    %2317 = vmatpush2.msra.mxu0 0.0
    %2318 = vmatprep.subr.mxu0 0.0
    %2319 = vmatpush2.msra.mxu0 0.0
    %2320 = vmatprep.subr.mxu0 0.0
    %2321 = vmatpush2.msra.mxu0 0.0
    %2322 = vmatprep.subr.mxu0 0.0
    %2323 = vmatpush2.msra.mxu0 0.0
    %2324 = vmatprep.subr.mxu0 0.0
    %2325 = vmatpush2.msra.mxu0 0.0
    %2326 = vmatprep.subr.mxu0 0.0
    %2327 = vmatpush2.msra.mxu0 0.0
    %2328 = vmatprep.subr.mxu0 0.0
    %2329 = vmatpush2.msra.mxu0 0.0
    %2330 = vmatprep.subr.mxu0 0.0
    %2331 = vmatpush2.msra.mxu0 0.0
    %2332 = vmatprep.subr.mxu0 0.0
    %2333 = vmatpush2.msra.mxu0 0.0
    %2334 = vmatprep.subr.mxu0 0.0
    %2335 = vmatpush2.msra.mxu0 0.0
    %2336 = vmatprep.subr.mxu0 0.0
    %2337 = vmatpush2.msra.mxu0 0.0
    %2338 = vmatprep.subr.mxu0 0.0
    %2339 = vmatpush2.msra.mxu0 0.0
    %2340 = vmatprep.subr.mxu0 0.0
    %2341 = vmatpush2.msra.mxu0 0.0
    %2342 = vmatprep.subr.mxu0 0.0
    %2343 = vmatpush2.msra.mxu0 0.0
    %2344 = vmatprep.subr.mxu0 0.0
    %2345 = vmatpush2.msra.mxu0 0.0
    %2346 = vmatprep.subr.mxu0 0.0
    %2347 = vmatpush2.msra.mxu0 0.0
    %2348 = vmatprep.mubr.f32.mxu0 0.0
    %2349 = vmatmul.mubr.f32.gmra.mxu0 %v2282
    %v2350 = vpop.f32.mrf.mxu0
    %v2351 = vadd.f32 %v466, %v2350
    %v2352 = vpop.f32.mrf.mxu0
    %2353 = vdwg.mxu0
    %v2354 = vtanh.pop %v2351
    %v2355 = vmul.f32 %v2354, %v546
    %v2356 = vsel %vm549, %v2355, 0.0
    %2357 = vadd.xlane.f32.xlu0 %v2356
    %v2358 = vpop.xlane.xlu0 %2357
    %v2360 = vrot.slane %v2171, 4
    %v2361 = vsel %vm242, %v2360, 0
    %2363 = vmatprep.subr.mxu0 0.0
    %2364 = vmatpush1.msra.mxu0 0.0
    %2365 = vmatprep.subr.mxu0 0.0
    %2366 = vmatpush1.msra.mxu0 0.0
    %2367 = vmatprep.subr.mxu0 0.0
    %2368 = vmatpush1.msra.mxu0 0.0
    %2369 = vmatprep.subr.mxu0 0.0
    %2370 = vmatpush1.msra.mxu0 0.0
    %2371 = vmatprep.subr.mxu0 0.0
    %2372 = vmatpush1.msra.mxu0 0.0
    %2373 = vmatprep.subr.mxu0 0.0
    %2374 = vmatpush1.msra.mxu0 0.0
    %2375 = vmatprep.subr.mxu0 0.0
    %2376 = vmatpush1.msra.mxu0 0.0
    %2377 = vmatprep.subr.mxu0 0.0
    %2378 = vmatpush1.msra.mxu0 0.0
    %2379 = vmatprep.subr.mxu0 %v89
    %2380 = vmatpush1.msra.mxu0 %v88
    %2381 = vmatprep.subr.mxu0 %v87
    %2382 = vmatpush1.msra.mxu0 %v86
    %2383 = vmatprep.subr.mxu0 %v85
    %2384 = vmatpush1.msra.mxu0 %v84
    %2385 = vmatprep.subr.mxu0 %v83
    %2386 = vmatpush1.msra.mxu0 %v82
    %2387 = vmatprep.subr.mxu0 %v81
    %2388 = vmatpush1.msra.mxu0 %v80
    %2389 = vmatprep.subr.mxu0 %v79
    %2390 = vmatpush1.msra.mxu0 %v78
    %2391 = vmatprep.subr.mxu0 %v77
    %2392 = vmatpush1.msra.mxu0 %v76
    %2393 = vmatprep.subr.mxu0 %v75
    %2394 = vmatpush1.msra.mxu0 %v74
    %2395 = vmatprep.subr.mxu0 0.0
    %2396 = vmatpush2.msra.mxu0 0.0
    %2397 = vmatprep.subr.mxu0 0.0
    %2398 = vmatpush2.msra.mxu0 0.0
    %2399 = vmatprep.subr.mxu0 0.0
    %2400 = vmatpush2.msra.mxu0 0.0
    %2401 = vmatprep.subr.mxu0 0.0
    %2402 = vmatpush2.msra.mxu0 0.0
    %2403 = vmatprep.subr.mxu0 0.0
    %2404 = vmatpush2.msra.mxu0 0.0
    %2405 = vmatprep.subr.mxu0 0.0
    %2406 = vmatpush2.msra.mxu0 0.0
    %2407 = vmatprep.subr.mxu0 0.0
    %2408 = vmatpush2.msra.mxu0 0.0
    %2409 = vmatprep.subr.mxu0 0.0
    %2410 = vmatpush2.msra.mxu0 0.0
    %2411 = vmatprep.subr.mxu0 0.0
    %2412 = vmatpush2.msra.mxu0 0.0
    %2413 = vmatprep.subr.mxu0 0.0
    %2414 = vmatpush2.msra.mxu0 0.0
    %2415 = vmatprep.subr.mxu0 0.0
    %2416 = vmatpush2.msra.mxu0 0.0
    %2417 = vmatprep.subr.mxu0 0.0
    %2418 = vmatpush2.msra.mxu0 0.0
    %2419 = vmatprep.subr.mxu0 0.0
    %2420 = vmatpush2.msra.mxu0 0.0
    %2421 = vmatprep.subr.mxu0 0.0
    %2422 = vmatpush2.msra.mxu0 0.0
    %2423 = vmatprep.subr.mxu0 0.0
    %2424 = vmatpush2.msra.mxu0 0.0
    %2425 = vmatprep.subr.mxu0 0.0
    %2426 = vmatpush2.msra.mxu0 0.0
    %2427 = vmatprep.mubr.f32.mxu0 0.0
    %2428 = vmatmul.mubr.f32.gmra.mxu0 %v2361
    %v2429 = vpop.f32.mrf.mxu0
    %v2430 = vadd.f32 0.0, %v2429
    %v2431 = vpop.f32.mrf.mxu0
    %v2432 = vadd.f32 0.0, %v2431
    %2433 = vdwg.mxu0
    %v2436 = vrot.slane %v2430, 2
    %v2437 = vrot.slane %v2432, 2
    %v2440 = vadd.f32 %v238, %v2436
    %v2441 = vadd.f32 %v240, %v2437
    %v2442 = vxor.u32 %v2440, 2147483648
    %v2443 = vxor.u32 %v2441, 2147483648
    %v2444 = vmul.f32 %v2442, 1.442695
    %v2445 = vpow.pop %v2444
    %v2446 = vmul.f32 %v2443, 1.442695
    %v2447 = vpow.pop %v2446
    %v2448 = vadd.f32 %v2445, 1.0
    %v2449 = vadd.f32 %v2447, 1.0
    %v2450 = vrcp.pop %v2448
    %v2451 = vmul.f32 1.0, %v2450
    %v2452 = vrcp.pop %v2449
    %v2453 = vmul.f32 1.0, %v2452
    %v2454 = vtanh.pop %v2441
    %v2456 = vrot.slane %v2165, 6
    %v2458 = vmul.f32 %v2451, %v2456
    %2460 = vrot.lane.b32.xlu0 %v2454, 64
    %v2461 = vpop.permute.xlu0 %2460
    %v2463 = vmul.f32 %v2451, %v2461
    %2465 = vrot.lane.b32.xlu0 %v2463, 64
    %v2466 = vpop.permute.xlu0 %2465
    %v2468 = vadd.f32 %v2458, %v2466
    %v2469 = vtanh.pop %v2468
    %2471 = vrot.lane.b32.xlu0 %v2469, 64
    %v2472 = vpop.permute.xlu0 %2471
    %v2474 = vmul.f32 %v2453, %v2472
    %v2475 = vrot.slane %v2280, 2
    %2476 = vrot.lane.b32.xlu0 %v2475, 64
    %v2477 = vpop.permute.xlu0 %2476
    %v2479 = vsel %vm242, %v2474, %v2477
    %v2481 = vrot.slane %v2479, 6
    %2483 = vmatprep.subr.mxu0 %v121
    %2484 = vmatpush1.msra.mxu0 %v120
    %2485 = vmatprep.subr.mxu0 %v119
    %2486 = vmatpush1.msra.mxu0 %v118
    %2487 = vmatprep.subr.mxu0 %v117
    %2488 = vmatpush1.msra.mxu0 %v116
    %2489 = vmatprep.subr.mxu0 %v115
    %2490 = vmatpush1.msra.mxu0 %v114
    %2491 = vmatprep.subr.mxu0 %v113
    %2492 = vmatpush1.msra.mxu0 %v112
    %2493 = vmatprep.subr.mxu0 %v111
    %2494 = vmatpush1.msra.mxu0 %v110
    %2495 = vmatprep.subr.mxu0 %v109
    %2496 = vmatpush1.msra.mxu0 %v108
    %2497 = vmatprep.subr.mxu0 %v107
    %2498 = vmatpush1.msra.mxu0 %v106
    %2499 = vmatprep.subr.mxu0 %v105
    %2500 = vmatpush1.msra.mxu0 %v104
    %2501 = vmatprep.subr.mxu0 %v103
    %2502 = vmatpush1.msra.mxu0 %v102
    %2503 = vmatprep.subr.mxu0 %v101
    %2504 = vmatpush1.msra.mxu0 %v100
    %2505 = vmatprep.subr.mxu0 %v99
    %2506 = vmatpush1.msra.mxu0 %v98
    %2507 = vmatprep.subr.mxu0 %v97
    %2508 = vmatpush1.msra.mxu0 %v96
    %2509 = vmatprep.subr.mxu0 %v95
    %2510 = vmatpush1.msra.mxu0 %v94
    %2511 = vmatprep.subr.mxu0 %v93
    %2512 = vmatpush1.msra.mxu0 %v92
    %2513 = vmatprep.subr.mxu0 %v91
    %2514 = vmatpush1.msra.mxu0 %v90
    %2515 = vmatprep.subr.mxu0 0.0
    %2516 = vmatpush2.msra.mxu0 0.0
    %2517 = vmatprep.subr.mxu0 0.0
    %2518 = vmatpush2.msra.mxu0 0.0
    %2519 = vmatprep.subr.mxu0 0.0
    %2520 = vmatpush2.msra.mxu0 0.0
    %2521 = vmatprep.subr.mxu0 0.0
    %2522 = vmatpush2.msra.mxu0 0.0
    %2523 = vmatprep.subr.mxu0 0.0
    %2524 = vmatpush2.msra.mxu0 0.0
    %2525 = vmatprep.subr.mxu0 0.0
    %2526 = vmatpush2.msra.mxu0 0.0
    %2527 = vmatprep.subr.mxu0 0.0
    %2528 = vmatpush2.msra.mxu0 0.0
    %2529 = vmatprep.subr.mxu0 0.0
    %2530 = vmatpush2.msra.mxu0 0.0
    %2531 = vmatprep.subr.mxu0 0.0
    %2532 = vmatpush2.msra.mxu0 0.0
    %2533 = vmatprep.subr.mxu0 0.0
    %2534 = vmatpush2.msra.mxu0 0.0
    %2535 = vmatprep.subr.mxu0 0.0
    %2536 = vmatpush2.msra.mxu0 0.0
    %2537 = vmatprep.subr.mxu0 0.0
    %2538 = vmatpush2.msra.mxu0 0.0
    %2539 = vmatprep.subr.mxu0 0.0
    %2540 = vmatpush2.msra.mxu0 0.0
    %2541 = vmatprep.subr.mxu0 0.0
    %2542 = vmatpush2.msra.mxu0 0.0
    %2543 = vmatprep.subr.mxu0 0.0
    %2544 = vmatpush2.msra.mxu0 0.0
    %2545 = vmatprep.subr.mxu0 0.0
    %2546 = vmatpush2.msra.mxu0 0.0
    %2547 = vmatprep.mubr.f32.mxu0 0.0
    %2548 = vmatmul.mubr.f32.gmra.mxu0 %v2481
    %v2549 = vpop.f32.mrf.mxu0
    %v2550 = vadd.f32 %v354, %v2549
    %v2551 = vpop.f32.mrf.mxu0
    %v2552 = vadd.f32 %v358, %v2551
    %2553 = vdwg.mxu0
    %v2554 = vxor.u32 %v2550, 2147483648
    %v2555 = vxor.u32 %v2552, 2147483648
    %v2556 = vmul.f32 %v2554, 1.442695
    %v2557 = vpow.pop %v2556
    %v2558 = vmul.f32 %v2555, 1.442695
    %v2559 = vpow.pop %v2558
    %v2560 = vadd.f32 %v2557, 1.0
    %v2561 = vadd.f32 %v2559, 1.0
    %v2562 = vrcp.pop %v2560
    %v2563 = vmul.f32 1.0, %v2562
    %v2564 = vrcp.pop %v2561
    %v2565 = vmul.f32 1.0, %v2564
    %v2566 = vtanh.pop %v2552
    %v2567 = vmul.f32 %v2563, %v2274
    %2569 = vrot.lane.b32.xlu0 %v2566, 64
    %v2570 = vpop.permute.xlu0 %2569
    %v2572 = vmul.f32 %v2563, %v2570
    %2574 = vrot.lane.b32.xlu0 %v2572, 64
    %v2575 = vpop.permute.xlu0 %2574
    %v2577 = vadd.f32 %v2567, %v2575
    %v2578 = vtanh.pop %v2577
    %2580 = vrot.lane.b32.xlu0 %v2578, 64
    %v2581 = vpop.permute.xlu0 %2580
    %v2583 = vmul.f32 %v2565, %v2581
    %v2585 = vsel %vm242, %v2583, 0
    %2587 = vmatprep.subr.mxu0 0.0
    %2588 = vmatpush1.msra.mxu0 0.0
    %2589 = vmatprep.subr.mxu0 0.0
    %2590 = vmatpush1.msra.mxu0 0.0
    %2591 = vmatprep.subr.mxu0 0.0
    %2592 = vmatpush1.msra.mxu0 0.0
    %2593 = vmatprep.subr.mxu0 0.0
    %2594 = vmatpush1.msra.mxu0 0.0
    %2595 = vmatprep.subr.mxu0 0.0
    %2596 = vmatpush1.msra.mxu0 0.0
    %2597 = vmatprep.subr.mxu0 0.0
    %2598 = vmatpush1.msra.mxu0 0.0
    %2599 = vmatprep.subr.mxu0 0.0
    %2600 = vmatpush1.msra.mxu0 0.0
    %2601 = vmatprep.subr.mxu0 0.0
    %2602 = vmatpush1.msra.mxu0 0.0
    %2603 = vmatprep.subr.mxu0 0.0
    %2604 = vmatpush1.msra.mxu0 %v130
    %2605 = vmatprep.subr.mxu0 0.0
    %2606 = vmatpush1.msra.mxu0 %v129
    %2607 = vmatprep.subr.mxu0 0.0
    %2608 = vmatpush1.msra.mxu0 %v128
    %2609 = vmatprep.subr.mxu0 0.0
    %2610 = vmatpush1.msra.mxu0 %v127
    %2611 = vmatprep.subr.mxu0 0.0
    %2612 = vmatpush1.msra.mxu0 %v126
    %2613 = vmatprep.subr.mxu0 0.0
    %2614 = vmatpush1.msra.mxu0 %v125
    %2615 = vmatprep.subr.mxu0 0.0
    %2616 = vmatpush1.msra.mxu0 %v124
    %2617 = vmatprep.subr.mxu0 0.0
    %2618 = vmatpush1.msra.mxu0 %v123
    %2619 = vmatprep.subr.mxu0 0.0
    %2620 = vmatpush2.msra.mxu0 0.0
    %2621 = vmatprep.subr.mxu0 0.0
    %2622 = vmatpush2.msra.mxu0 0.0
    %2623 = vmatprep.subr.mxu0 0.0
    %2624 = vmatpush2.msra.mxu0 0.0
    %2625 = vmatprep.subr.mxu0 0.0
    %2626 = vmatpush2.msra.mxu0 0.0
    %2627 = vmatprep.subr.mxu0 0.0
    %2628 = vmatpush2.msra.mxu0 0.0
    %2629 = vmatprep.subr.mxu0 0.0
    %2630 = vmatpush2.msra.mxu0 0.0
    %2631 = vmatprep.subr.mxu0 0.0
    %2632 = vmatpush2.msra.mxu0 0.0
    %2633 = vmatprep.subr.mxu0 0.0
    %2634 = vmatpush2.msra.mxu0 0.0
    %2635 = vmatprep.subr.mxu0 0.0
    %2636 = vmatpush2.msra.mxu0 0.0
    %2637 = vmatprep.subr.mxu0 0.0
    %2638 = vmatpush2.msra.mxu0 0.0
    %2639 = vmatprep.subr.mxu0 0.0
    %2640 = vmatpush2.msra.mxu0 0.0
    %2641 = vmatprep.subr.mxu0 0.0
    %2642 = vmatpush2.msra.mxu0 0.0
    %2643 = vmatprep.subr.mxu0 0.0
    %2644 = vmatpush2.msra.mxu0 0.0
    %2645 = vmatprep.subr.mxu0 0.0
    %2646 = vmatpush2.msra.mxu0 0.0
    %2647 = vmatprep.subr.mxu0 0.0
    %2648 = vmatpush2.msra.mxu0 0.0
    %2649 = vmatprep.subr.mxu0 0.0
    %2650 = vmatpush2.msra.mxu0 0.0
    %2651 = vmatprep.mubr.f32.mxu0 0.0
    %2652 = vmatmul.mubr.f32.gmra.mxu0 %v2585
    %v2653 = vpop.f32.mrf.mxu0
    %v2654 = vadd.f32 %v466, %v2653
    %v2655 = vpop.f32.mrf.mxu0
    %2656 = vdwg.mxu0
    %v2657 = vtanh.pop %v2654
    %v2658 = vmul.f32 %v2657, %v546
    %v2659 = vsel %vm549, %v2658, 0.0
    %2660 = vadd.xlane.f32.xlu0 %v2659
    %v2661 = vpop.xlane.xlu0 %2660
    %v2662 = vmax.f32 %v552, %v854
    %v2663 = vmax.f32 %v2662, %v1157
    %v2664 = vmax.f32 %v2663, %v1460
    %v2665 = vmax.f32 %v2664, %v1753
    %v2666 = vmax.f32 %v2665, %v2055
    %v2667 = vmax.f32 %v2666, %v2358
    %v2668 = vmax.f32 %v2667, %v2661
    %v2669 = vsub.f32 %v552, %v2668
    %v2670 = vmul.f32 %v2669, 1.442695
    %v2671 = vpow.pop %v2670
    %v2672 = vsub.f32 %v854, %v2668
    %v2673 = vmul.f32 %v2672, 1.442695
    %v2674 = vpow.pop %v2673
    %v2675 = vsub.f32 %v1157, %v2668
    %v2676 = vmul.f32 %v2675, 1.442695
    %v2677 = vpow.pop %v2676
    %v2678 = vsub.f32 %v1460, %v2668
    %v2679 = vmul.f32 %v2678, 1.442695
    %v2680 = vpow.pop %v2679
    %v2681 = vsub.f32 %v1753, %v2668
    %v2682 = vmul.f32 %v2681, 1.442695
    %v2683 = vpow.pop %v2682
    %v2684 = vsub.f32 %v2055, %v2668
    %v2685 = vmul.f32 %v2684, 1.442695
    %v2686 = vpow.pop %v2685
    %v2687 = vsub.f32 %v2358, %v2668
    %v2688 = vmul.f32 %v2687, 1.442695
    %v2689 = vpow.pop %v2688
    %v2690 = vsub.f32 %v2661, %v2668
    %v2691 = vmul.f32 %v2690, 1.442695
    %v2692 = vpow.pop %v2691
    %v2693 = vmul.f32 %v2671, %v461
    %v2694 = vadd.f32 %v2671, %v2674
    %v2695 = vmul.f32 %v2674, %v776
    %v2696 = vadd.f32 %v2693, %v2695
    %v2697 = vadd.f32 %v2694, %v2677
    %v2698 = vmul.f32 %v2677, %v1079
    %v2699 = vadd.f32 %v2696, %v2698
    %v2700 = vadd.f32 %v2697, %v2680
    %v2701 = vmul.f32 %v2680, %v1382
    %v2702 = vadd.f32 %v2699, %v2701
    %v2703 = vadd.f32 %v2700, %v2683
    %v2704 = vmul.f32 %v2683, %v1675
    %v2705 = vadd.f32 %v2702, %v2704
    %v2706 = vadd.f32 %v2703, %v2686
    %v2707 = vmul.f32 %v2686, %v1977
    %v2708 = vadd.f32 %v2705, %v2707
    %v2709 = vadd.f32 %v2706, %v2689
    %v2710 = vmul.f32 %v2689, %v2280
    %v2711 = vadd.f32 %v2708, %v2710
    %v2712 = vadd.f32 %v2709, %v2692
    %v2713 = vmul.f32 %v2692, %v2583
    %v2714 = vadd.f32 %v2711, %v2713
    %v2715 = vrcp.pop %v2712
    %v2716 = vmul.f32 %v2714, %v2715
    %2718 = vrot.lane.b32.xlu0 %v2716, 64
    %v2719 = vpop.permute.xlu0 %2718
    %v2721 = vsel %vm242, %v2583, %v2719
    %2722 = vst [vmem:[#allocation8] sm:$0x3] %v2721
    // Predicated region
    $region50: #{lstm_attn_forward_pallas.1} parent=1 // pred_check
      _
    $region51: #{lstm_attn_forward_pallas.1} parent=1 // pred_check_branch
      %2724 = sbr.rel (0) target = $region53
    $region52: #{lstm_attn_forward_pallas.1} parent=1 // pred_region
      %s2726 = ssub.s32 32, 32
      %2727 = vsyncadd [#allocation4], %s2726
      %s2729 = sshll.u32 [#allocation8], 4
      %s2730 = int_to_ptr.vmem [resolvable:$true] %s2729
      %2732 = dma.vmem_to_hbm [thread:$0]  %s2730, 32, %s9, [#allocation4]
    $region53: #{lstm_attn_forward_pallas.1} parent=1 // pred_fallthru
      _
    // Predicated region
    $region54: #{lstm_attn_forward_pallas.1} parent=1 // pred_check
      _
    $region55: #{lstm_attn_forward_pallas.1} parent=1 // pred_check_branch
      %2734 = sbr.rel (0) target = $region57
    $region56: #{lstm_attn_forward_pallas.1} parent=1 // pred_region
      %2735 = dma.done [#allocation4], 32
    $region57: #{lstm_attn_forward_pallas.1} parent=1 // pred_fallthru
      _
    %2736 = vsyncpa [#allocation3], 1
    %2737 = vsyncpa [#allocation6], 1
    %2738 = vsyncpa [#allocation4], 1

</llo_original>
